<compile_context>
chip_gen: v7x
topology: tpu7x:2x2x1
jax: 0.10.0
libtpu: 0.0.40
codegen_flags: <defaults>
</compile_context>

<pallas_src>
import math
from functools import lru_cache

import numpy as np

import jax
import jax.numpy as jnp
from jax import lax
from jax.experimental import pallas as pl
from jax.experimental.pallas import tpu as pltpu


def _round_up(v, m):
    return ((v + m - 1) // m) * m


# ----------------------------------------------------------------------------
# Static bilinear taps (PyTorch align_corners=False) and separable 1-D maps
# ----------------------------------------------------------------------------
def _bilinear_taps(out_size, in_size, scale):
    """(i0, i1, w0, w1) per output index, matching F.interpolate(align_corners=False)."""
    taps = []
    for o in range(out_size):
        src = (o + 0.5) / scale - 0.5
        if src < 0.0:
            src = 0.0                      # PyTorch clamps negative source indices to 0
        i0 = int(math.floor(src))
        frac = src - i0
        i0 = min(i0, in_size - 1)
        i1 = min(i0 + 1, in_size - 1)
        taps.append((i0, i1, 1.0 - frac, frac))
    return taps


@lru_cache(maxsize=None)
def _sep_maps(H, W, scale):
    """Separable (Kronecker-factor) interpolation maps: wmat (W, Ws), hmat (Hs, H)."""
    Hs, Ws = H * scale, W * scale
    w_taps = _bilinear_taps(Ws, W, scale)
    h_taps = _bilinear_taps(Hs, H, scale)
    wmat = np.zeros((W, Ws), np.float32)
    for ow, (i0, i1, a0, a1) in enumerate(w_taps):
        wmat[i0, ow] += a0
        wmat[i1, ow] += a1
    hmat = np.zeros((Hs, H), np.float32)
    for oh, (i0, i1, a0, a1) in enumerate(h_taps):
        hmat[oh, i0] += a0
        hmat[oh, i1] += a1
    return wmat, hmat


@lru_cache(maxsize=None)
def _gap_mask(H, W):
    """(1, L) validity mask over the flattened conv window (zeros on the 2 inter-row
    gap lanes per row); those lanes become conv2's left/right zero padding."""
    Wp = W + 2
    L = H * Wp - 2
    vm = ((np.arange(L) % Wp) < W).astype(np.float32)[None, :]
    return vm


# ----------------------------------------------------------------------------
# One hook: conv3x3 -> conv3x3 -> separable bilinear upsample (single kernel)
# ----------------------------------------------------------------------------
@lru_cache(maxsize=None)
def _make_hook_pallas_fn(N, Cin, Cl, H, W, scale):
    Cl_pad = _round_up(Cl, 8)            # sublane-aligned output channels
    Wp = W + 2                           # padded width
    P = (H + 2) * Wp                     # flattened padded-image length
    L = H * Wp - 2                       # flattened conv-window length (incl. gap lanes)
    Hs, Ws = H * scale, W * scale
    off0 = Wp + 1                        # offset of interior pixel (0,0) in padded-flat layout

    def kernel(x_ref, w1_ref, b1_ref, w2_ref, b2_ref, wm_ref, hm_ref, vm_ref,
               o_ref, s1_ref, pad2_ref, s2_ref, c_ref):
        # ---- conv1: stack the 9 shifted-window taps once, then ONE big-K MXU matmul
        for k in range(9):
            kh, kw = divmod(k, 3)
            s = kh * Wp + kw
            s1_ref[k * Cin:(k + 1) * Cin, :] = x_ref[:, s:s + L]
        acc1 = jnp.dot(w1_ref[...], s1_ref[...],
                       preferred_element_type=jnp.float32) + b1_ref[...]

        # ---- re-pad conv1 output in the same padded-flat layout.
        # Borders are tiny (2 * ~Wp lanes); written every step on purpose (megacore-safe).
        pad2_ref[:, 0:off0] = jnp.zeros((Cl_pad, off0), jnp.bfloat16)
        pad2_ref[:, off0 + L:P] = jnp.zeros((Cl_pad, P - off0 - L), jnp.bfloat16)
        pad2_ref[:, off0:off0 + L] = (acc1 * vm_ref[...]).astype(jnp.bfloat16)

        # ---- conv2: same stacking, one matmul
        for k in range(9):
            kh, kw = divmod(k, 3)
            s = kh * Wp + kw
            s2_ref[k * Cl_pad:(k + 1) * Cl_pad, :] = pad2_ref[:, s:s + L]
        acc2 = jnp.dot(w2_ref[...], s2_ref[...],
                       preferred_element_type=jnp.float32) + b2_ref[...]
        acc2b = acc2.astype(jnp.bfloat16)

        # ---- separable bilinear upsample
        # width pass: one (Cl_pad, W) @ (W, Ws) matmul per image row (valid lanes only)
        wm = wm_ref[...]
        for h in range(H):
            row = acc2b[:, h * Wp:h * Wp + W]                       # (Cl_pad, W)
            cw = jnp.dot(row, wm, preferred_element_type=jnp.float32)
            c_ref[:, h:h + 1, :] = cw.astype(jnp.bfloat16)[:, None, :]
        # height pass: one (Hs, H) @ (H, Ws) matmul per (real) output channel
        hm = hm_ref[...]
        for cl in range(Cl):
            o_ref[cl] = jnp.dot(hm, c_ref[cl],
                                preferred_element_type=jnp.float32).astype(o_ref.dtype)

    # Explicit scoped-VMEM budget from the actual per-hook operand sizes.
    bytes_in = 2 * Cin * P * 2                               # x block (bf16, double-buffered)
    bytes_out = 2 * Cl * Hs * Ws * 2                         # out block (bf16, double-buffered)
    bytes_w = 2 * (Cl_pad * 9 * Cin + Cl_pad * 9 * Cl_pad) * 2
    bytes_small = 2 * (2 * Cl_pad * 128 * 4 + (W * Ws + Hs * H) * 2 + 8 * L * 4)
    bytes_scratch = (9 * Cin * L + Cl_pad * P + 9 * Cl_pad * L + Cl_pad * H * Ws) * 2
    bytes_tmp = 2 * Cl_pad * L * 4                           # acc1/acc2 live f32 values
    est = bytes_in + bytes_out + bytes_w + bytes_small + bytes_scratch + bytes_tmp
    vmem_limit = max(32 << 20, min(100 << 20, int(est * 1.5) + (4 << 20)))

    return pl.pallas_call(
        kernel,
        out_shape=jax.ShapeDtypeStruct((N, Cl, Hs, Ws), jnp.bfloat16),
        grid=(N,),
        in_specs=[
            pl.BlockSpec((None, Cin, P), lambda n: (n, 0, 0)),        # padded-flat hook (bf16)
            pl.BlockSpec((Cl_pad, 9 * Cin), lambda n: (0, 0)),        # fused conv1 weights (bf16)
            pl.BlockSpec((Cl_pad, 1), lambda n: (0, 0)),              # conv1 bias (f32)
            pl.BlockSpec((Cl_pad, 9 * Cl_pad), lambda n: (0, 0)),     # fused conv2 weights (bf16)
            pl.BlockSpec((Cl_pad, 1), lambda n: (0, 0)),              # conv2 bias (f32)
            pl.BlockSpec((W, Ws), lambda n: (0, 0)),                  # width interp map (bf16)
            pl.BlockSpec((Hs, H), lambda n: (0, 0)),                  # height interp map (bf16)
            pl.BlockSpec((1, L), lambda n: (0, 0)),                   # gap-column mask (f32)
        ],
        out_specs=pl.BlockSpec((None, Cl, Hs, Ws), lambda n: (n, 0, 0, 0)),
        scratch_shapes=[
            pltpu.VMEM((9 * Cin, L), jnp.bfloat16),                   # stacked conv1 taps
            pltpu.VMEM((Cl_pad, P), jnp.bfloat16),                    # re-padded conv1 output
            pltpu.VMEM((9 * Cl_pad, L), jnp.bfloat16),                # stacked conv2 taps
            pltpu.VMEM((Cl_pad, H, Ws), jnp.bfloat16),                # width-pass intermediate
        ],
        compiler_params=pltpu.CompilerParams(
            dimension_semantics=("parallel",),
            vmem_limit_bytes=vmem_limit),
    )


def _prep_hook_params(w1, b1, w2, b2, cl_pad):
    """torch layout (Co,Ci,3,3)/(Co,) -> fused-tap slabs (Co_pad, 9*Ci) bf16, (Co_pad,1) f32."""
    Cl, Cin = w1.shape[0], w1.shape[1]
    # W1f[co, k*Cin + ci] = w1[co, ci, kh, kw],  k = kh*3 + kw
    w1f = jnp.transpose(w1, (0, 2, 3, 1)).reshape(Cl, 9 * Cin)
    w1f = jnp.pad(w1f, ((0, cl_pad - Cl), (0, 0))).astype(jnp.bfloat16)
    # conv2 taps are stacked in blocks of cl_pad rows -> pad both Co and (per-tap) Ci
    w2t = jnp.transpose(w2, (0, 2, 3, 1))                             # (Cl, 3, 3, Cl)
    w2t = jnp.pad(w2t, ((0, cl_pad - Cl), (0, 0), (0, 0), (0, cl_pad - Cl)))
    w2f = w2t.reshape(cl_pad, 9 * cl_pad).astype(jnp.bfloat16)
    b1p = jnp.pad(b1, (0, cl_pad - Cl)).reshape(cl_pad, 1).astype(jnp.float32)
    b2p = jnp.pad(b2, (0, cl_pad - Cl)).reshape(cl_pad, 1).astype(jnp.float32)
    return w1f, b1p, w2f, b2p


def hcolumns_forward(hook_feats_nchw, x_nchw, params):
    """Hcolumns.forward.  hook_feats_nchw: list of NCHW arrays; x_nchw: NCHW."""
    n = len(hook_feats_nchw)
    outs = []
    for i, feat in enumerate(hook_feats_nchw):
        scale = 2 ** (n - i)
        N, Cin, H, W = feat.shape
        w1, b1, w2, b2 = params[i]
        Cl = w1.shape[0]
        Cl_pad = _round_up(Cl, 8)
        # Host-side layout plumbing only: spatial zero-pad + flatten to (N, Cin, P), bf16.
        xp = jnp.pad(feat, ((0, 0), (0, 0), (1, 1), (1, 1)))
        xp = xp.reshape(N, Cin, (H + 2) * (W + 2)).astype(jnp.bfloat16)
        w1f, b1p, w2f, b2p = _prep_hook_params(w1, b1, w2, b2, Cl_pad)
        wmat_np, hmat_np = _sep_maps(H, W, scale)
        wmat = jnp.asarray(wmat_np, jnp.bfloat16)
        hmat = jnp.asarray(hmat_np, jnp.bfloat16)
        vm = jnp.asarray(_gap_mask(H, W), jnp.float32)
        fn = _make_hook_pallas_fn(N, Cin, Cl, H, W, scale)
        up = fn(xp, w1f, b1p, w2f, b2p, wmat, hmat, vm)               # (N, Cl, Hs, Ws) bf16
        outs.append(up.astype(jnp.float32))
    outs.append(x_nchw)
    return jnp.concatenate(outs, axis=1)                              # torch.cat(dim=1)


# ----------------------------------------------------------------------------
# Pure-JAX reference (f32) for correctness validation
# ----------------------------------------------------------------------------
def _ref_bilinear_up(y, scale):
    N, C, H, W = y.shape
    h_taps = _bilinear_taps(H * scale, H, scale)
    w_taps = _bilinear_taps(W * scale, W, scale)
    wi0 = jnp.array([t[0] for t in w_taps])
    wi1 = jnp.array([t[1] for t in w_taps])
    wa0 = jnp.array([t[2] for t in w_taps], jnp.float32)
    wa1 = jnp.array([t[3] for t in w_taps], jnp.float32)
    hi0 = jnp.array([t[0] for t in h_taps])
    hi1 = jnp.array([t[1] for t in h_taps])
    ha0 = jnp.array([t[2] for t in h_taps], jnp.float32)
    ha1 = jnp.array([t[3] for t in h_taps], jnp.float32)
    yw = y[..., wi0] * wa0 + y[..., wi1] * wa1                        # (N,C,H,Ws)
    return yw[..., hi0, :] * ha0[:, None] + yw[..., hi1, :] * ha1[:, None]


def _ref_forward(hook_feats, x, params):
    n = len(hook_feats)
    dn = ("NCHW", "OIHW", "NCHW")
    outs = []
    for i, feat in enumerate(hook_feats):
        scale = 2 ** (n - i)
        w1, b1, w2, b2 = params[i]
        y = lax.conv_general_dilated(feat, w1, (1, 1), ((1, 1), (1, 1)),
                                     dimension_numbers=dn,
                                     precision=lax.Precision.HIGHEST)
        y = y + b1[None, :, None, None]
        y = lax.conv_general_dilated(y, w2, (1, 1), ((1, 1), (1, 1)),
                                     dimension_numbers=dn,
                                     precision=lax.Precision.HIGHEST)
        y = y + b2[None, :, None, None]
        outs.append(_ref_bilinear_up(y, scale))
    outs.append(x)
    return jnp.concatenate(outs, axis=1)


def _init_params(key, nc, n_hooks):
    """Deterministic synthetic weights in torch conv layout (Co, Ci, 3, 3)."""
    params = []
    for i in range(n_hooks):
        key, k1, k2, k3, k4 = jax.random.split(key, 5)
        cin, cout = nc[i], nc[-1]
        w1 = jax.random.normal(k1, (cout, cin, 3, 3), jnp.float32) * 0.1
        b1 = jax.random.normal(k2, (cout,), jnp.float32) * 0.1
        w2 = jax.random.normal(k3, (cout, cout, 3, 3), jnp.float32) * 0.1
        b2 = jax.random.normal(k4, (cout,), jnp.float32) * 0.1
        params.append((w1, b1, w2, b2))
    return params


if __name__ == "__main__":
    key = jax.random.PRNGKey(0)

    N = 2
    n_hooks = 2
    nc = [8, 6, 4]          # hook channels ... final channels (== x channels)
    H = W = 16              # spatial size of x

    k_h0, k_h1, k_x, k_p = jax.random.split(key, 4)
    # hook i sits at resolution H / 2**(n-i) with nc[i] channels (NCHW)
    hook0 = jax.random.normal(k_h0, (N, nc[0], H // 4, W // 4), jnp.float32)  # (2,8,4,4)
    hook1 = jax.random.normal(k_h1, (N, nc[1], H // 2, W // 2), jnp.float32)  # (2,6,8,8)
    x = jax.random.normal(k_x, (N, nc[-1], H, W), jnp.float32)                # (2,4,16,16)

    params = _init_params(k_p, nc, n_hooks)

    fwd = jax.jit(hcolumns_forward)
    out = jax.block_until_ready(fwd([hook0, hook1], x, params))

    expected_channels = n_hooks * nc[-1] + nc[-1]   # 4 + 4 + 4 = 12
    assert out.shape == (N, expected_channels, H, W), out.shape
    assert bool(jnp.all(jnp.isfinite(out)))

    # Numerical check vs pure-JAX f32 reference (kernel matmul path is bf16).
    ref = jax.block_until_ready(_ref_forward([hook0, hook1], x, params))
    assert bool(jnp.allclose(out, ref, rtol=5e-2, atol=5e-2)), \
        float(jnp.max(jnp.abs(out - ref)))

    print("KERNEL_OK")
</pallas_src>

<mosaic_0001>
module attributes {stable_mosaic.version = 11 : i64} {
  func.func @kernel(%arg0: i32, %arg1: memref<1x8x36xbf16, #tpu.memory_space<vmem>>, %arg2: memref<8x72xbf16, #tpu.memory_space<vmem>>, %arg3: memref<8x1xf32, #tpu.memory_space<vmem>>, %arg4: memref<8x72xbf16, #tpu.memory_space<vmem>>, %arg5: memref<8x1xf32, #tpu.memory_space<vmem>>, %arg6: memref<4x16xbf16, #tpu.memory_space<vmem>>, %arg7: memref<16x4xbf16, #tpu.memory_space<vmem>>, %arg8: memref<1x22xf32, #tpu.memory_space<vmem>>, %arg9: memref<1x4x16x16xbf16, #tpu.memory_space<vmem>>, %arg10: memref<72x22xbf16, #tpu.memory_space<vmem>>, %arg11: memref<8x36xbf16, #tpu.memory_space<vmem>>, %arg12: memref<72x22xbf16, #tpu.memory_space<vmem>>, %arg13: memref<8x4x16xbf16, #tpu.memory_space<vmem>>) attributes {dimension_semantics = [#tpu.dimension_semantics<parallel>], iteration_bounds = array<i64: 2>, scalar_prefetch = 0 : i64, scratch_operands = 4 : i64, tpu.core_type = #tpu.core_type<tc>, window_params = [{transform_indices = @transform_0, window_bounds = array<i64: 1, 8, 36>}, {pipeline_mode = #tpu.pipeline_mode<synchronous>, transform_indices = @transform_1, window_bounds = array<i64: 8, 72>}, {pipeline_mode = #tpu.pipeline_mode<synchronous>, transform_indices = @transform_2, window_bounds = array<i64: 8, 1>}, {pipeline_mode = #tpu.pipeline_mode<synchronous>, transform_indices = @transform_3, window_bounds = array<i64: 8, 72>}, {pipeline_mode = #tpu.pipeline_mode<synchronous>, transform_indices = @transform_4, window_bounds = array<i64: 8, 1>}, {pipeline_mode = #tpu.pipeline_mode<synchronous>, transform_indices = @transform_5, window_bounds = array<i64: 4, 16>}, {pipeline_mode = #tpu.pipeline_mode<synchronous>, transform_indices = @transform_6, window_bounds = array<i64: 16, 4>}, {pipeline_mode = #tpu.pipeline_mode<synchronous>, transform_indices = @transform_7, window_bounds = array<i64: 1, 22>}, {transform_indices = @transform_8, window_bounds = array<i64: 1, 4, 16, 16>}]} {
    %c0 = arith.constant 0 : index
    %c0_0 = arith.constant 0 : index
    %c0_1 = arith.constant 0 : index
    %0 = vector.load %arg1[%c0, %c0_0, %c0_1] : memref<1x8x36xbf16, #tpu.memory_space<vmem>>, vector<1x8x22xbf16>
    %1 = vector.shape_cast %0 : vector<1x8x22xbf16> to vector<8x22xbf16>
    %c0_2 = arith.constant 0 : index
    %c0_3 = arith.constant 0 : index
    %2 = vector.load %arg10[%c0_2, %c0_3] : memref<72x22xbf16, #tpu.memory_space<vmem>>, vector<8x22xbf16>
    tpu.vector_store %arg10[%c0_2, %c0_3], %1 {strides = array<i32>} : memref<72x22xbf16, #tpu.memory_space<vmem>>, vector<8x22xbf16>,
    %c0_4 = arith.constant 0 : index
    %c0_5 = arith.constant 0 : index
    %c1 = arith.constant 1 : index
    %3 = vector.load %arg1[%c0_4, %c0_5, %c1] : memref<1x8x36xbf16, #tpu.memory_space<vmem>>, vector<1x8x22xbf16>
    %4 = vector.shape_cast %3 : vector<1x8x22xbf16> to vector<8x22xbf16>
    %c8 = arith.constant 8 : index
    %c0_6 = arith.constant 0 : index
    %5 = vector.load %arg10[%c8, %c0_6] : memref<72x22xbf16, #tpu.memory_space<vmem>>, vector<8x22xbf16>
    tpu.vector_store %arg10[%c8, %c0_6], %4 {strides = array<i32>} : memref<72x22xbf16, #tpu.memory_space<vmem>>, vector<8x22xbf16>,
    %c0_7 = arith.constant 0 : index
    %c0_8 = arith.constant 0 : index
    %c2 = arith.constant 2 : index
    %6 = vector.load %arg1[%c0_7, %c0_8, %c2] : memref<1x8x36xbf16, #tpu.memory_space<vmem>>, vector<1x8x22xbf16>
    %7 = vector.shape_cast %6 : vector<1x8x22xbf16> to vector<8x22xbf16>
    %c16 = arith.constant 16 : index
    %c0_9 = arith.constant 0 : index
    %8 = vector.load %arg10[%c16, %c0_9] : memref<72x22xbf16, #tpu.memory_space<vmem>>, vector<8x22xbf16>
    tpu.vector_store %arg10[%c16, %c0_9], %7 {strides = array<i32>} : memref<72x22xbf16, #tpu.memory_space<vmem>>, vector<8x22xbf16>,
    %c0_10 = arith.constant 0 : index
    %c0_11 = arith.constant 0 : index
    %c6 = arith.constant 6 : index
    %9 = vector.load %arg1[%c0_10, %c0_11, %c6] : memref<1x8x36xbf16, #tpu.memory_space<vmem>>, vector<1x8x22xbf16>
    %10 = vector.shape_cast %9 : vector<1x8x22xbf16> to vector<8x22xbf16>
    %c24 = arith.constant 24 : index
    %c0_12 = arith.constant 0 : index
    %11 = vector.load %arg10[%c24, %c0_12] : memref<72x22xbf16, #tpu.memory_space<vmem>>, vector<8x22xbf16>
    tpu.vector_store %arg10[%c24, %c0_12], %10 {strides = array<i32>} : memref<72x22xbf16, #tpu.memory_space<vmem>>, vector<8x22xbf16>,
    %c0_13 = arith.constant 0 : index
    %c0_14 = arith.constant 0 : index
    %c7 = arith.constant 7 : index
    %12 = vector.load %arg1[%c0_13, %c0_14, %c7] : memref<1x8x36xbf16, #tpu.memory_space<vmem>>, vector<1x8x22xbf16>
    %13 = vector.shape_cast %12 : vector<1x8x22xbf16> to vector<8x22xbf16>
    %c32 = arith.constant 32 : index
    %c0_15 = arith.constant 0 : index
    %14 = vector.load %arg10[%c32, %c0_15] : memref<72x22xbf16, #tpu.memory_space<vmem>>, vector<8x22xbf16>
    tpu.vector_store %arg10[%c32, %c0_15], %13 {strides = array<i32>} : memref<72x22xbf16, #tpu.memory_space<vmem>>, vector<8x22xbf16>,
    %c0_16 = arith.constant 0 : index
    %c0_17 = arith.constant 0 : index
    %c8_18 = arith.constant 8 : index
    %15 = vector.load %arg1[%c0_16, %c0_17, %c8_18] : memref<1x8x36xbf16, #tpu.memory_space<vmem>>, vector<1x8x22xbf16>
    %16 = vector.shape_cast %15 : vector<1x8x22xbf16> to vector<8x22xbf16>
    %c40 = arith.constant 40 : index
    %c0_19 = arith.constant 0 : index
    %17 = vector.load %arg10[%c40, %c0_19] : memref<72x22xbf16, #tpu.memory_space<vmem>>, vector<8x22xbf16>
    tpu.vector_store %arg10[%c40, %c0_19], %16 {strides = array<i32>} : memref<72x22xbf16, #tpu.memory_space<vmem>>, vector<8x22xbf16>,
    %c0_20 = arith.constant 0 : index
    %c0_21 = arith.constant 0 : index
    %c12 = arith.constant 12 : index
    %18 = vector.load %arg1[%c0_20, %c0_21, %c12] : memref<1x8x36xbf16, #tpu.memory_space<vmem>>, vector<1x8x22xbf16>
    %19 = vector.shape_cast %18 : vector<1x8x22xbf16> to vector<8x22xbf16>
    %c48 = arith.constant 48 : index
    %c0_22 = arith.constant 0 : index
    %20 = vector.load %arg10[%c48, %c0_22] : memref<72x22xbf16, #tpu.memory_space<vmem>>, vector<8x22xbf16>
    tpu.vector_store %arg10[%c48, %c0_22], %19 {strides = array<i32>} : memref<72x22xbf16, #tpu.memory_space<vmem>>, vector<8x22xbf16>,
    %c0_23 = arith.constant 0 : index
    %c0_24 = arith.constant 0 : index
    %c13 = arith.constant 13 : index
    %21 = vector.load %arg1[%c0_23, %c0_24, %c13] : memref<1x8x36xbf16, #tpu.memory_space<vmem>>, vector<1x8x22xbf16>
    %22 = vector.shape_cast %21 : vector<1x8x22xbf16> to vector<8x22xbf16>
    %c56 = arith.constant 56 : index
    %c0_25 = arith.constant 0 : index
    %23 = vector.load %arg10[%c56, %c0_25] : memref<72x22xbf16, #tpu.memory_space<vmem>>, vector<8x22xbf16>
    tpu.vector_store %arg10[%c56, %c0_25], %22 {strides = array<i32>} : memref<72x22xbf16, #tpu.memory_space<vmem>>, vector<8x22xbf16>,
    %c0_26 = arith.constant 0 : index
    %c0_27 = arith.constant 0 : index
    %c14 = arith.constant 14 : index
    %24 = vector.load %arg1[%c0_26, %c0_27, %c14] : memref<1x8x36xbf16, #tpu.memory_space<vmem>>, vector<1x8x22xbf16>
    %25 = vector.shape_cast %24 : vector<1x8x22xbf16> to vector<8x22xbf16>
    %c64 = arith.constant 64 : index
    %c0_28 = arith.constant 0 : index
    %26 = vector.load %arg10[%c64, %c0_28] : memref<72x22xbf16, #tpu.memory_space<vmem>>, vector<8x22xbf16>
    tpu.vector_store %arg10[%c64, %c0_28], %25 {strides = array<i32>} : memref<72x22xbf16, #tpu.memory_space<vmem>>, vector<8x22xbf16>,
    %c0_29 = arith.constant 0 : index
    %c0_30 = arith.constant 0 : index
    %27 = vector.load %arg2[%c0_29, %c0_30] : memref<8x72xbf16, #tpu.memory_space<vmem>>, vector<8x72xbf16>
    %c0_31 = arith.constant 0 : index
    %c0_32 = arith.constant 0 : index
    %28 = vector.load %arg10[%c0_31, %c0_32] : memref<72x22xbf16, #tpu.memory_space<vmem>>, vector<72x22xbf16>
    %cst = arith.constant dense<0.000000e+00> : vector<8x22xf32>
    %29 = tpu.matmul %27, %28, %cst {dimension_numbers = #tpu.dot_dimension_numbers<[1], [0], [0], [1], [0, 0, 1, 1], [], []>} : vector<8x72xbf16>, vector<72x22xbf16>, vector<8x22xf32> -> vector<8x22xf32>
    %c0_33 = arith.constant 0 : index
    %c0_34 = arith.constant 0 : index
    %30 = vector.load %arg3[%c0_33, %c0_34] : memref<8x1xf32, #tpu.memory_space<vmem>>, vector<8x1xf32>
    %31 = vector.broadcast %30 : vector<8x1xf32> to vector<8x22xf32>
    %32 = arith.addf %29, %31 : vector<8x22xf32>
    %cst_35 = arith.constant 0.000000e+00 : bf16
    %33 = vector.broadcast %cst_35 : bf16 to vector<8x7xbf16>
    %c0_36 = arith.constant 0 : index
    %c0_37 = arith.constant 0 : index
    %34 = vector.load %arg11[%c0_36, %c0_37] : memref<8x36xbf16, #tpu.memory_space<vmem>>, vector<8x7xbf16>
    tpu.vector_store %arg11[%c0_36, %c0_37], %33 {strides = array<i32>} : memref<8x36xbf16, #tpu.memory_space<vmem>>, vector<8x7xbf16>,
    %cst_38 = arith.constant 0.000000e+00 : bf16
    %35 = vector.broadcast %cst_38 : bf16 to vector<8x7xbf16>
    %c0_39 = arith.constant 0 : index
    %c29 = arith.constant 29 : index
    %36 = vector.load %arg11[%c0_39, %c29] : memref<8x36xbf16, #tpu.memory_space<vmem>>, vector<8x7xbf16>
    tpu.vector_store %arg11[%c0_39, %c29], %35 {strides = array<i32>} : memref<8x36xbf16, #tpu.memory_space<vmem>>, vector<8x7xbf16>,
    %c0_40 = arith.constant 0 : index
    %c0_41 = arith.constant 0 : index
    %37 = vector.load %arg8[%c0_40, %c0_41] : memref<1x22xf32, #tpu.memory_space<vmem>>, vector<1x22xf32>
    %38 = vector.broadcast %37 : vector<1x22xf32> to vector<8x22xf32>
    %39 = arith.mulf %32, %38 : vector<8x22xf32>
    %40 = arith.truncf %39 : vector<8x22xf32> to vector<8x22xbf16>
    %c0_42 = arith.constant 0 : index
    %c7_43 = arith.constant 7 : index
    %41 = vector.load %arg11[%c0_42, %c7_43] : memref<8x36xbf16, #tpu.memory_space<vmem>>, vector<8x22xbf16>
    tpu.vector_store %arg11[%c0_42, %c7_43], %40 {strides = array<i32>} : memref<8x36xbf16, #tpu.memory_space<vmem>>, vector<8x22xbf16>,
    %c0_44 = arith.constant 0 : index
    %c0_45 = arith.constant 0 : index
    %42 = vector.load %arg11[%c0_44, %c0_45] : memref<8x36xbf16, #tpu.memory_space<vmem>>, vector<8x22xbf16>
    %c0_46 = arith.constant 0 : index
    %c0_47 = arith.constant 0 : index
    %43 = vector.load %arg12[%c0_46, %c0_47] : memref<72x22xbf16, #tpu.memory_space<vmem>>, vector<8x22xbf16>
    tpu.vector_store %arg12[%c0_46, %c0_47], %42 {strides = array<i32>} : memref<72x22xbf16, #tpu.memory_space<vmem>>, vector<8x22xbf16>,
    %c0_48 = arith.constant 0 : index
    %c1_49 = arith.constant 1 : index
    %44 = vector.load %arg11[%c0_48, %c1_49] : memref<8x36xbf16, #tpu.memory_space<vmem>>, vector<8x22xbf16>
    %c8_50 = arith.constant 8 : index
    %c0_51 = arith.constant 0 : index
    %45 = vector.load %arg12[%c8_50, %c0_51] : memref<72x22xbf16, #tpu.memory_space<vmem>>, vector<8x22xbf16>
    tpu.vector_store %arg12[%c8_50, %c0_51], %44 {strides = array<i32>} : memref<72x22xbf16, #tpu.memory_space<vmem>>, vector<8x22xbf16>,
    %c0_52 = arith.constant 0 : index
    %c2_53 = arith.constant 2 : index
    %46 = vector.load %arg11[%c0_52, %c2_53] : memref<8x36xbf16, #tpu.memory_space<vmem>>, vector<8x22xbf16>
    %c16_54 = arith.constant 16 : index
    %c0_55 = arith.constant 0 : index
    %47 = vector.load %arg12[%c16_54, %c0_55] : memref<72x22xbf16, #tpu.memory_space<vmem>>, vector<8x22xbf16>
    tpu.vector_store %arg12[%c16_54, %c0_55], %46 {strides = array<i32>} : memref<72x22xbf16, #tpu.memory_space<vmem>>, vector<8x22xbf16>,
    %c0_56 = arith.constant 0 : index
    %c6_57 = arith.constant 6 : index
    %48 = vector.load %arg11[%c0_56, %c6_57] : memref<8x36xbf16, #tpu.memory_space<vmem>>, vector<8x22xbf16>
    %c24_58 = arith.constant 24 : index
    %c0_59 = arith.constant 0 : index
    %49 = vector.load %arg12[%c24_58, %c0_59] : memref<72x22xbf16, #tpu.memory_space<vmem>>, vector<8x22xbf16>
    tpu.vector_store %arg12[%c24_58, %c0_59], %48 {strides = array<i32>} : memref<72x22xbf16, #tpu.memory_space<vmem>>, vector<8x22xbf16>,
    %c0_60 = arith.constant 0 : index
    %c7_61 = arith.constant 7 : index
    %50 = vector.load %arg11[%c0_60, %c7_61] : memref<8x36xbf16, #tpu.memory_space<vmem>>, vector<8x22xbf16>
    %c32_62 = arith.constant 32 : index
    %c0_63 = arith.constant 0 : index
    %51 = vector.load %arg12[%c32_62, %c0_63] : memref<72x22xbf16, #tpu.memory_space<vmem>>, vector<8x22xbf16>
    tpu.vector_store %arg12[%c32_62, %c0_63], %50 {strides = array<i32>} : memref<72x22xbf16, #tpu.memory_space<vmem>>, vector<8x22xbf16>,
    %c0_64 = arith.constant 0 : index
    %c8_65 = arith.constant 8 : index
    %52 = vector.load %arg11[%c0_64, %c8_65] : memref<8x36xbf16, #tpu.memory_space<vmem>>, vector<8x22xbf16>
    %c40_66 = arith.constant 40 : index
    %c0_67 = arith.constant 0 : index
    %53 = vector.load %arg12[%c40_66, %c0_67] : memref<72x22xbf16, #tpu.memory_space<vmem>>, vector<8x22xbf16>
    tpu.vector_store %arg12[%c40_66, %c0_67], %52 {strides = array<i32>} : memref<72x22xbf16, #tpu.memory_space<vmem>>, vector<8x22xbf16>,
    %c0_68 = arith.constant 0 : index
    %c12_69 = arith.constant 12 : index
    %54 = vector.load %arg11[%c0_68, %c12_69] : memref<8x36xbf16, #tpu.memory_space<vmem>>, vector<8x22xbf16>
    %c48_70 = arith.constant 48 : index
    %c0_71 = arith.constant 0 : index
    %55 = vector.load %arg12[%c48_70, %c0_71] : memref<72x22xbf16, #tpu.memory_space<vmem>>, vector<8x22xbf16>
    tpu.vector_store %arg12[%c48_70, %c0_71], %54 {strides = array<i32>} : memref<72x22xbf16, #tpu.memory_space<vmem>>, vector<8x22xbf16>,
    %c0_72 = arith.constant 0 : index
    %c13_73 = arith.constant 13 : index
    %56 = vector.load %arg11[%c0_72, %c13_73] : memref<8x36xbf16, #tpu.memory_space<vmem>>, vector<8x22xbf16>
    %c56_74 = arith.constant 56 : index
    %c0_75 = arith.constant 0 : index
    %57 = vector.load %arg12[%c56_74, %c0_75] : memref<72x22xbf16, #tpu.memory_space<vmem>>, vector<8x22xbf16>
    tpu.vector_store %arg12[%c56_74, %c0_75], %56 {strides = array<i32>} : memref<72x22xbf16, #tpu.memory_space<vmem>>, vector<8x22xbf16>,
    %c0_76 = arith.constant 0 : index
    %c14_77 = arith.constant 14 : index
    %58 = vector.load %arg11[%c0_76, %c14_77] : memref<8x36xbf16, #tpu.memory_space<vmem>>, vector<8x22xbf16>
    %c64_78 = arith.constant 64 : index
    %c0_79 = arith.constant 0 : index
    %59 = vector.load %arg12[%c64_78, %c0_79] : memref<72x22xbf16, #tpu.memory_space<vmem>>, vector<8x22xbf16>
    tpu.vector_store %arg12[%c64_78, %c0_79], %58 {strides = array<i32>} : memref<72x22xbf16, #tpu.memory_space<vmem>>, vector<8x22xbf16>,
    %c0_80 = arith.constant 0 : index
    %c0_81 = arith.constant 0 : index
    %60 = vector.load %arg4[%c0_80, %c0_81] : memref<8x72xbf16, #tpu.memory_space<vmem>>, vector<8x72xbf16>
    %c0_82 = arith.constant 0 : index
    %c0_83 = arith.constant 0 : index
    %61 = vector.load %arg12[%c0_82, %c0_83] : memref<72x22xbf16, #tpu.memory_space<vmem>>, vector<72x22xbf16>
    %cst_84 = arith.constant dense<0.000000e+00> : vector<8x22xf32>
    %62 = tpu.matmul %60, %61, %cst_84 {dimension_numbers = #tpu.dot_dimension_numbers<[1], [0], [0], [1], [0, 0, 1, 1], [], []>} : vector<8x72xbf16>, vector<72x22xbf16>, vector<8x22xf32> -> vector<8x22xf32>
    %c0_85 = arith.constant 0 : index
    %c0_86 = arith.constant 0 : index
    %63 = vector.load %arg5[%c0_85, %c0_86] : memref<8x1xf32, #tpu.memory_space<vmem>>, vector<8x1xf32>
    %64 = vector.broadcast %63 : vector<8x1xf32> to vector<8x22xf32>
    %65 = arith.addf %62, %64 : vector<8x22xf32>
    %66 = arith.truncf %65 : vector<8x22xf32> to vector<8x22xbf16>
    %c0_87 = arith.constant 0 : index
    %c0_88 = arith.constant 0 : index
    %67 = vector.load %arg6[%c0_87, %c0_88] : memref<4x16xbf16, #tpu.memory_space<vmem>>, vector<4x16xbf16>
    %68 = vector.extract_strided_slice %66 {offsets = [0, 0], sizes = [8, 4], strides = [1, 1]} : vector<8x22xbf16> to vector<8x4xbf16>
    %cst_89 = arith.constant dense<0.000000e+00> : vector<8x16xf32>
    %69 = tpu.matmul %68, %67, %cst_89 {dimension_numbers = #tpu.dot_dimension_numbers<[1], [0], [0], [1], [0, 0, 1, 1], [], []>} : vector<8x4xbf16>, vector<4x16xbf16>, vector<8x16xf32> -> vector<8x16xf32>
    %70 = arith.truncf %69 : vector<8x16xf32> to vector<8x16xbf16>
    %71 = vector.shape_cast %70 : vector<8x16xbf16> to vector<8x1x16xbf16>
    %c0_90 = arith.constant 0 : index
    %c0_91 = arith.constant 0 : index
    %c0_92 = arith.constant 0 : index
    %72 = vector.load %arg13[%c0_90, %c0_91, %c0_92] : memref<8x4x16xbf16, #tpu.memory_space<vmem>>, vector<8x1x16xbf16>
    tpu.vector_store %arg13[%c0_90, %c0_91, %c0_92], %71 {strides = array<i32>} : memref<8x4x16xbf16, #tpu.memory_space<vmem>>, vector<8x1x16xbf16>,
    %73 = vector.extract_strided_slice %66 {offsets = [0, 6], sizes = [8, 4], strides = [1, 1]} : vector<8x22xbf16> to vector<8x4xbf16>
    %cst_93 = arith.constant dense<0.000000e+00> : vector<8x16xf32>
    %74 = tpu.matmul %73, %67, %cst_93 {dimension_numbers = #tpu.dot_dimension_numbers<[1], [0], [0], [1], [0, 0, 1, 1], [], []>} : vector<8x4xbf16>, vector<4x16xbf16>, vector<8x16xf32> -> vector<8x16xf32>
    %75 = arith.truncf %74 : vector<8x16xf32> to vector<8x16xbf16>
    %76 = vector.shape_cast %75 : vector<8x16xbf16> to vector<8x1x16xbf16>
    %c0_94 = arith.constant 0 : index
    %c1_95 = arith.constant 1 : index
    %c0_96 = arith.constant 0 : index
    %77 = vector.load %arg13[%c0_94, %c1_95, %c0_96] : memref<8x4x16xbf16, #tpu.memory_space<vmem>>, vector<8x1x16xbf16>
    tpu.vector_store %arg13[%c0_94, %c1_95, %c0_96], %76 {strides = array<i32>} : memref<8x4x16xbf16, #tpu.memory_space<vmem>>, vector<8x1x16xbf16>,
    %78 = vector.extract_strided_slice %66 {offsets = [0, 12], sizes = [8, 4], strides = [1, 1]} : vector<8x22xbf16> to vector<8x4xbf16>
    %cst_97 = arith.constant dense<0.000000e+00> : vector<8x16xf32>
    %79 = tpu.matmul %78, %67, %cst_97 {dimension_numbers = #tpu.dot_dimension_numbers<[1], [0], [0], [1], [0, 0, 1, 1], [], []>} : vector<8x4xbf16>, vector<4x16xbf16>, vector<8x16xf32> -> vector<8x16xf32>
    %80 = arith.truncf %79 : vector<8x16xf32> to vector<8x16xbf16>
    %81 = vector.shape_cast %80 : vector<8x16xbf16> to vector<8x1x16xbf16>
    %c0_98 = arith.constant 0 : index
    %c2_99 = arith.constant 2 : index
    %c0_100 = arith.constant 0 : index
    %82 = vector.load %arg13[%c0_98, %c2_99, %c0_100] : memref<8x4x16xbf16, #tpu.memory_space<vmem>>, vector<8x1x16xbf16>
    tpu.vector_store %arg13[%c0_98, %c2_99, %c0_100], %81 {strides = array<i32>} : memref<8x4x16xbf16, #tpu.memory_space<vmem>>, vector<8x1x16xbf16>,
    %83 = vector.extract_strided_slice %66 {offsets = [0, 18], sizes = [8, 4], strides = [1, 1]} : vector<8x22xbf16> to vector<8x4xbf16>
    %cst_101 = arith.constant dense<0.000000e+00> : vector<8x16xf32>
    %84 = tpu.matmul %83, %67, %cst_101 {dimension_numbers = #tpu.dot_dimension_numbers<[1], [0], [0], [1], [0, 0, 1, 1], [], []>} : vector<8x4xbf16>, vector<4x16xbf16>, vector<8x16xf32> -> vector<8x16xf32>
    %85 = arith.truncf %84 : vector<8x16xf32> to vector<8x16xbf16>
    %86 = vector.shape_cast %85 : vector<8x16xbf16> to vector<8x1x16xbf16>
    %c0_102 = arith.constant 0 : index
    %c3 = arith.constant 3 : index
    %c0_103 = arith.constant 0 : index
    %87 = vector.load %arg13[%c0_102, %c3, %c0_103] : memref<8x4x16xbf16, #tpu.memory_space<vmem>>, vector<8x1x16xbf16>
    tpu.vector_store %arg13[%c0_102, %c3, %c0_103], %86 {strides = array<i32>} : memref<8x4x16xbf16, #tpu.memory_space<vmem>>, vector<8x1x16xbf16>,
    %c0_104 = arith.constant 0 : index
    %c0_105 = arith.constant 0 : index
    %88 = vector.load %arg7[%c0_104, %c0_105] : memref<16x4xbf16, #tpu.memory_space<vmem>>, vector<16x4xbf16>
    %c0_106 = arith.constant 0 : index
    %c0_107 = arith.constant 0 : index
    %c0_108 = arith.constant 0 : index
    %89 = vector.load %arg13[%c0_106, %c0_107, %c0_108] : memref<8x4x16xbf16, #tpu.memory_space<vmem>>, vector<1x4x16xbf16>
    %90 = vector.shape_cast %89 : vector<1x4x16xbf16> to vector<4x16xbf16>
    %cst_109 = arith.constant dense<0.000000e+00> : vector<16x16xf32>
    %91 = tpu.matmul %88, %90, %cst_109 {dimension_numbers = #tpu.dot_dimension_numbers<[1], [0], [0], [1], [0, 0, 1, 1], [], []>} : vector<16x4xbf16>, vector<4x16xbf16>, vector<16x16xf32> -> vector<16x16xf32>
    %92 = arith.truncf %91 : vector<16x16xf32> to vector<16x16xbf16>
    %c0_110 = arith.constant 0 : index
    %c0_111 = arith.constant 0 : index
    %c0_112 = arith.constant 0 : index
    %c0_113 = arith.constant 0 : index
    %93 = vector.load %arg9[%c0_110, %c0_111, %c0_112, %c0_113] : memref<1x4x16x16xbf16, #tpu.memory_space<vmem>>, vector<1x1x16x16xbf16>
    %94 = vector.shape_cast %93 : vector<1x1x16x16xbf16> to vector<16x16xbf16>
    %95 = vector.shape_cast %92 : vector<16x16xbf16> to vector<1x1x16x16xbf16>
    tpu.vector_store %arg9[%c0_110, %c0_111, %c0_112, %c0_113], %95 {strides = array<i32>} : memref<1x4x16x16xbf16, #tpu.memory_space<vmem>>, vector<1x1x16x16xbf16>,
    %c1_114 = arith.constant 1 : index
    %c0_115 = arith.constant 0 : index
    %c0_116 = arith.constant 0 : index
    %96 = vector.load %arg13[%c1_114, %c0_115, %c0_116] : memref<8x4x16xbf16, #tpu.memory_space<vmem>>, vector<1x4x16xbf16>
    %97 = vector.shape_cast %96 : vector<1x4x16xbf16> to vector<4x16xbf16>
    %cst_117 = arith.constant dense<0.000000e+00> : vector<16x16xf32>
    %98 = tpu.matmul %88, %97, %cst_117 {dimension_numbers = #tpu.dot_dimension_numbers<[1], [0], [0], [1], [0, 0, 1, 1], [], []>} : vector<16x4xbf16>, vector<4x16xbf16>, vector<16x16xf32> -> vector<16x16xf32>
    %99 = arith.truncf %98 : vector<16x16xf32> to vector<16x16xbf16>
    %c0_118 = arith.constant 0 : index
    %c1_119 = arith.constant 1 : index
    %c0_120 = arith.constant 0 : index
    %c0_121 = arith.constant 0 : index
    %100 = vector.load %arg9[%c0_118, %c1_119, %c0_120, %c0_121] : memref<1x4x16x16xbf16, #tpu.memory_space<vmem>>, vector<1x1x16x16xbf16>
    %101 = vector.shape_cast %100 : vector<1x1x16x16xbf16> to vector<16x16xbf16>
    %102 = vector.shape_cast %99 : vector<16x16xbf16> to vector<1x1x16x16xbf16>
    tpu.vector_store %arg9[%c0_118, %c1_119, %c0_120, %c0_121], %102 {strides = array<i32>} : memref<1x4x16x16xbf16, #tpu.memory_space<vmem>>, vector<1x1x16x16xbf16>,
    %c2_122 = arith.constant 2 : index
    %c0_123 = arith.constant 0 : index
    %c0_124 = arith.constant 0 : index
    %103 = vector.load %arg13[%c2_122, %c0_123, %c0_124] : memref<8x4x16xbf16, #tpu.memory_space<vmem>>, vector<1x4x16xbf16>
    %104 = vector.shape_cast %103 : vector<1x4x16xbf16> to vector<4x16xbf16>
    %cst_125 = arith.constant dense<0.000000e+00> : vector<16x16xf32>
    %105 = tpu.matmul %88, %104, %cst_125 {dimension_numbers = #tpu.dot_dimension_numbers<[1], [0], [0], [1], [0, 0, 1, 1], [], []>} : vector<16x4xbf16>, vector<4x16xbf16>, vector<16x16xf32> -> vector<16x16xf32>
    %106 = arith.truncf %105 : vector<16x16xf32> to vector<16x16xbf16>
    %c0_126 = arith.constant 0 : index
    %c2_127 = arith.constant 2 : index
    %c0_128 = arith.constant 0 : index
    %c0_129 = arith.constant 0 : index
    %107 = vector.load %arg9[%c0_126, %c2_127, %c0_128, %c0_129] : memref<1x4x16x16xbf16, #tpu.memory_space<vmem>>, vector<1x1x16x16xbf16>
    %108 = vector.shape_cast %107 : vector<1x1x16x16xbf16> to vector<16x16xbf16>
    %109 = vector.shape_cast %106 : vector<16x16xbf16> to vector<1x1x16x16xbf16>
    tpu.vector_store %arg9[%c0_126, %c2_127, %c0_128, %c0_129], %109 {strides = array<i32>} : memref<1x4x16x16xbf16, #tpu.memory_space<vmem>>, vector<1x1x16x16xbf16>,
    %c3_130 = arith.constant 3 : index
    %c0_131 = arith.constant 0 : index
    %c0_132 = arith.constant 0 : index
    %110 = vector.load %arg13[%c3_130, %c0_131, %c0_132] : memref<8x4x16xbf16, #tpu.memory_space<vmem>>, vector<1x4x16xbf16>
    %111 = vector.shape_cast %110 : vector<1x4x16xbf16> to vector<4x16xbf16>
    %cst_133 = arith.constant dense<0.000000e+00> : vector<16x16xf32>
    %112 = tpu.matmul %88, %111, %cst_133 {dimension_numbers = #tpu.dot_dimension_numbers<[1], [0], [0], [1], [0, 0, 1, 1], [], []>} : vector<16x4xbf16>, vector<4x16xbf16>, vector<16x16xf32> -> vector<16x16xf32>
    %113 = arith.truncf %112 : vector<16x16xf32> to vector<16x16xbf16>
    %c0_134 = arith.constant 0 : index
    %c3_135 = arith.constant 3 : index
    %c0_136 = arith.constant 0 : index
    %c0_137 = arith.constant 0 : index
    %114 = vector.load %arg9[%c0_134, %c3_135, %c0_136, %c0_137] : memref<1x4x16x16xbf16, #tpu.memory_space<vmem>>, vector<1x1x16x16xbf16>
    %115 = vector.shape_cast %114 : vector<1x1x16x16xbf16> to vector<16x16xbf16>
    %116 = vector.shape_cast %113 : vector<16x16xbf16> to vector<1x1x16x16xbf16>
    tpu.vector_store %arg9[%c0_134, %c3_135, %c0_136, %c0_137], %116 {strides = array<i32>} : memref<1x4x16x16xbf16, #tpu.memory_space<vmem>>, vector<1x1x16x16xbf16>,
    return
  }
  func.func @transform_0(%arg0: i32) -> (i32, i32, i32) {
    %c0_i32 = arith.constant 0 : i32
    %c0_i32_0 = arith.constant 0 : i32
    %c0_i32_1 = arith.constant 0 : i32
    return %arg0, %c0_i32, %c0_i32_0 : i32, i32, i32
  }
  func.func @transform_1(%arg0: i32) -> (i32, i32) {
    %c0_i32 = arith.constant 0 : i32
    %c0_i32_0 = arith.constant 0 : i32
    %c0_i32_1 = arith.constant 0 : i32
    return %c0_i32, %c0_i32_0 : i32, i32
  }
  func.func @transform_2(%arg0: i32) -> (i32, i32) {
    %c0_i32 = arith.constant 0 : i32
    %c0_i32_0 = arith.constant 0 : i32
    %c0_i32_1 = arith.constant 0 : i32
    return %c0_i32, %c0_i32_0 : i32, i32
  }
  func.func @transform_3(%arg0: i32) -> (i32, i32) {
    %c0_i32 = arith.constant 0 : i32
    %c0_i32_0 = arith.constant 0 : i32
    %c0_i32_1 = arith.constant 0 : i32
    return %c0_i32, %c0_i32_0 : i32, i32
  }
  func.func @transform_4(%arg0: i32) -> (i32, i32) {
    %c0_i32 = arith.constant 0 : i32
    %c0_i32_0 = arith.constant 0 : i32
    %c0_i32_1 = arith.constant 0 : i32
    return %c0_i32, %c0_i32_0 : i32, i32
  }
  func.func @transform_5(%arg0: i32) -> (i32, i32) {
    %c0_i32 = arith.constant 0 : i32
    %c0_i32_0 = arith.constant 0 : i32
    %c0_i32_1 = arith.constant 0 : i32
    return %c0_i32, %c0_i32_0 : i32, i32
  }
  func.func @transform_6(%arg0: i32) -> (i32, i32) {
    %c0_i32 = arith.constant 0 : i32
    %c0_i32_0 = arith.constant 0 : i32
    %c0_i32_1 = arith.constant 0 : i32
    return %c0_i32, %c0_i32_0 : i32, i32
  }
  func.func @transform_7(%arg0: i32) -> (i32, i32) {
    %c0_i32 = arith.constant 0 : i32
    %c0_i32_0 = arith.constant 0 : i32
    %c0_i32_1 = arith.constant 0 : i32
    return %c0_i32, %c0_i32_0 : i32, i32
  }
  func.func @transform_8(%arg0: i32) -> (i32, i32, i32, i32) {
    %c0_i32 = arith.constant 0 : i32
    %c0_i32_0 = arith.constant 0 : i32
    %c0_i32_1 = arith.constant 0 : i32
    %c0_i32_2 = arith.constant 0 : i32
    return %arg0, %c0_i32, %c0_i32_0, %c0_i32_1 : i32, i32, i32, i32
  }
}

module attributes {stable_mosaic.version = 11 : i64} {
  func.func @kernel(%arg0: i32, %arg1: memref<1x6x100xbf16, #tpu.memory_space<vmem>>, %arg2: memref<8x54xbf16, #tpu.memory_space<vmem>>, %arg3: memref<8x1xf32, #tpu.memory_space<vmem>>, %arg4: memref<8x72xbf16, #tpu.memory_space<vmem>>, %arg5: memref<8x1xf32, #tpu.memory_space<vmem>>, %arg6: memref<8x16xbf16, #tpu.memory_space<vmem>>, %arg7: memref<16x8xbf16, #tpu.memory_space<vmem>>, %arg8: memref<1x78xf32, #tpu.memory_space<vmem>>, %arg9: memref<1x4x16x16xbf16, #tpu.memory_space<vmem>>, %arg10: memref<54x78xbf16, #tpu.memory_space<vmem>>, %arg11: memref<8x100xbf16, #tpu.memory_space<vmem>>, %arg12: memref<72x78xbf16, #tpu.memory_space<vmem>>, %arg13: memref<8x8x16xbf16, #tpu.memory_space<vmem>>) attributes {dimension_semantics = [#tpu.dimension_semantics<parallel>], iteration_bounds = array<i64: 2>, scalar_prefetch = 0 : i64, scratch_operands = 4 : i64, tpu.core_type = #tpu.core_type<tc>, window_params = [{transform_indices = @transform_0, window_bounds = array<i64: 1, 6, 100>}, {pipeline_mode = #tpu.pipeline_mode<synchronous>, transform_indices = @transform_1, window_bounds = array<i64: 8, 54>}, {pipeline_mode = #tpu.pipeline_mode<synchronous>, transform_indices = @transform_2, window_bounds = array<i64: 8, 1>}, {pipeline_mode = #tpu.pipeline_mode<synchronous>, transform_indices = @transform_3, window_bounds = array<i64: 8, 72>}, {pipeline_mode = #tpu.pipeline_mode<synchronous>, transform_indices = @transform_4, window_bounds = array<i64: 8, 1>}, {pipeline_mode = #tpu.pipeline_mode<synchronous>, transform_indices = @transform_5, window_bounds = array<i64: 8, 16>}, {pipeline_mode = #tpu.pipeline_mode<synchronous>, transform_indices = @transform_6, window_bounds = array<i64: 16, 8>}, {pipeline_mode = #tpu.pipeline_mode<synchronous>, transform_indices = @transform_7, window_bounds = array<i64: 1, 78>}, {transform_indices = @transform_8, window_bounds = array<i64: 1, 4, 16, 16>}]} {
    %c0 = arith.constant 0 : index
    %c0_0 = arith.constant 0 : index
    %c0_1 = arith.constant 0 : index
    %0 = vector.load %arg1[%c0, %c0_0, %c0_1] : memref<1x6x100xbf16, #tpu.memory_space<vmem>>, vector<1x6x78xbf16>
    %1 = vector.shape_cast %0 : vector<1x6x78xbf16> to vector<6x78xbf16>
    %c0_2 = arith.constant 0 : index
    %c0_3 = arith.constant 0 : index
    %2 = vector.load %arg10[%c0_2, %c0_3] : memref<54x78xbf16, #tpu.memory_space<vmem>>, vector<6x78xbf16>
    tpu.vector_store %arg10[%c0_2, %c0_3], %1 {strides = array<i32>} : memref<54x78xbf16, #tpu.memory_space<vmem>>, vector<6x78xbf16>,
    %c0_4 = arith.constant 0 : index
    %c0_5 = arith.constant 0 : index
    %c1 = arith.constant 1 : index
    %3 = vector.load %arg1[%c0_4, %c0_5, %c1] : memref<1x6x100xbf16, #tpu.memory_space<vmem>>, vector<1x6x78xbf16>
    %4 = vector.shape_cast %3 : vector<1x6x78xbf16> to vector<6x78xbf16>
    %c6 = arith.constant 6 : index
    %c0_6 = arith.constant 0 : index
    %5 = vector.load %arg10[%c6, %c0_6] : memref<54x78xbf16, #tpu.memory_space<vmem>>, vector<6x78xbf16>
    tpu.vector_store %arg10[%c6, %c0_6], %4 {strides = array<i32>} : memref<54x78xbf16, #tpu.memory_space<vmem>>, vector<6x78xbf16>,
    %c0_7 = arith.constant 0 : index
    %c0_8 = arith.constant 0 : index
    %c2 = arith.constant 2 : index
    %6 = vector.load %arg1[%c0_7, %c0_8, %c2] : memref<1x6x100xbf16, #tpu.memory_space<vmem>>, vector<1x6x78xbf16>
    %7 = vector.shape_cast %6 : vector<1x6x78xbf16> to vector<6x78xbf16>
    %c12 = arith.constant 12 : index
    %c0_9 = arith.constant 0 : index
    %8 = vector.load %arg10[%c12, %c0_9] : memref<54x78xbf16, #tpu.memory_space<vmem>>, vector<6x78xbf16>
    tpu.vector_store %arg10[%c12, %c0_9], %7 {strides = array<i32>} : memref<54x78xbf16, #tpu.memory_space<vmem>>, vector<6x78xbf16>,
    %c0_10 = arith.constant 0 : index
    %c0_11 = arith.constant 0 : index
    %c10 = arith.constant 10 : index
    %9 = vector.load %arg1[%c0_10, %c0_11, %c10] : memref<1x6x100xbf16, #tpu.memory_space<vmem>>, vector<1x6x78xbf16>
    %10 = vector.shape_cast %9 : vector<1x6x78xbf16> to vector<6x78xbf16>
    %c18 = arith.constant 18 : index
    %c0_12 = arith.constant 0 : index
    %11 = vector.load %arg10[%c18, %c0_12] : memref<54x78xbf16, #tpu.memory_space<vmem>>, vector<6x78xbf16>
    tpu.vector_store %arg10[%c18, %c0_12], %10 {strides = array<i32>} : memref<54x78xbf16, #tpu.memory_space<vmem>>, vector<6x78xbf16>,
    %c0_13 = arith.constant 0 : index
    %c0_14 = arith.constant 0 : index
    %c11 = arith.constant 11 : index
    %12 = vector.load %arg1[%c0_13, %c0_14, %c11] : memref<1x6x100xbf16, #tpu.memory_space<vmem>>, vector<1x6x78xbf16>
    %13 = vector.shape_cast %12 : vector<1x6x78xbf16> to vector<6x78xbf16>
    %c24 = arith.constant 24 : index
    %c0_15 = arith.constant 0 : index
    %14 = vector.load %arg10[%c24, %c0_15] : memref<54x78xbf16, #tpu.memory_space<vmem>>, vector<6x78xbf16>
    tpu.vector_store %arg10[%c24, %c0_15], %13 {strides = array<i32>} : memref<54x78xbf16, #tpu.memory_space<vmem>>, vector<6x78xbf16>,
    %c0_16 = arith.constant 0 : index
    %c0_17 = arith.constant 0 : index
    %c12_18 = arith.constant 12 : index
    %15 = vector.load %arg1[%c0_16, %c0_17, %c12_18] : memref<1x6x100xbf16, #tpu.memory_space<vmem>>, vector<1x6x78xbf16>
    %16 = vector.shape_cast %15 : vector<1x6x78xbf16> to vector<6x78xbf16>
    %c30 = arith.constant 30 : index
    %c0_19 = arith.constant 0 : index
    %17 = vector.load %arg10[%c30, %c0_19] : memref<54x78xbf16, #tpu.memory_space<vmem>>, vector<6x78xbf16>
    tpu.vector_store %arg10[%c30, %c0_19], %16 {strides = array<i32>} : memref<54x78xbf16, #tpu.memory_space<vmem>>, vector<6x78xbf16>,
    %c0_20 = arith.constant 0 : index
    %c0_21 = arith.constant 0 : index
    %c20 = arith.constant 20 : index
    %18 = vector.load %arg1[%c0_20, %c0_21, %c20] : memref<1x6x100xbf16, #tpu.memory_space<vmem>>, vector<1x6x78xbf16>
    %19 = vector.shape_cast %18 : vector<1x6x78xbf16> to vector<6x78xbf16>
    %c36 = arith.constant 36 : index
    %c0_22 = arith.constant 0 : index
    %20 = vector.load %arg10[%c36, %c0_22] : memref<54x78xbf16, #tpu.memory_space<vmem>>, vector<6x78xbf16>
    tpu.vector_store %arg10[%c36, %c0_22], %19 {strides = array<i32>} : memref<54x78xbf16, #tpu.memory_space<vmem>>, vector<6x78xbf16>,
    %c0_23 = arith.constant 0 : index
    %c0_24 = arith.constant 0 : index
    %c21 = arith.constant 21 : index
    %21 = vector.load %arg1[%c0_23, %c0_24, %c21] : memref<1x6x100xbf16, #tpu.memory_space<vmem>>, vector<1x6x78xbf16>
    %22 = vector.shape_cast %21 : vector<1x6x78xbf16> to vector<6x78xbf16>
    %c42 = arith.constant 42 : index
    %c0_25 = arith.constant 0 : index
    %23 = vector.load %arg10[%c42, %c0_25] : memref<54x78xbf16, #tpu.memory_space<vmem>>, vector<6x78xbf16>
    tpu.vector_store %arg10[%c42, %c0_25], %22 {strides = array<i32>} : memref<54x78xbf16, #tpu.memory_space<vmem>>, vector<6x78xbf16>,
    %c0_26 = arith.constant 0 : index
    %c0_27 = arith.constant 0 : index
    %c22 = arith.constant 22 : index
    %24 = vector.load %arg1[%c0_26, %c0_27, %c22] : memref<1x6x100xbf16, #tpu.memory_space<vmem>>, vector<1x6x78xbf16>
    %25 = vector.shape_cast %24 : vector<1x6x78xbf16> to vector<6x78xbf16>
    %c48 = arith.constant 48 : index
    %c0_28 = arith.constant 0 : index
    %26 = vector.load %arg10[%c48, %c0_28] : memref<54x78xbf16, #tpu.memory_space<vmem>>, vector<6x78xbf16>
    tpu.vector_store %arg10[%c48, %c0_28], %25 {strides = array<i32>} : memref<54x78xbf16, #tpu.memory_space<vmem>>, vector<6x78xbf16>,
    %c0_29 = arith.constant 0 : index
    %c0_30 = arith.constant 0 : index
    %27 = vector.load %arg2[%c0_29, %c0_30] : memref<8x54xbf16, #tpu.memory_space<vmem>>, vector<8x54xbf16>
    %c0_31 = arith.constant 0 : index
    %c0_32 = arith.constant 0 : index
    %28 = vector.load %arg10[%c0_31, %c0_32] : memref<54x78xbf16, #tpu.memory_space<vmem>>, vector<54x78xbf16>
    %cst = arith.constant dense<0.000000e+00> : vector<8x78xf32>
    %29 = tpu.matmul %27, %28, %cst {dimension_numbers = #tpu.dot_dimension_numbers<[1], [0], [0], [1], [0, 0, 1, 1], [], []>} : vector<8x54xbf16>, vector<54x78xbf16>, vector<8x78xf32> -> vector<8x78xf32>
    %c0_33 = arith.constant 0 : index
    %c0_34 = arith.constant 0 : index
    %30 = vector.load %arg3[%c0_33, %c0_34] : memref<8x1xf32, #tpu.memory_space<vmem>>, vector<8x1xf32>
    %31 = vector.broadcast %30 : vector<8x1xf32> to vector<8x78xf32>
    %32 = arith.addf %29, %31 : vector<8x78xf32>
    %cst_35 = arith.constant 0.000000e+00 : bf16
    %33 = vector.broadcast %cst_35 : bf16 to vector<8x11xbf16>
    %c0_36 = arith.constant 0 : index
    %c0_37 = arith.constant 0 : index
    %34 = vector.load %arg11[%c0_36, %c0_37] : memref<8x100xbf16, #tpu.memory_space<vmem>>, vector<8x11xbf16>
    tpu.vector_store %arg11[%c0_36, %c0_37], %33 {strides = array<i32>} : memref<8x100xbf16, #tpu.memory_space<vmem>>, vector<8x11xbf16>,
    %cst_38 = arith.constant 0.000000e+00 : bf16
    %35 = vector.broadcast %cst_38 : bf16 to vector<8x11xbf16>
    %c0_39 = arith.constant 0 : index
    %c89 = arith.constant 89 : index
    %36 = vector.load %arg11[%c0_39, %c89] : memref<8x100xbf16, #tpu.memory_space<vmem>>, vector<8x11xbf16>
    tpu.vector_store %arg11[%c0_39, %c89], %35 {strides = array<i32>} : memref<8x100xbf16, #tpu.memory_space<vmem>>, vector<8x11xbf16>,
    %c0_40 = arith.constant 0 : index
    %c0_41 = arith.constant 0 : index
    %37 = vector.load %arg8[%c0_40, %c0_41] : memref<1x78xf32, #tpu.memory_space<vmem>>, vector<1x78xf32>
    %38 = vector.broadcast %37 : vector<1x78xf32> to vector<8x78xf32>
    %39 = arith.mulf %32, %38 : vector<8x78xf32>
    %40 = arith.truncf %39 : vector<8x78xf32> to vector<8x78xbf16>
    %c0_42 = arith.constant 0 : index
    %c11_43 = arith.constant 11 : index
    %41 = vector.load %arg11[%c0_42, %c11_43] : memref<8x100xbf16, #tpu.memory_space<vmem>>, vector<8x78xbf16>
    tpu.vector_store %arg11[%c0_42, %c11_43], %40 {strides = array<i32>} : memref<8x100xbf16, #tpu.memory_space<vmem>>, vector<8x78xbf16>,
    %c0_44 = arith.constant 0 : index
    %c0_45 = arith.constant 0 : index
    %42 = vector.load %arg11[%c0_44, %c0_45] : memref<8x100xbf16, #tpu.memory_space<vmem>>, vector<8x78xbf16>
    %c0_46 = arith.constant 0 : index
    %c0_47 = arith.constant 0 : index
    %43 = vector.load %arg12[%c0_46, %c0_47] : memref<72x78xbf16, #tpu.memory_space<vmem>>, vector<8x78xbf16>
    tpu.vector_store %arg12[%c0_46, %c0_47], %42 {strides = array<i32>} : memref<72x78xbf16, #tpu.memory_space<vmem>>, vector<8x78xbf16>,
    %c0_48 = arith.constant 0 : index
    %c1_49 = arith.constant 1 : index
    %44 = vector.load %arg11[%c0_48, %c1_49] : memref<8x100xbf16, #tpu.memory_space<vmem>>, vector<8x78xbf16>
    %c8 = arith.constant 8 : index
    %c0_50 = arith.constant 0 : index
    %45 = vector.load %arg12[%c8, %c0_50] : memref<72x78xbf16, #tpu.memory_space<vmem>>, vector<8x78xbf16>
    tpu.vector_store %arg12[%c8, %c0_50], %44 {strides = array<i32>} : memref<72x78xbf16, #tpu.memory_space<vmem>>, vector<8x78xbf16>,
    %c0_51 = arith.constant 0 : index
    %c2_52 = arith.constant 2 : index
    %46 = vector.load %arg11[%c0_51, %c2_52] : memref<8x100xbf16, #tpu.memory_space<vmem>>, vector<8x78xbf16>
    %c16 = arith.constant 16 : index
    %c0_53 = arith.constant 0 : index
    %47 = vector.load %arg12[%c16, %c0_53] : memref<72x78xbf16, #tpu.memory_space<vmem>>, vector<8x78xbf16>
    tpu.vector_store %arg12[%c16, %c0_53], %46 {strides = array<i32>} : memref<72x78xbf16, #tpu.memory_space<vmem>>, vector<8x78xbf16>,
    %c0_54 = arith.constant 0 : index
    %c10_55 = arith.constant 10 : index
    %48 = vector.load %arg11[%c0_54, %c10_55] : memref<8x100xbf16, #tpu.memory_space<vmem>>, vector<8x78xbf16>
    %c24_56 = arith.constant 24 : index
    %c0_57 = arith.constant 0 : index
    %49 = vector.load %arg12[%c24_56, %c0_57] : memref<72x78xbf16, #tpu.memory_space<vmem>>, vector<8x78xbf16>
    tpu.vector_store %arg12[%c24_56, %c0_57], %48 {strides = array<i32>} : memref<72x78xbf16, #tpu.memory_space<vmem>>, vector<8x78xbf16>,
    %c0_58 = arith.constant 0 : index
    %c11_59 = arith.constant 11 : index
    %50 = vector.load %arg11[%c0_58, %c11_59] : memref<8x100xbf16, #tpu.memory_space<vmem>>, vector<8x78xbf16>
    %c32 = arith.constant 32 : index
    %c0_60 = arith.constant 0 : index
    %51 = vector.load %arg12[%c32, %c0_60] : memref<72x78xbf16, #tpu.memory_space<vmem>>, vector<8x78xbf16>
    tpu.vector_store %arg12[%c32, %c0_60], %50 {strides = array<i32>} : memref<72x78xbf16, #tpu.memory_space<vmem>>, vector<8x78xbf16>,
    %c0_61 = arith.constant 0 : index
    %c12_62 = arith.constant 12 : index
    %52 = vector.load %arg11[%c0_61, %c12_62] : memref<8x100xbf16, #tpu.memory_space<vmem>>, vector<8x78xbf16>
    %c40 = arith.constant 40 : index
    %c0_63 = arith.constant 0 : index
    %53 = vector.load %arg12[%c40, %c0_63] : memref<72x78xbf16, #tpu.memory_space<vmem>>, vector<8x78xbf16>
    tpu.vector_store %arg12[%c40, %c0_63], %52 {strides = array<i32>} : memref<72x78xbf16, #tpu.memory_space<vmem>>, vector<8x78xbf16>,
    %c0_64 = arith.constant 0 : index
    %c20_65 = arith.constant 20 : index
    %54 = vector.load %arg11[%c0_64, %c20_65] : memref<8x100xbf16, #tpu.memory_space<vmem>>, vector<8x78xbf16>
    %c48_66 = arith.constant 48 : index
    %c0_67 = arith.constant 0 : index
    %55 = vector.load %arg12[%c48_66, %c0_67] : memref<72x78xbf16, #tpu.memory_space<vmem>>, vector<8x78xbf16>
    tpu.vector_store %arg12[%c48_66, %c0_67], %54 {strides = array<i32>} : memref<72x78xbf16, #tpu.memory_space<vmem>>, vector<8x78xbf16>,
    %c0_68 = arith.constant 0 : index
    %c21_69 = arith.constant 21 : index
    %56 = vector.load %arg11[%c0_68, %c21_69] : memref<8x100xbf16, #tpu.memory_space<vmem>>, vector<8x78xbf16>
    %c56 = arith.constant 56 : index
    %c0_70 = arith.constant 0 : index
    %57 = vector.load %arg12[%c56, %c0_70] : memref<72x78xbf16, #tpu.memory_space<vmem>>, vector<8x78xbf16>
    tpu.vector_store %arg12[%c56, %c0_70], %56 {strides = array<i32>} : memref<72x78xbf16, #tpu.memory_space<vmem>>, vector<8x78xbf16>,
    %c0_71 = arith.constant 0 : index
    %c22_72 = arith.constant 22 : index
    %58 = vector.load %arg11[%c0_71, %c22_72] : memref<8x100xbf16, #tpu.memory_space<vmem>>, vector<8x78xbf16>
    %c64 = arith.constant 64 : index
    %c0_73 = arith.constant 0 : index
    %59 = vector.load %arg12[%c64, %c0_73] : memref<72x78xbf16, #tpu.memory_space<vmem>>, vector<8x78xbf16>
    tpu.vector_store %arg12[%c64, %c0_73], %58 {strides = array<i32>} : memref<72x78xbf16, #tpu.memory_space<vmem>>, vector<8x78xbf16>,
    %c0_74 = arith.constant 0 : index
    %c0_75 = arith.constant 0 : index
    %60 = vector.load %arg4[%c0_74, %c0_75] : memref<8x72xbf16, #tpu.memory_space<vmem>>, vector<8x72xbf16>
    %c0_76 = arith.constant 0 : index
    %c0_77 = arith.constant 0 : index
    %61 = vector.load %arg12[%c0_76, %c0_77] : memref<72x78xbf16, #tpu.memory_space<vmem>>, vector<72x78xbf16>
    %cst_78 = arith.constant dense<0.000000e+00> : vector<8x78xf32>
    %62 = tpu.matmul %60, %61, %cst_78 {dimension_numbers = #tpu.dot_dimension_numbers<[1], [0], [0], [1], [0, 0, 1, 1], [], []>} : vector<8x72xbf16>, vector<72x78xbf16>, vector<8x78xf32> -> vector<8x78xf32>
    %c0_79 = arith.constant 0 : index
    %c0_80 = arith.constant 0 : index
    %63 = vector.load %arg5[%c0_79, %c0_80] : memref<8x1xf32, #tpu.memory_space<vmem>>, vector<8x1xf32>
    %64 = vector.broadcast %63 : vector<8x1xf32> to vector<8x78xf32>
    %65 = arith.addf %62, %64 : vector<8x78xf32>
    %66 = arith.truncf %65 : vector<8x78xf32> to vector<8x78xbf16>
    %c0_81 = arith.constant 0 : index
    %c0_82 = arith.constant 0 : index
    %67 = vector.load %arg6[%c0_81, %c0_82] : memref<8x16xbf16, #tpu.memory_space<vmem>>, vector<8x16xbf16>
    %68 = vector.extract_strided_slice %66 {offsets = [0, 0], sizes = [8, 8], strides = [1, 1]} : vector<8x78xbf16> to vector<8x8xbf16>
    %cst_83 = arith.constant dense<0.000000e+00> : vector<8x16xf32>
    %69 = tpu.matmul %68, %67, %cst_83 {dimension_numbers = #tpu.dot_dimension_numbers<[1], [0], [0], [1], [0, 0, 1, 1], [], []>} : vector<8x8xbf16>, vector<8x16xbf16>, vector<8x16xf32> -> vector<8x16xf32>
    %70 = arith.truncf %69 : vector<8x16xf32> to vector<8x16xbf16>
    %71 = vector.shape_cast %70 : vector<8x16xbf16> to vector<8x1x16xbf16>
    %c0_84 = arith.constant 0 : index
    %c0_85 = arith.constant 0 : index
    %c0_86 = arith.constant 0 : index
    %72 = vector.load %arg13[%c0_84, %c0_85, %c0_86] : memref<8x8x16xbf16, #tpu.memory_space<vmem>>, vector<8x1x16xbf16>
    tpu.vector_store %arg13[%c0_84, %c0_85, %c0_86], %71 {strides = array<i32>} : memref<8x8x16xbf16, #tpu.memory_space<vmem>>, vector<8x1x16xbf16>,
    %73 = vector.extract_strided_slice %66 {offsets = [0, 10], sizes = [8, 8], strides = [1, 1]} : vector<8x78xbf16> to vector<8x8xbf16>
    %cst_87 = arith.constant dense<0.000000e+00> : vector<8x16xf32>
    %74 = tpu.matmul %73, %67, %cst_87 {dimension_numbers = #tpu.dot_dimension_numbers<[1], [0], [0], [1], [0, 0, 1, 1], [], []>} : vector<8x8xbf16>, vector<8x16xbf16>, vector<8x16xf32> -> vector<8x16xf32>
    %75 = arith.truncf %74 : vector<8x16xf32> to vector<8x16xbf16>
    %76 = vector.shape_cast %75 : vector<8x16xbf16> to vector<8x1x16xbf16>
    %c0_88 = arith.constant 0 : index
    %c1_89 = arith.constant 1 : index
    %c0_90 = arith.constant 0 : index
    %77 = vector.load %arg13[%c0_88, %c1_89, %c0_90] : memref<8x8x16xbf16, #tpu.memory_space<vmem>>, vector<8x1x16xbf16>
    tpu.vector_store %arg13[%c0_88, %c1_89, %c0_90], %76 {strides = array<i32>} : memref<8x8x16xbf16, #tpu.memory_space<vmem>>, vector<8x1x16xbf16>,
    %78 = vector.extract_strided_slice %66 {offsets = [0, 20], sizes = [8, 8], strides = [1, 1]} : vector<8x78xbf16> to vector<8x8xbf16>
    %cst_91 = arith.constant dense<0.000000e+00> : vector<8x16xf32>
    %79 = tpu.matmul %78, %67, %cst_91 {dimension_numbers = #tpu.dot_dimension_numbers<[1], [0], [0], [1], [0, 0, 1, 1], [], []>} : vector<8x8xbf16>, vector<8x16xbf16>, vector<8x16xf32> -> vector<8x16xf32>
    %80 = arith.truncf %79 : vector<8x16xf32> to vector<8x16xbf16>
    %81 = vector.shape_cast %80 : vector<8x16xbf16> to vector<8x1x16xbf16>
    %c0_92 = arith.constant 0 : index
    %c2_93 = arith.constant 2 : index
    %c0_94 = arith.constant 0 : index
    %82 = vector.load %arg13[%c0_92, %c2_93, %c0_94] : memref<8x8x16xbf16, #tpu.memory_space<vmem>>, vector<8x1x16xbf16>
    tpu.vector_store %arg13[%c0_92, %c2_93, %c0_94], %81 {strides = array<i32>} : memref<8x8x16xbf16, #tpu.memory_space<vmem>>, vector<8x1x16xbf16>,
    %83 = vector.extract_strided_slice %66 {offsets = [0, 30], sizes = [8, 8], strides = [1, 1]} : vector<8x78xbf16> to vector<8x8xbf16>
    %cst_95 = arith.constant dense<0.000000e+00> : vector<8x16xf32>
    %84 = tpu.matmul %83, %67, %cst_95 {dimension_numbers = #tpu.dot_dimension_numbers<[1], [0], [0], [1], [0, 0, 1, 1], [], []>} : vector<8x8xbf16>, vector<8x16xbf16>, vector<8x16xf32> -> vector<8x16xf32>
    %85 = arith.truncf %84 : vector<8x16xf32> to vector<8x16xbf16>
    %86 = vector.shape_cast %85 : vector<8x16xbf16> to vector<8x1x16xbf16>
    %c0_96 = arith.constant 0 : index
    %c3 = arith.constant 3 : index
    %c0_97 = arith.constant 0 : index
    %87 = vector.load %arg13[%c0_96, %c3, %c0_97] : memref<8x8x16xbf16, #tpu.memory_space<vmem>>, vector<8x1x16xbf16>
    tpu.vector_store %arg13[%c0_96, %c3, %c0_97], %86 {strides = array<i32>} : memref<8x8x16xbf16, #tpu.memory_space<vmem>>, vector<8x1x16xbf16>,
    %88 = vector.extract_strided_slice %66 {offsets = [0, 40], sizes = [8, 8], strides = [1, 1]} : vector<8x78xbf16> to vector<8x8xbf16>
    %cst_98 = arith.constant dense<0.000000e+00> : vector<8x16xf32>
    %89 = tpu.matmul %88, %67, %cst_98 {dimension_numbers = #tpu.dot_dimension_numbers<[1], [0], [0], [1], [0, 0, 1, 1], [], []>} : vector<8x8xbf16>, vector<8x16xbf16>, vector<8x16xf32> -> vector<8x16xf32>
    %90 = arith.truncf %89 : vector<8x16xf32> to vector<8x16xbf16>
    %91 = vector.shape_cast %90 : vector<8x16xbf16> to vector<8x1x16xbf16>
    %c0_99 = arith.constant 0 : index
    %c4 = arith.constant 4 : index
    %c0_100 = arith.constant 0 : index
    %92 = vector.load %arg13[%c0_99, %c4, %c0_100] : memref<8x8x16xbf16, #tpu.memory_space<vmem>>, vector<8x1x16xbf16>
    tpu.vector_store %arg13[%c0_99, %c4, %c0_100], %91 {strides = array<i32>} : memref<8x8x16xbf16, #tpu.memory_space<vmem>>, vector<8x1x16xbf16>,
    %93 = vector.extract_strided_slice %66 {offsets = [0, 50], sizes = [8, 8], strides = [1, 1]} : vector<8x78xbf16> to vector<8x8xbf16>
    %cst_101 = arith.constant dense<0.000000e+00> : vector<8x16xf32>
    %94 = tpu.matmul %93, %67, %cst_101 {dimension_numbers = #tpu.dot_dimension_numbers<[1], [0], [0], [1], [0, 0, 1, 1], [], []>} : vector<8x8xbf16>, vector<8x16xbf16>, vector<8x16xf32> -> vector<8x16xf32>
    %95 = arith.truncf %94 : vector<8x16xf32> to vector<8x16xbf16>
    %96 = vector.shape_cast %95 : vector<8x16xbf16> to vector<8x1x16xbf16>
    %c0_102 = arith.constant 0 : index
    %c5 = arith.constant 5 : index
    %c0_103 = arith.constant 0 : index
    %97 = vector.load %arg13[%c0_102, %c5, %c0_103] : memref<8x8x16xbf16, #tpu.memory_space<vmem>>, vector<8x1x16xbf16>
    tpu.vector_store %arg13[%c0_102, %c5, %c0_103], %96 {strides = array<i32>} : memref<8x8x16xbf16, #tpu.memory_space<vmem>>, vector<8x1x16xbf16>,
    %98 = vector.extract_strided_slice %66 {offsets = [0, 60], sizes = [8, 8], strides = [1, 1]} : vector<8x78xbf16> to vector<8x8xbf16>
    %cst_104 = arith.constant dense<0.000000e+00> : vector<8x16xf32>
    %99 = tpu.matmul %98, %67, %cst_104 {dimension_numbers = #tpu.dot_dimension_numbers<[1], [0], [0], [1], [0, 0, 1, 1], [], []>} : vector<8x8xbf16>, vector<8x16xbf16>, vector<8x16xf32> -> vector<8x16xf32>
    %100 = arith.truncf %99 : vector<8x16xf32> to vector<8x16xbf16>
    %101 = vector.shape_cast %100 : vector<8x16xbf16> to vector<8x1x16xbf16>
    %c0_105 = arith.constant 0 : index
    %c6_106 = arith.constant 6 : index
    %c0_107 = arith.constant 0 : index
    %102 = vector.load %arg13[%c0_105, %c6_106, %c0_107] : memref<8x8x16xbf16, #tpu.memory_space<vmem>>, vector<8x1x16xbf16>
    tpu.vector_store %arg13[%c0_105, %c6_106, %c0_107], %101 {strides = array<i32>} : memref<8x8x16xbf16, #tpu.memory_space<vmem>>, vector<8x1x16xbf16>,
    %103 = vector.extract_strided_slice %66 {offsets = [0, 70], sizes = [8, 8], strides = [1, 1]} : vector<8x78xbf16> to vector<8x8xbf16>
    %cst_108 = arith.constant dense<0.000000e+00> : vector<8x16xf32>
    %104 = tpu.matmul %103, %67, %cst_108 {dimension_numbers = #tpu.dot_dimension_numbers<[1], [0], [0], [1], [0, 0, 1, 1], [], []>} : vector<8x8xbf16>, vector<8x16xbf16>, vector<8x16xf32> -> vector<8x16xf32>
    %105 = arith.truncf %104 : vector<8x16xf32> to vector<8x16xbf16>
    %106 = vector.shape_cast %105 : vector<8x16xbf16> to vector<8x1x16xbf16>
    %c0_109 = arith.constant 0 : index
    %c7 = arith.constant 7 : index
    %c0_110 = arith.constant 0 : index
    %107 = vector.load %arg13[%c0_109, %c7, %c0_110] : memref<8x8x16xbf16, #tpu.memory_space<vmem>>, vector<8x1x16xbf16>
    tpu.vector_store %arg13[%c0_109, %c7, %c0_110], %106 {strides = array<i32>} : memref<8x8x16xbf16, #tpu.memory_space<vmem>>, vector<8x1x16xbf16>,
    %c0_111 = arith.constant 0 : index
    %c0_112 = arith.constant 0 : index
    %108 = vector.load %arg7[%c0_111, %c0_112] : memref<16x8xbf16, #tpu.memory_space<vmem>>, vector<16x8xbf16>
    %c0_113 = arith.constant 0 : index
    %c0_114 = arith.constant 0 : index
    %c0_115 = arith.constant 0 : index
    %109 = vector.load %arg13[%c0_113, %c0_114, %c0_115] : memref<8x8x16xbf16, #tpu.memory_space<vmem>>, vector<1x8x16xbf16>
    %110 = vector.shape_cast %109 : vector<1x8x16xbf16> to vector<8x16xbf16>
    %cst_116 = arith.constant dense<0.000000e+00> : vector<16x16xf32>
    %111 = tpu.matmul %108, %110, %cst_116 {dimension_numbers = #tpu.dot_dimension_numbers<[1], [0], [0], [1], [0, 0, 1, 1], [], []>} : vector<16x8xbf16>, vector<8x16xbf16>, vector<16x16xf32> -> vector<16x16xf32>
    %112 = arith.truncf %111 : vector<16x16xf32> to vector<16x16xbf16>
    %c0_117 = arith.constant 0 : index
    %c0_118 = arith.constant 0 : index
    %c0_119 = arith.constant 0 : index
    %c0_120 = arith.constant 0 : index
    %113 = vector.load %arg9[%c0_117, %c0_118, %c0_119, %c0_120] : memref<1x4x16x16xbf16, #tpu.memory_space<vmem>>, vector<1x1x16x16xbf16>
    %114 = vector.shape_cast %113 : vector<1x1x16x16xbf16> to vector<16x16xbf16>
    %115 = vector.shape_cast %112 : vector<16x16xbf16> to vector<1x1x16x16xbf16>
    tpu.vector_store %arg9[%c0_117, %c0_118, %c0_119, %c0_120], %115 {strides = array<i32>} : memref<1x4x16x16xbf16, #tpu.memory_space<vmem>>, vector<1x1x16x16xbf16>,
    %c1_121 = arith.constant 1 : index
    %c0_122 = arith.constant 0 : index
    %c0_123 = arith.constant 0 : index
    %116 = vector.load %arg13[%c1_121, %c0_122, %c0_123] : memref<8x8x16xbf16, #tpu.memory_space<vmem>>, vector<1x8x16xbf16>
    %117 = vector.shape_cast %116 : vector<1x8x16xbf16> to vector<8x16xbf16>
    %cst_124 = arith.constant dense<0.000000e+00> : vector<16x16xf32>
    %118 = tpu.matmul %108, %117, %cst_124 {dimension_numbers = #tpu.dot_dimension_numbers<[1], [0], [0], [1], [0, 0, 1, 1], [], []>} : vector<16x8xbf16>, vector<8x16xbf16>, vector<16x16xf32> -> vector<16x16xf32>
    %119 = arith.truncf %118 : vector<16x16xf32> to vector<16x16xbf16>
    %c0_125 = arith.constant 0 : index
    %c1_126 = arith.constant 1 : index
    %c0_127 = arith.constant 0 : index
    %c0_128 = arith.constant 0 : index
    %120 = vector.load %arg9[%c0_125, %c1_126, %c0_127, %c0_128] : memref<1x4x16x16xbf16, #tpu.memory_space<vmem>>, vector<1x1x16x16xbf16>
    %121 = vector.shape_cast %120 : vector<1x1x16x16xbf16> to vector<16x16xbf16>
    %122 = vector.shape_cast %119 : vector<16x16xbf16> to vector<1x1x16x16xbf16>
    tpu.vector_store %arg9[%c0_125, %c1_126, %c0_127, %c0_128], %122 {strides = array<i32>} : memref<1x4x16x16xbf16, #tpu.memory_space<vmem>>, vector<1x1x16x16xbf16>,
    %c2_129 = arith.constant 2 : index
    %c0_130 = arith.constant 0 : index
    %c0_131 = arith.constant 0 : index
    %123 = vector.load %arg13[%c2_129, %c0_130, %c0_131] : memref<8x8x16xbf16, #tpu.memory_space<vmem>>, vector<1x8x16xbf16>
    %124 = vector.shape_cast %123 : vector<1x8x16xbf16> to vector<8x16xbf16>
    %cst_132 = arith.constant dense<0.000000e+00> : vector<16x16xf32>
    %125 = tpu.matmul %108, %124, %cst_132 {dimension_numbers = #tpu.dot_dimension_numbers<[1], [0], [0], [1], [0, 0, 1, 1], [], []>} : vector<16x8xbf16>, vector<8x16xbf16>, vector<16x16xf32> -> vector<16x16xf32>
    %126 = arith.truncf %125 : vector<16x16xf32> to vector<16x16xbf16>
    %c0_133 = arith.constant 0 : index
    %c2_134 = arith.constant 2 : index
    %c0_135 = arith.constant 0 : index
    %c0_136 = arith.constant 0 : index
    %127 = vector.load %arg9[%c0_133, %c2_134, %c0_135, %c0_136] : memref<1x4x16x16xbf16, #tpu.memory_space<vmem>>, vector<1x1x16x16xbf16>
    %128 = vector.shape_cast %127 : vector<1x1x16x16xbf16> to vector<16x16xbf16>
    %129 = vector.shape_cast %126 : vector<16x16xbf16> to vector<1x1x16x16xbf16>
    tpu.vector_store %arg9[%c0_133, %c2_134, %c0_135, %c0_136], %129 {strides = array<i32>} : memref<1x4x16x16xbf16, #tpu.memory_space<vmem>>, vector<1x1x16x16xbf16>,
    %c3_137 = arith.constant 3 : index
    %c0_138 = arith.constant 0 : index
    %c0_139 = arith.constant 0 : index
    %130 = vector.load %arg13[%c3_137, %c0_138, %c0_139] : memref<8x8x16xbf16, #tpu.memory_space<vmem>>, vector<1x8x16xbf16>
    %131 = vector.shape_cast %130 : vector<1x8x16xbf16> to vector<8x16xbf16>
    %cst_140 = arith.constant dense<0.000000e+00> : vector<16x16xf32>
    %132 = tpu.matmul %108, %131, %cst_140 {dimension_numbers = #tpu.dot_dimension_numbers<[1], [0], [0], [1], [0, 0, 1, 1], [], []>} : vector<16x8xbf16>, vector<8x16xbf16>, vector<16x16xf32> -> vector<16x16xf32>
    %133 = arith.truncf %132 : vector<16x16xf32> to vector<16x16xbf16>
    %c0_141 = arith.constant 0 : index
    %c3_142 = arith.constant 3 : index
    %c0_143 = arith.constant 0 : index
    %c0_144 = arith.constant 0 : index
    %134 = vector.load %arg9[%c0_141, %c3_142, %c0_143, %c0_144] : memref<1x4x16x16xbf16, #tpu.memory_space<vmem>>, vector<1x1x16x16xbf16>
    %135 = vector.shape_cast %134 : vector<1x1x16x16xbf16> to vector<16x16xbf16>
    %136 = vector.shape_cast %133 : vector<16x16xbf16> to vector<1x1x16x16xbf16>
    tpu.vector_store %arg9[%c0_141, %c3_142, %c0_143, %c0_144], %136 {strides = array<i32>} : memref<1x4x16x16xbf16, #tpu.memory_space<vmem>>, vector<1x1x16x16xbf16>,
    return
  }
  func.func @transform_0(%arg0: i32) -> (i32, i32, i32) {
    %c0_i32 = arith.constant 0 : i32
    %c0_i32_0 = arith.constant 0 : i32
    %c0_i32_1 = arith.constant 0 : i32
    return %arg0, %c0_i32, %c0_i32_0 : i32, i32, i32
  }
  func.func @transform_1(%arg0: i32) -> (i32, i32) {
    %c0_i32 = arith.constant 0 : i32
    %c0_i32_0 = arith.constant 0 : i32
    %c0_i32_1 = arith.constant 0 : i32
    return %c0_i32, %c0_i32_0 : i32, i32
  }
  func.func @transform_2(%arg0: i32) -> (i32, i32) {
    %c0_i32 = arith.constant 0 : i32
    %c0_i32_0 = arith.constant 0 : i32
    %c0_i32_1 = arith.constant 0 : i32
    return %c0_i32, %c0_i32_0 : i32, i32
  }
  func.func @transform_3(%arg0: i32) -> (i32, i32) {
    %c0_i32 = arith.constant 0 : i32
    %c0_i32_0 = arith.constant 0 : i32
    %c0_i32_1 = arith.constant 0 : i32
    return %c0_i32, %c0_i32_0 : i32, i32
  }
  func.func @transform_4(%arg0: i32) -> (i32, i32) {
    %c0_i32 = arith.constant 0 : i32
    %c0_i32_0 = arith.constant 0 : i32
    %c0_i32_1 = arith.constant 0 : i32
    return %c0_i32, %c0_i32_0 : i32, i32
  }
  func.func @transform_5(%arg0: i32) -> (i32, i32) {
    %c0_i32 = arith.constant 0 : i32
    %c0_i32_0 = arith.constant 0 : i32
    %c0_i32_1 = arith.constant 0 : i32
    return %c0_i32, %c0_i32_0 : i32, i32
  }
  func.func @transform_6(%arg0: i32) -> (i32, i32) {
    %c0_i32 = arith.constant 0 : i32
    %c0_i32_0 = arith.constant 0 : i32
    %c0_i32_1 = arith.constant 0 : i32
    return %c0_i32, %c0_i32_0 : i32, i32
  }
  func.func @transform_7(%arg0: i32) -> (i32, i32) {
    %c0_i32 = arith.constant 0 : i32
    %c0_i32_0 = arith.constant 0 : i32
    %c0_i32_1 = arith.constant 0 : i32
    return %c0_i32, %c0_i32_0 : i32, i32
  }
  func.func @transform_8(%arg0: i32) -> (i32, i32, i32, i32) {
    %c0_i32 = arith.constant 0 : i32
    %c0_i32_0 = arith.constant 0 : i32
    %c0_i32_1 = arith.constant 0 : i32
    %c0_i32_2 = arith.constant 0 : i32
    return %arg0, %c0_i32, %c0_i32_0, %c0_i32_1 : i32, i32, i32, i32
  }
}

</mosaic_0001>

<llo_original>
// kernel: hcolumns_forward.2
$region0: #{hcolumns_forward.2}
  #allocation0 [shape = 'u32[]', space=smem, size = 0x4, offset = 0x4, fixed_abs, tag = 'smem constant byte address 0x4 - core index']
  #allocation1 [shape = 'u32[144,128]{1,0:T(1,128)}', space=vmem, size = 0x12000, scoped, tag = 'internal scratch']
  #allocation2 [shape = 'bf16[72,22]{1,0:T(8,128)(2,1)}', space=vmem, size = 0x4800, scoped, tag = 'scratch operand']
  #allocation3 [shape = 'bf16[8,36]{1,0:T(8,128)(2,1)}', space=vmem, size = 0x800, scoped, tag = 'scratch operand']
  #allocation4 [shape = 'bf16[72,22]{1,0:T(8,128)(2,1)}', space=vmem, size = 0x4800, scoped, tag = 'scratch operand']
  #allocation5 [shape = 'bf16[8,4,16]{2,1,0:T(4,128)(2,1)}', space=vmem, size = 0x2000, scoped, tag = 'scratch operand']
  %s0 = inlined_call_operand.vmem [shape: bf16[2,8,36], index: 0, kind: input, shape index: {}]
  %s1 = inlined_call_operand.vmem [shape: bf16[8,72], index: 1, kind: input, shape index: {}]
  %s2 = inlined_call_operand.vmem [shape: f32[8,1], index: 2, kind: input, shape index: {}]
  %s3 = inlined_call_operand.vmem [shape: bf16[8,72], index: 3, kind: input, shape index: {}]
  %s4 = inlined_call_operand.vmem [shape: f32[8,1], index: 4, kind: input, shape index: {}]
  %s5 = inlined_call_operand.vmem [shape: bf16[4,16], index: 5, kind: input, shape index: {}]
  %s6 = inlined_call_operand.vmem [shape: bf16[16,4], index: 6, kind: input, shape index: {}]
  %s7 = inlined_call_operand.vmem [shape: f32[1,22], index: 7, kind: input, shape index: {}]
  %s8 = inlined_call_operand.vmem [shape: bf16[2,4,16,16], index: 8, kind: output, shape index: {}]
  %s9 = sld [smem:[#allocation0]]
  $region65: #{hcolumns_forward.2} parent=0
    _
  %s11 = ssub.s32 1, %s9
  %s12 = scalar_select 0, %s11, %s9
  loop: start=0, step=1, limit=4
  $region2: #{hcolumns_forward.2} parent=0 // loop_pre_header
    _
  $region3: #{hcolumns_forward.2} parent=0 // loop_header
    %s14 = sphi 0, %s18
    %p15 = scmp.ge.s32.totalorder %s14, 4
    %s24 = sphi 0, %s26
    %s27 = sphi 0, %s24
    %s28 = sphi 0, %s27
    %s44 = sphi 0, %s28
    %s48 = sphi 0, %s48
    %s50 = sphi 0, %s48
    %s51 = sphi 0, %s50
    %s65 = sphi 0, %s51
    %s69 = sphi 0, %s69
    %s71 = sphi 0, %s69
    %s72 = sphi 0, %s71
    %s86 = sphi 0, %s72
    %s90 = sphi 0, %s90
    %s92 = sphi 0, %s90
    %s93 = sphi 0, %s92
    %s107 = sphi 0, %s93
    %s111 = sphi 0, %s111
    %s113 = sphi 0, %s111
    %s114 = sphi 0, %s113
    %s128 = sphi 0, %s114
    %s132 = sphi 0, %s132
    %s134 = sphi 0, %s132
    %s135 = sphi 0, %s134
    %s149 = sphi 0, %s135
    %s153 = sphi 0, %s153
    %s155 = sphi 0, %s153
    %s156 = sphi 0, %s155
    %s170 = sphi 0, %s156
    %s174 = sphi 0, %s174
    %s176 = sphi 0, %s174
    %s177 = sphi 0, %s176
    %s191 = sphi 0, %s177
    %s197 = sphi 0, %s199
    %s200 = sphi 0, %s197
    %s201 = sphi 0, %s200
    %s217 = sphi 0, %s201
  $region4: #{hcolumns_forward.2} parent=0 // loop_header_branch
    %17 = sbr.rel (%p15) target = $region8
  $region5: #{hcolumns_forward.2} parent=0 // loop_body
    %s19 = ssub.s32 %s14, 1
    %s20 = ssub.s32 %s14, 2
    %s21 = sadd.s32 %s14, 1
    %s22 = ssub.s32 %s14, %s21
    %p23 = scmp.eq.s32.totalorder %s22, 0
    %s25 = sadd.s32 %s24, 1
    %s26 = scalar_select %p23, %s24, %s25
    %p29 = pneg %p23
    %p30 = scmp.eq.s32.totalorder %s14, 1
    %p31 = por %p29, %p30
    %p32 = scmp.ne.s32.totalorder %s24, %s27
    %p33 = scmp.eq.s32.totalorder %s14, 0
    %p34 = por %p32, %p33
    %p35 = scmp.ne.s32.totalorder %s24, %s27
    %p36 = scmp.eq.s32.totalorder %s19, 1
    %p37 = por %p35, %p36
    %p38 = scmp.ne.s32.totalorder %s27, %s28
    %p39 = scmp.eq.s32.totalorder %s19, 0
    %p40 = por %p38, %p39
    %p41 = scmp.ne.s32.totalorder %s27, %s28
    %p42 = scmp.eq.s32.totalorder %s20, 1
    %p43 = por %p41, %p42
    %p45 = scmp.ne.s32.totalorder %s28, %s44
    %p46 = scmp.eq.s32.totalorder %s20, 0
    %p47 = por %p45, %p46
    %s49 = sadd.s32 %s48, 1
    %p52 = scmp.eq.s32.totalorder %s14, 1
    %p53 = scmp.ne.s32.totalorder %s48, %s50
    %p54 = scmp.eq.s32.totalorder %s14, 0
    %p55 = por %p53, %p54
    %p56 = scmp.ne.s32.totalorder %s48, %s50
    %p57 = scmp.eq.s32.totalorder %s19, 1
    %p58 = por %p56, %p57
    %p59 = scmp.ne.s32.totalorder %s50, %s51
    %p60 = scmp.eq.s32.totalorder %s19, 0
    %p61 = por %p59, %p60
    %p62 = scmp.ne.s32.totalorder %s50, %s51
    %p63 = scmp.eq.s32.totalorder %s20, 1
    %p64 = por %p62, %p63
    %p66 = scmp.ne.s32.totalorder %s51, %s65
    %p67 = scmp.eq.s32.totalorder %s20, 0
    %p68 = por %p66, %p67
    %s70 = sadd.s32 %s69, 1
    %p73 = scmp.eq.s32.totalorder %s14, 1
    %p74 = scmp.ne.s32.totalorder %s69, %s71
    %p75 = scmp.eq.s32.totalorder %s14, 0
    %p76 = por %p74, %p75
    %p77 = scmp.ne.s32.totalorder %s69, %s71
    %p78 = scmp.eq.s32.totalorder %s19, 1
    %p79 = por %p77, %p78
    %p80 = scmp.ne.s32.totalorder %s71, %s72
    %p81 = scmp.eq.s32.totalorder %s19, 0
    %p82 = por %p80, %p81
    %p83 = scmp.ne.s32.totalorder %s71, %s72
    %p84 = scmp.eq.s32.totalorder %s20, 1
    %p85 = por %p83, %p84
    %p87 = scmp.ne.s32.totalorder %s72, %s86
    %p88 = scmp.eq.s32.totalorder %s20, 0
    %p89 = por %p87, %p88
    %s91 = sadd.s32 %s90, 1
    %p94 = scmp.eq.s32.totalorder %s14, 1
    %p95 = scmp.ne.s32.totalorder %s90, %s92
    %p96 = scmp.eq.s32.totalorder %s14, 0
    %p97 = por %p95, %p96
    %p98 = scmp.ne.s32.totalorder %s90, %s92
    %p99 = scmp.eq.s32.totalorder %s19, 1
    %p100 = por %p98, %p99
    %p101 = scmp.ne.s32.totalorder %s92, %s93
    %p102 = scmp.eq.s32.totalorder %s19, 0
    %p103 = por %p101, %p102
    %p104 = scmp.ne.s32.totalorder %s92, %s93
    %p105 = scmp.eq.s32.totalorder %s20, 1
    %p106 = por %p104, %p105
    %p108 = scmp.ne.s32.totalorder %s93, %s107
    %p109 = scmp.eq.s32.totalorder %s20, 0
    %p110 = por %p108, %p109
    %s112 = sadd.s32 %s111, 1
    %p115 = scmp.eq.s32.totalorder %s14, 1
    %p116 = scmp.ne.s32.totalorder %s111, %s113
    %p117 = scmp.eq.s32.totalorder %s14, 0
    %p118 = por %p116, %p117
    %p119 = scmp.ne.s32.totalorder %s111, %s113
    %p120 = scmp.eq.s32.totalorder %s19, 1
    %p121 = por %p119, %p120
    %p122 = scmp.ne.s32.totalorder %s113, %s114
    %p123 = scmp.eq.s32.totalorder %s19, 0
    %p124 = por %p122, %p123
    %p125 = scmp.ne.s32.totalorder %s113, %s114
    %p126 = scmp.eq.s32.totalorder %s20, 1
    %p127 = por %p125, %p126
    %p129 = scmp.ne.s32.totalorder %s114, %s128
    %p130 = scmp.eq.s32.totalorder %s20, 0
    %p131 = por %p129, %p130
    %s133 = sadd.s32 %s132, 1
    %p136 = scmp.eq.s32.totalorder %s14, 1
    %p137 = scmp.ne.s32.totalorder %s132, %s134
    %p138 = scmp.eq.s32.totalorder %s14, 0
    %p139 = por %p137, %p138
    %p140 = scmp.ne.s32.totalorder %s132, %s134
    %p141 = scmp.eq.s32.totalorder %s19, 1
    %p142 = por %p140, %p141
    %p143 = scmp.ne.s32.totalorder %s134, %s135
    %p144 = scmp.eq.s32.totalorder %s19, 0
    %p145 = por %p143, %p144
    %p146 = scmp.ne.s32.totalorder %s134, %s135
    %p147 = scmp.eq.s32.totalorder %s20, 1
    %p148 = por %p146, %p147
    %p150 = scmp.ne.s32.totalorder %s135, %s149
    %p151 = scmp.eq.s32.totalorder %s20, 0
    %p152 = por %p150, %p151
    %s154 = sadd.s32 %s153, 1
    %p157 = scmp.eq.s32.totalorder %s14, 1
    %p158 = scmp.ne.s32.totalorder %s153, %s155
    %p159 = scmp.eq.s32.totalorder %s14, 0
    %p160 = por %p158, %p159
    %p161 = scmp.ne.s32.totalorder %s153, %s155
    %p162 = scmp.eq.s32.totalorder %s19, 1
    %p163 = por %p161, %p162
    %p164 = scmp.ne.s32.totalorder %s155, %s156
    %p165 = scmp.eq.s32.totalorder %s19, 0
    %p166 = por %p164, %p165
    %p167 = scmp.ne.s32.totalorder %s155, %s156
    %p168 = scmp.eq.s32.totalorder %s20, 1
    %p169 = por %p167, %p168
    %p171 = scmp.ne.s32.totalorder %s156, %s170
    %p172 = scmp.eq.s32.totalorder %s20, 0
    %p173 = por %p171, %p172
    %s175 = sadd.s32 %s174, 1
    %p178 = scmp.eq.s32.totalorder %s14, 1
    %p179 = scmp.ne.s32.totalorder %s174, %s176
    %p180 = scmp.eq.s32.totalorder %s14, 0
    %p181 = por %p179, %p180
    %p182 = scmp.ne.s32.totalorder %s174, %s176
    %p183 = scmp.eq.s32.totalorder %s19, 1
    %p184 = por %p182, %p183
    %p185 = scmp.ne.s32.totalorder %s176, %s177
    %p186 = scmp.eq.s32.totalorder %s19, 0
    %p187 = por %p185, %p186
    %p188 = scmp.ne.s32.totalorder %s176, %s177
    %p189 = scmp.eq.s32.totalorder %s20, 1
    %p190 = por %p188, %p189
    %p192 = scmp.ne.s32.totalorder %s177, %s191
    %p193 = scmp.eq.s32.totalorder %s20, 0
    %p194 = por %p192, %p193
    %s195 = ssub.s32 %s14, %s21
    %p196 = scmp.eq.s32.totalorder %s195, 0
    %s198 = sadd.s32 %s197, 1
    %s199 = scalar_select %p196, %s197, %s198
    %p202 = pneg %p196
    %p203 = scmp.eq.s32.totalorder %s14, 1
    %p204 = por %p202, %p203
    %p205 = scmp.ne.s32.totalorder %s197, %s200
    %p206 = scmp.eq.s32.totalorder %s14, 0
    %p207 = por %p205, %p206
    %p208 = scmp.ne.s32.totalorder %s197, %s200
    %p209 = scmp.eq.s32.totalorder %s19, 1
    %p210 = por %p208, %p209
    %p211 = scmp.ne.s32.totalorder %s200, %s201
    %p212 = scmp.eq.s32.totalorder %s19, 0
    %p213 = por %p211, %p212
    %p214 = scmp.ne.s32.totalorder %s200, %s201
    %p215 = scmp.eq.s32.totalorder %s20, 1
    %p216 = por %p214, %p215
    %p218 = scmp.ne.s32.totalorder %s201, %s217
    %p219 = scmp.eq.s32.totalorder %s20, 0
    %p220 = por %p218, %p219
    %p221 = scmp.le.s32.totalorder 1, %s14
    %p222 = scmp.lt.s32.totalorder %s14, 3
    %p223 = pnand %p221, %p222
    %p224 = pneg %p223
    // Predicated region
    $region9: #{hcolumns_forward.2} parent=5 // pred_check
      _
    $region10: #{hcolumns_forward.2} parent=5 // pred_check_branch
      %226 = sbr.rel (%p223) target = $region12
    $region11: #{hcolumns_forward.2} parent=5 // pred_region
      %s227 = ssub.s32 %s14, 1
      // Predicated region
      $region13: #{hcolumns_forward.2} parent=11 // pred_check
        %p228 = pneg %p61
      $region14: #{hcolumns_forward.2} parent=11 // pred_check_branch
        %230 = sbr.rel (%p228) target = $region16
      $region15: #{hcolumns_forward.2} parent=11 // pred_region
        _
      $region16: #{hcolumns_forward.2} parent=11 // pred_fallthru
        _
      // Predicated region
      $region17: #{hcolumns_forward.2} parent=11 // pred_check
        %p231 = pneg %p82
      $region18: #{hcolumns_forward.2} parent=11 // pred_check_branch
        %233 = sbr.rel (%p231) target = $region20
      $region19: #{hcolumns_forward.2} parent=11 // pred_region
        _
      $region20: #{hcolumns_forward.2} parent=11 // pred_fallthru
        _
      // Predicated region
      $region21: #{hcolumns_forward.2} parent=11 // pred_check
        %p234 = pneg %p103
      $region22: #{hcolumns_forward.2} parent=11 // pred_check_branch
        %236 = sbr.rel (%p234) target = $region24
      $region23: #{hcolumns_forward.2} parent=11 // pred_region
        _
      $region24: #{hcolumns_forward.2} parent=11 // pred_fallthru
        _
      // Predicated region
      $region25: #{hcolumns_forward.2} parent=11 // pred_check
        %p237 = pneg %p124
      $region26: #{hcolumns_forward.2} parent=11 // pred_check_branch
        %239 = sbr.rel (%p237) target = $region28
      $region27: #{hcolumns_forward.2} parent=11 // pred_region
        _
      $region28: #{hcolumns_forward.2} parent=11 // pred_fallthru
        _
      // Predicated region
      $region29: #{hcolumns_forward.2} parent=11 // pred_check
        %p240 = pneg %p145
      $region30: #{hcolumns_forward.2} parent=11 // pred_check_branch
        %242 = sbr.rel (%p240) target = $region32
      $region31: #{hcolumns_forward.2} parent=11 // pred_region
        _
      $region32: #{hcolumns_forward.2} parent=11 // pred_fallthru
        _
      // Predicated region
      $region33: #{hcolumns_forward.2} parent=11 // pred_check
        %p243 = pneg %p166
      $region34: #{hcolumns_forward.2} parent=11 // pred_check_branch
        %245 = sbr.rel (%p243) target = $region36
      $region35: #{hcolumns_forward.2} parent=11 // pred_region
        _
      $region36: #{hcolumns_forward.2} parent=11 // pred_fallthru
        _
      // Predicated region
      $region37: #{hcolumns_forward.2} parent=11 // pred_check
        %p246 = pneg %p187
      $region38: #{hcolumns_forward.2} parent=11 // pred_check_branch
        %248 = sbr.rel (%p246) target = $region40
      $region39: #{hcolumns_forward.2} parent=11 // pred_region
        _
      $region40: #{hcolumns_forward.2} parent=11 // pred_fallthru
        _
    $region12: #{hcolumns_forward.2} parent=5 // pred_fallthru
      _
    %p249 = scmp.lt.s32.totalorder %s14, 2
    // Predicated region
    $region41: #{hcolumns_forward.2} parent=5 // pred_check
      %p250 = pneg %p249
    $region42: #{hcolumns_forward.2} parent=5 // pred_check_branch
      %252 = sbr.rel (%p250) target = $region44
    $region43: #{hcolumns_forward.2} parent=5 // pred_region
      // Predicated region
      $region45: #{hcolumns_forward.2} parent=43 // pred_check
        %p253 = pneg %p34
      $region46: #{hcolumns_forward.2} parent=43 // pred_check_branch
        %255 = sbr.rel (%p253) target = $region48
      $region47: #{hcolumns_forward.2} parent=43 // pred_region
        %p256 = scmp.lt.s32.totalorder %s14, 1
        %s257 = scalar_select %p256, %s14, 1
        %s258 = smul.addr %s257, 4
        %s259 = scalar_lea.vmem %s0, %s258
      $region48: #{hcolumns_forward.2} parent=43 // pred_fallthru
        _
    $region44: #{hcolumns_forward.2} parent=5 // pred_fallthru
      _
    %p260 = scmp.le.s32.totalorder 1, %s14
    %p261 = scmp.lt.s32.totalorder %s14, 3
    %p262 = pnand %p260, %p261
    %p263 = pneg %p262
    // Predicated region
    $region49: #{hcolumns_forward.2} parent=5 // pred_check
      _
    $region50: #{hcolumns_forward.2} parent=5 // pred_check_branch
      %265 = sbr.rel (%p262) target = $region52
    $region51: #{hcolumns_forward.2} parent=5 // pred_region
      %s266 = ssub.s32 %s14, 1
      %p267 = scmp.lt.s32.totalorder %s19, 1
      %s268 = scalar_select %p267, %s19, 1
      %s269 = smul.addr %s268, 4
      %s270 = scalar_lea.vmem %s0, %s269
      %p271 = pneg %p40
      %p272 = pneg %p37
      %p273 = pneg %p61
      %p274 = pneg %p58
      %p275 = pneg %p82
      %p276 = pneg %p79
      %p277 = pneg %p103
      %p278 = pneg %p100
      %p279 = pneg %p124
      %p280 = pneg %p121
      %p281 = pneg %p145
      %p282 = pneg %p142
      %p283 = pneg %p166
      %p284 = pneg %p163
      %p285 = pneg %p187
      %p286 = pneg %p184
      %p287 = pneg %p213
      %p288 = pneg %p210
      %p289 = scmp.lt.s32.totalorder %s19, 1
      %s290 = scalar_select %p289, %s19, 1
      %s291 = smul.addr %s290, 8
      %s292 = smul.addr %s291, 4
      %s293 = scalar_lea.vmem %s8, %s292
      %p294 = scmp.lt.s32.totalorder %s19, 1
      %s295 = scalar_select %p294, %s19, 1
      %s296 = smul.addr %s295, 4
      %s297 = scalar_lea.vmem %s0, %s296
      %p298 = scmp.lt.s32.totalorder %s19, 1
      %s299 = scalar_select %p298, %s19, 1
      %s300 = smul.addr %s299, 8
      %s301 = smul.addr %s300, 4
      %s302 = scalar_lea.vmem %s8, %s301
      %v304 = vld [vmem:[%s297] sm:$0xf]
      %vm305 = vcmask 175104
      %306 = vst.msk [vmem:[#allocation2] sm:$0xf] %vm305, %v304
      %v307 = vld [vmem:[%s297] sm:$0xf]
      %309 = vrot.lane.b32.xlu0 %v307, 127
      %v310 = vpop.permute.xlu0 %309
      %312 = vst.msk [vmem:[#allocation2 + $0x4] sm:$0xf] %vm305, %v310
      %v313 = vld [vmem:[%s297] sm:$0xf]
      %315 = vrot.lane.b32.xlu0 %v313, 126
      %v316 = vpop.permute.xlu0 %315
      %318 = vst.msk [vmem:[#allocation2 + $0x8] sm:$0xf] %vm305, %v316
      %v319 = vld [vmem:[%s297] sm:$0xf]
      %321 = vrot.lane.b32.xlu0 %v319, 122
      %v322 = vpop.permute.xlu0 %321
      %324 = vst.msk [vmem:[#allocation2 + $0xc] sm:$0xf] %vm305, %v322
      %v325 = vld [vmem:[%s297] sm:$0xf]
      %327 = vrot.lane.b32.xlu0 %v325, 121
      %v328 = vpop.permute.xlu0 %327
      %330 = vst.msk [vmem:[#allocation2 + $0x10] sm:$0xf] %vm305, %v328
      %v331 = vld [vmem:[%s297] sm:$0xf]
      %333 = vrot.lane.b32.xlu0 %v331, 120
      %v334 = vpop.permute.xlu0 %333
      %336 = vst.msk [vmem:[#allocation2 + $0x14] sm:$0xf] %vm305, %v334
      %v337 = vld [vmem:[%s297] sm:$0xf]
      %339 = vrot.lane.b32.xlu0 %v337, 116
      %v340 = vpop.permute.xlu0 %339
      %342 = vst.msk [vmem:[#allocation2 + $0x18] sm:$0xf] %vm305, %v340
      %v343 = vld [vmem:[%s297] sm:$0xf]
      %345 = vrot.lane.b32.xlu0 %v343, 115
      %v346 = vpop.permute.xlu0 %345
      %348 = vst.msk [vmem:[#allocation2 + $0x1c] sm:$0xf] %vm305, %v346
      %v349 = vld [vmem:[%s297] sm:$0xf]
      %351 = vrot.lane.b32.xlu0 %v349, 114
      %v352 = vpop.permute.xlu0 %351
      %354 = vst.msk [vmem:[#allocation2 + $0x20] sm:$0xf] %vm305, %v352
      %v355 = vld [vmem:[%s1] sm:$0xf]
      %v356 = vld [vmem:[#allocation2] sm:$0xf]
      %v357 = vld [vmem:[#allocation2 + $0x4] sm:$0xf]
      %v358 = vld [vmem:[#allocation2 + $0x8] sm:$0xf]
      %v359 = vld [vmem:[#allocation2 + $0xc] sm:$0xf]
      %v360 = vld [vmem:[#allocation2 + $0x10] sm:$0xf]
      %v361 = vld [vmem:[#allocation2 + $0x14] sm:$0xf]
      %v362 = vld [vmem:[#allocation2 + $0x18] sm:$0xf]
      %v363 = vld [vmem:[#allocation2 + $0x1c] sm:$0xf]
      %v364 = vld [vmem:[#allocation2 + $0x20] sm:$0xf]
      %v365 = vld [vmem:[%s2] sm:$0xff]
      %367 = vset.pattern.permute.xlu0 0
      %368 = vperm.xlu0 %367, %v365
      %v369 = vpop.permute.xlu0 %368
      %v380 = vunpack.c.l.b16 %v356
      %v381 = vunpack.c.l.b16 %v357
      %v382 = vunpack.c.l.b16 %v358
      %v383 = vunpack.c.l.b16 %v359
      %v384 = vunpack.c.l.b16 %v360
      %v385 = vunpack.c.l.b16 %v361
      %v386 = vunpack.c.l.b16 %v362
      %v387 = vunpack.c.l.b16 %v363
      %v388 = vunpack.c.l.b16 %v364
      %v389 = vpack.c.b16 %v381, %v380
      %v390 = vpack.c.b16 %v383, %v382
      %v391 = vpack.c.b16 %v385, %v384
      %v392 = vpack.c.b16 %v387, %v386
      %v393 = vpack.c.b16 %v388, %v388
      %vm398 = vcmask 588800
      %v400 = vsel %vm398, %v355, 0
      %vm402 = vcmask 1043456
      %v404 = vsel %vm402, %v393, 0
      %406 = vmatprep.subr.bf16.mxu0 0
      %407 = vmatpush1.bf16.msra.mxu0 %v389
      %408 = vmatprep.subr.bf16.mxu0 0
      %409 = vmatpush1.bf16.msra.mxu0 %v390
      %410 = vmatprep.subr.bf16.mxu0 0
      %411 = vmatpush1.bf16.msra.mxu0 %v391
      %412 = vmatprep.subr.bf16.mxu0 0
      %413 = vmatpush1.bf16.msra.mxu0 %v392
      %414 = vmatprep.subr.bf16.mxu0 0
      %415 = vmatpush1.bf16.msra.mxu0 %v404
      %416 = vmatprep.subr.bf16.mxu0 0
      %417 = vmatpush1.bf16.msra.mxu0 0
      %418 = vmatprep.subr.bf16.mxu0 0
      %419 = vmatpush1.bf16.msra.mxu0 0
      %420 = vmatprep.subr.bf16.mxu0 0
      %421 = vmatpush1.bf16.msra.mxu0 0
      %422 = vmatprep.subr.bf16.mxu0 0
      %423 = vmatpush1.bf16.msra.mxu0 0
      %424 = vmatprep.subr.bf16.mxu0 0
      %425 = vmatpush1.bf16.msra.mxu0 0
      %426 = vmatprep.subr.bf16.mxu0 0
      %427 = vmatpush1.bf16.msra.mxu0 0
      %428 = vmatprep.subr.bf16.mxu0 0
      %429 = vmatpush1.bf16.msra.mxu0 0
      %430 = vmatprep.subr.bf16.mxu0 0
      %431 = vmatpush1.bf16.msra.mxu0 0
      %432 = vmatprep.subr.bf16.mxu0 0
      %433 = vmatpush1.bf16.msra.mxu0 0
      %434 = vmatprep.subr.bf16.mxu0 0
      %435 = vmatpush1.bf16.msra.mxu0 0
      %436 = vmatprep.subr.bf16.mxu0 0
      %437 = vmatpush1.bf16.msra.mxu0 0
      %438 = vmatprep.mubr.bf16.mxu0 0
      %439 = vmatmul.mubr.bf16.gmra.mrb[0].mxu0 %v400
      %v440 = vpop.f32.mrb[0].mxu0
      %v441 = vadd.f32 %v369, %v440
      %v442 = vpop.f32.mrb[0].mxu0
      %v443 = vpop.f32.mrb[0].mxu0
      %v444 = vpop.f32.mrb[0].mxu0
      %445 = vdwg.mxu0
      %vm446 = vcmask 52224
      %447 = vst.msk [vmem:[#allocation3] sm:$0xf] %vm446, 0
      %vm448 = vcmask 290024
      %449 = vst.msk [vmem:[#allocation3] sm:$0xf] %vm448, 0
      %v450 = vld [vmem:[%s7] sm:$0x1]
      %v452 = vlaneseq
      %v453 = vshrl.u32 %v452, 7
      %v454 = vsub.s32 0, %v453
      %v455 = vrot.slane %v450, %v454
      %v457 = vmul.f32 %v441, %v455
      %v458 = vpack.c.bf16 %v457, %v457
      %v460 = vunpack.c.l.b16 %v458
      %v461 = vpack.c.b16 %v460, %v460
      %462 = vrot.lane.b32.xlu0 %v461, 7
      %v463 = vpop.permute.xlu0 %462
      %vm465 = vcmask 232504
      %466 = vst.msk [vmem:[#allocation3] sm:$0xf] %vm465, %v463
      %v467 = vld [vmem:[#allocation3] sm:$0xf]
      %468 = vst.msk [vmem:[#allocation4] sm:$0xf] %vm305, %v467
      %v469 = vld [vmem:[#allocation3] sm:$0xf]
      %471 = vrot.lane.b32.xlu0 %v469, 127
      %v472 = vpop.permute.xlu0 %471
      %474 = vst.msk [vmem:[#allocation4 + $0x4] sm:$0xf] %vm305, %v472
      %v475 = vld [vmem:[#allocation3] sm:$0xf]
      %477 = vrot.lane.b32.xlu0 %v475, 126
      %v478 = vpop.permute.xlu0 %477
      %480 = vst.msk [vmem:[#allocation4 + $0x8] sm:$0xf] %vm305, %v478
      %v481 = vld [vmem:[#allocation3] sm:$0xf]
      %483 = vrot.lane.b32.xlu0 %v481, 122
      %v484 = vpop.permute.xlu0 %483
      %486 = vst.msk [vmem:[#allocation4 + $0xc] sm:$0xf] %vm305, %v484
      %v487 = vld [vmem:[#allocation3] sm:$0xf]
      %489 = vrot.lane.b32.xlu0 %v487, 121
      %v490 = vpop.permute.xlu0 %489
      %492 = vst.msk [vmem:[#allocation4 + $0x10] sm:$0xf] %vm305, %v490
      %v493 = vld [vmem:[#allocation3] sm:$0xf]
      %495 = vrot.lane.b32.xlu0 %v493, 120
      %v496 = vpop.permute.xlu0 %495
      %498 = vst.msk [vmem:[#allocation4 + $0x14] sm:$0xf] %vm305, %v496
      %v499 = vld [vmem:[#allocation3] sm:$0xf]
      %501 = vrot.lane.b32.xlu0 %v499, 116
      %v502 = vpop.permute.xlu0 %501
      %504 = vst.msk [vmem:[#allocation4 + $0x18] sm:$0xf] %vm305, %v502
      %v505 = vld [vmem:[#allocation3] sm:$0xf]
      %507 = vrot.lane.b32.xlu0 %v505, 115
      %v508 = vpop.permute.xlu0 %507
      %510 = vst.msk [vmem:[#allocation4 + $0x1c] sm:$0xf] %vm305, %v508
      %v511 = vld [vmem:[#allocation3] sm:$0xf]
      %513 = vrot.lane.b32.xlu0 %v511, 114
      %v514 = vpop.permute.xlu0 %513
      %516 = vst.msk [vmem:[#allocation4 + $0x20] sm:$0xf] %vm305, %v514
      %v517 = vld [vmem:[%s3] sm:$0xf]
      %v518 = vld [vmem:[#allocation4] sm:$0xf]
      %v519 = vld [vmem:[#allocation4 + $0x4] sm:$0xf]
      %v520 = vld [vmem:[#allocation4 + $0x8] sm:$0xf]
      %v521 = vld [vmem:[#allocation4 + $0xc] sm:$0xf]
      %v522 = vld [vmem:[#allocation4 + $0x10] sm:$0xf]
      %v523 = vld [vmem:[#allocation4 + $0x14] sm:$0xf]
      %v524 = vld [vmem:[#allocation4 + $0x18] sm:$0xf]
      %v525 = vld [vmem:[#allocation4 + $0x1c] sm:$0xf]
      %v526 = vld [vmem:[#allocation4 + $0x20] sm:$0xf]
      %v527 = vld [vmem:[%s4] sm:$0xff]
      %529 = vset.pattern.permute.xlu0 0
      %530 = vperm.xlu0 %529, %v527
      %v531 = vpop.permute.xlu0 %530
      %v542 = vunpack.c.l.b16 %v518
      %v543 = vunpack.c.l.b16 %v519
      %v544 = vunpack.c.l.b16 %v520
      %v545 = vunpack.c.l.b16 %v521
      %v546 = vunpack.c.l.b16 %v522
      %v547 = vunpack.c.l.b16 %v523
      %v548 = vunpack.c.l.b16 %v524
      %v549 = vunpack.c.l.b16 %v525
      %v550 = vunpack.c.l.b16 %v526
      %v551 = vpack.c.b16 %v543, %v542
      %v552 = vpack.c.b16 %v545, %v544
      %v553 = vpack.c.b16 %v547, %v546
      %v554 = vpack.c.b16 %v549, %v548
      %v555 = vpack.c.b16 %v550, %v550
      %v561 = vsel %vm398, %v517, 0
      %v564 = vsel %vm402, %v555, 0
      %566 = vmatprep.subr.bf16.mxu0 0
      %567 = vmatpush1.bf16.msra.mxu0 %v551
      %568 = vmatprep.subr.bf16.mxu0 0
      %569 = vmatpush1.bf16.msra.mxu0 %v552
      %570 = vmatprep.subr.bf16.mxu0 0
      %571 = vmatpush1.bf16.msra.mxu0 %v553
      %572 = vmatprep.subr.bf16.mxu0 0
      %573 = vmatpush1.bf16.msra.mxu0 %v554
      %574 = vmatprep.subr.bf16.mxu0 0
      %575 = vmatpush1.bf16.msra.mxu0 %v564
      %576 = vmatprep.subr.bf16.mxu0 0
      %577 = vmatpush1.bf16.msra.mxu0 0
      %578 = vmatprep.subr.bf16.mxu0 0
      %579 = vmatpush1.bf16.msra.mxu0 0
      %580 = vmatprep.subr.bf16.mxu0 0
      %581 = vmatpush1.bf16.msra.mxu0 0
      %582 = vmatprep.subr.bf16.mxu0 0
      %583 = vmatpush1.bf16.msra.mxu0 0
      %584 = vmatprep.subr.bf16.mxu0 0
      %585 = vmatpush1.bf16.msra.mxu0 0
      %586 = vmatprep.subr.bf16.mxu0 0
      %587 = vmatpush1.bf16.msra.mxu0 0
      %588 = vmatprep.subr.bf16.mxu0 0
      %589 = vmatpush1.bf16.msra.mxu0 0
      %590 = vmatprep.subr.bf16.mxu0 0
      %591 = vmatpush1.bf16.msra.mxu0 0
      %592 = vmatprep.subr.bf16.mxu0 0
      %593 = vmatpush1.bf16.msra.mxu0 0
      %594 = vmatprep.subr.bf16.mxu0 0
      %595 = vmatpush1.bf16.msra.mxu0 0
      %596 = vmatprep.subr.bf16.mxu0 0
      %597 = vmatpush1.bf16.msra.mxu0 0
      %598 = vmatprep.mubr.bf16.mxu0 0
      %599 = vmatmul.mubr.bf16.gmra.mrb[0].mxu0 %v561
      %v600 = vpop.f32.mrb[0].mxu0
      %v601 = vadd.f32 %v531, %v600
      %v602 = vpop.f32.mrb[0].mxu0
      %v603 = vpop.f32.mrb[0].mxu0
      %v604 = vpop.f32.mrb[0].mxu0
      %605 = vdwg.mxu0
      %v606 = vpack.c.bf16 %v601, %v601
      %v607 = vld [vmem:[%s5] sm:$0x3]
      %vm608 = vcmask 31744
      %v610 = vsel %vm608, %v606, 0
      %vm612 = vcmask 1041408
      %v614 = vsel %vm612, %v607, 0
      %616 = vmatprep.subr.bf16.mxu0 0
      %617 = vmatpush1.bf16.msra.mxu0 %v614
      %618 = vmatprep.subr.bf16.mxu0 0
      %619 = vmatpush1.bf16.msra.mxu0 0
      %620 = vmatprep.subr.bf16.mxu0 0
      %621 = vmatpush1.bf16.msra.mxu0 0
      %622 = vmatprep.subr.bf16.mxu0 0
      %623 = vmatpush1.bf16.msra.mxu0 0
      %624 = vmatprep.subr.bf16.mxu0 0
      %625 = vmatpush1.bf16.msra.mxu0 0
      %626 = vmatprep.subr.bf16.mxu0 0
      %627 = vmatpush1.bf16.msra.mxu0 0
      %628 = vmatprep.subr.bf16.mxu0 0
      %629 = vmatpush1.bf16.msra.mxu0 0
      %630 = vmatprep.subr.bf16.mxu0 0
      %631 = vmatpush1.bf16.msra.mxu0 0
      %632 = vmatprep.subr.bf16.mxu0 0
      %633 = vmatpush1.bf16.msra.mxu0 0
      %634 = vmatprep.subr.bf16.mxu0 0
      %635 = vmatpush1.bf16.msra.mxu0 0
      %636 = vmatprep.subr.bf16.mxu0 0
      %637 = vmatpush1.bf16.msra.mxu0 0
      %638 = vmatprep.subr.bf16.mxu0 0
      %639 = vmatpush1.bf16.msra.mxu0 0
      %640 = vmatprep.subr.bf16.mxu0 0
      %641 = vmatpush1.bf16.msra.mxu0 0
      %642 = vmatprep.subr.bf16.mxu0 0
      %643 = vmatpush1.bf16.msra.mxu0 0
      %644 = vmatprep.subr.bf16.mxu0 0
      %645 = vmatpush1.bf16.msra.mxu0 0
      %646 = vmatprep.subr.bf16.mxu0 0
      %647 = vmatpush1.bf16.msra.mxu0 0
      %648 = vmatprep.mubr.bf16.mxu0 0
      %649 = vmatmul.mubr.bf16.gmra.mrb[0].mxu0 %v610
      %v650 = vpop.f32.mrb[0].mxu0
      %v651 = vadd.f32 0.0, %v650
      %v652 = vpop.f32.mrb[0].mxu0
      %v653 = vpop.f32.mrb[0].mxu0
      %v654 = vpop.f32.mrb[0].mxu0
      %655 = vdwg.mxu0
      %v656 = vpack.c.bf16 %v651, %v651
      %v659 = vunpack.c.l.s4 1966171168
      %v660 = vunpack.c.0.s8 %v659
      %v661 = vlaneseq
      %v662 = vshrl.u32 %v661, 7
      %v663 = vsub.s32 %v660, %v662
      %v664 = vrot.slane %v656, %v663
      %v665 = vcombine.high %v664, %v664
      %v667 = vunpack.c.l.s4 1966171168
      %v668 = vunpack.c.0.s8 %v667
      %v669 = vlaneseq
      %v670 = vshrl.u32 %v669, 7
      %v671 = vsub.s32 %v668, %v670
      %v672 = vrot.slane %v664, %v671
      %v674 = vunpack.c.l.s4 1966171168
      %v675 = vunpack.c.0.s8 %v674
      %v676 = vlaneseq
      %v677 = vshrl.u32 %v676, 7
      %v678 = vsub.s32 %v675, %v677
      %v679 = vrot.slane %v665, %v678
      %v680 = vcombine.high %v672, %v672
      %v681 = vcombine.high %v679, %v679
      %v682 = vunpack.i.l.s16 %v672
      %v683 = vunpack.i.h.s16 %v672
      %v684 = vunpack.i.l.s16 %v679
      %v685 = vunpack.i.h.s16 %v679
      %v686 = vunpack.i.l.s16 %v680
      %v687 = vunpack.i.h.s16 %v680
      %v688 = vunpack.i.l.s16 %v681
      %v689 = vunpack.i.h.s16 %v681
      %v690 = vpack.i.b16 %v682, %v682
      %v691 = vpack.i.b16 %v683, %v683
      %v692 = vpack.i.b16 %v684, %v684
      %v693 = vpack.i.b16 %v685, %v685
      %v694 = vpack.i.b16 %v686, %v686
      %v695 = vpack.i.b16 %v687, %v687
      %v696 = vpack.i.b16 %v688, %v688
      %v697 = vpack.i.b16 %v689, %v689
      %v699 = vunpack.c.l.s4 857870592
      %v700 = vunpack.c.0.s8 %v699
      %v701 = vlaneseq
      %v702 = vshrl.u32 %v701, 7
      %v703 = vsub.s32 %v700, %v702
      %v704 = vrot.slane %v690, %v703
      %v706 = vunpack.c.l.s4 857870592
      %v707 = vunpack.c.0.s8 %v706
      %v708 = vlaneseq
      %v709 = vshrl.u32 %v708, 7
      %v710 = vsub.s32 %v707, %v709
      %v711 = vrot.slane %v691, %v710
      %v713 = vunpack.c.l.s4 857870592
      %v714 = vunpack.c.0.s8 %v713
      %v715 = vlaneseq
      %v716 = vshrl.u32 %v715, 7
      %v717 = vsub.s32 %v714, %v716
      %v718 = vrot.slane %v692, %v717
      %v720 = vunpack.c.l.s4 857870592
      %v721 = vunpack.c.0.s8 %v720
      %v722 = vlaneseq
      %v723 = vshrl.u32 %v722, 7
      %v724 = vsub.s32 %v721, %v723
      %v725 = vrot.slane %v693, %v724
      %v727 = vunpack.c.l.s4 857870592
      %v728 = vunpack.c.0.s8 %v727
      %v729 = vlaneseq
      %v730 = vshrl.u32 %v729, 7
      %v731 = vsub.s32 %v728, %v730
      %v732 = vrot.slane %v694, %v731
      %v734 = vunpack.c.l.s4 857870592
      %v735 = vunpack.c.0.s8 %v734
      %v736 = vlaneseq
      %v737 = vshrl.u32 %v736, 7
      %v738 = vsub.s32 %v735, %v737
      %v739 = vrot.slane %v695, %v738
      %v741 = vunpack.c.l.s4 857870592
      %v742 = vunpack.c.0.s8 %v741
      %v743 = vlaneseq
      %v744 = vshrl.u32 %v743, 7
      %v745 = vsub.s32 %v742, %v744
      %v746 = vrot.slane %v696, %v745
      %v748 = vunpack.c.l.s4 857870592
      %v749 = vunpack.c.0.s8 %v748
      %v750 = vlaneseq
      %v751 = vshrl.u32 %v750, 7
      %v752 = vsub.s32 %v749, %v751
      %v753 = vrot.slane %v697, %v752
      %vm762 = vcmask 122880
      %vm763 = vsmask.f32 256
      %vm764 = vmand %vm762, %vm763
      %v765 = vld [vmem:[#allocation5] sm:$0x1]
      %v766 = vsel %vm764, %v704, %v765
      %767 = vst [vmem:[#allocation5] sm:$0x1] %v766
      %v768 = vld [vmem:[#allocation5 + $0x2] sm:$0x1]
      %v769 = vsel %vm764, %v711, %v768
      %770 = vst [vmem:[#allocation5 + $0x2] sm:$0x1] %v769
      %v771 = vld [vmem:[#allocation5 + $0x4] sm:$0x1]
      %v772 = vsel %vm764, %v718, %v771
      %773 = vst [vmem:[#allocation5 + $0x4] sm:$0x1] %v772
      %v774 = vld [vmem:[#allocation5 + $0x6] sm:$0x1]
      %v775 = vsel %vm764, %v725, %v774
      %776 = vst [vmem:[#allocation5 + $0x6] sm:$0x1] %v775
      %v777 = vld [vmem:[#allocation5 + $0x8] sm:$0x1]
      %v778 = vsel %vm764, %v732, %v777
      %779 = vst [vmem:[#allocation5 + $0x8] sm:$0x1] %v778
      %v780 = vld [vmem:[#allocation5 + $0xa] sm:$0x1]
      %v781 = vsel %vm764, %v739, %v780
      %782 = vst [vmem:[#allocation5 + $0xa] sm:$0x1] %v781
      %v783 = vld [vmem:[#allocation5 + $0xc] sm:$0x1]
      %v784 = vsel %vm764, %v746, %v783
      %785 = vst [vmem:[#allocation5 + $0xc] sm:$0x1] %v784
      %v786 = vld [vmem:[#allocation5 + $0xe] sm:$0x1]
      %v787 = vsel %vm764, %v753, %v786
      %788 = vst [vmem:[#allocation5 + $0xe] sm:$0x1] %v787
      %790 = vrot.lane.b32.xlu0 %v606, 122
      %v791 = vpop.permute.xlu0 %790
      %v793 = vsel %vm608, %v791, 0
      %795 = vmatprep.subr.bf16.mxu0 0
      %796 = vmatpush1.bf16.msra.mxu0 %v614
      %797 = vmatprep.subr.bf16.mxu0 0
      %798 = vmatpush1.bf16.msra.mxu0 0
      %799 = vmatprep.subr.bf16.mxu0 0
      %800 = vmatpush1.bf16.msra.mxu0 0
      %801 = vmatprep.subr.bf16.mxu0 0
      %802 = vmatpush1.bf16.msra.mxu0 0
      %803 = vmatprep.subr.bf16.mxu0 0
      %804 = vmatpush1.bf16.msra.mxu0 0
      %805 = vmatprep.subr.bf16.mxu0 0
      %806 = vmatpush1.bf16.msra.mxu0 0
      %807 = vmatprep.subr.bf16.mxu0 0
      %808 = vmatpush1.bf16.msra.mxu0 0
      %809 = vmatprep.subr.bf16.mxu0 0
      %810 = vmatpush1.bf16.msra.mxu0 0
      %811 = vmatprep.subr.bf16.mxu0 0
      %812 = vmatpush1.bf16.msra.mxu0 0
      %813 = vmatprep.subr.bf16.mxu0 0
      %814 = vmatpush1.bf16.msra.mxu0 0
      %815 = vmatprep.subr.bf16.mxu0 0
      %816 = vmatpush1.bf16.msra.mxu0 0
      %817 = vmatprep.subr.bf16.mxu0 0
      %818 = vmatpush1.bf16.msra.mxu0 0
      %819 = vmatprep.subr.bf16.mxu0 0
      %820 = vmatpush1.bf16.msra.mxu0 0
      %821 = vmatprep.subr.bf16.mxu0 0
      %822 = vmatpush1.bf16.msra.mxu0 0
      %823 = vmatprep.subr.bf16.mxu0 0
      %824 = vmatpush1.bf16.msra.mxu0 0
      %825 = vmatprep.subr.bf16.mxu0 0
      %826 = vmatpush1.bf16.msra.mxu0 0
      %827 = vmatprep.mubr.bf16.mxu0 0
      %828 = vmatmul.mubr.bf16.gmra.mrb[0].mxu0 %v793
      %v829 = vpop.f32.mrb[0].mxu0
      %v830 = vadd.f32 0.0, %v829
      %v831 = vpop.f32.mrb[0].mxu0
      %v832 = vpop.f32.mrb[0].mxu0
      %v833 = vpop.f32.mrb[0].mxu0
      %834 = vdwg.mxu0
      %v835 = vpack.c.bf16 %v830, %v830
      %v838 = vunpack.c.l.s4 1966171168
      %v839 = vunpack.c.0.s8 %v838
      %v840 = vlaneseq
      %v841 = vshrl.u32 %v840, 7
      %v842 = vsub.s32 %v839, %v841
      %v843 = vrot.slane %v835, %v842
      %v844 = vcombine.high %v843, %v843
      %v846 = vunpack.c.l.s4 1966171168
      %v847 = vunpack.c.0.s8 %v846
      %v848 = vlaneseq
      %v849 = vshrl.u32 %v848, 7
      %v850 = vsub.s32 %v847, %v849
      %v851 = vrot.slane %v843, %v850
      %v853 = vunpack.c.l.s4 1966171168
      %v854 = vunpack.c.0.s8 %v853
      %v855 = vlaneseq
      %v856 = vshrl.u32 %v855, 7
      %v857 = vsub.s32 %v854, %v856
      %v858 = vrot.slane %v844, %v857
      %v859 = vcombine.high %v851, %v851
      %v860 = vcombine.high %v858, %v858
      %v861 = vunpack.i.l.s16 %v851
      %v862 = vunpack.i.h.s16 %v851
      %v863 = vunpack.i.l.s16 %v858
      %v864 = vunpack.i.h.s16 %v858
      %v865 = vunpack.i.l.s16 %v859
      %v866 = vunpack.i.h.s16 %v859
      %v867 = vunpack.i.l.s16 %v860
      %v868 = vunpack.i.h.s16 %v860
      %v869 = vpack.i.b16 %v861, %v861
      %v870 = vpack.i.b16 %v862, %v862
      %v871 = vpack.i.b16 %v863, %v863
      %v872 = vpack.i.b16 %v864, %v864
      %v873 = vpack.i.b16 %v865, %v865
      %v874 = vpack.i.b16 %v866, %v866
      %v875 = vpack.i.b16 %v867, %v867
      %v876 = vpack.i.b16 %v868, %v868
      %v878 = vunpack.c.l.s4 857870592
      %v879 = vunpack.c.0.s8 %v878
      %v880 = vlaneseq
      %v881 = vshrl.u32 %v880, 7
      %v882 = vsub.s32 %v879, %v881
      %v883 = vrot.slane %v869, %v882
      %v885 = vunpack.c.l.s4 857870592
      %v886 = vunpack.c.0.s8 %v885
      %v887 = vlaneseq
      %v888 = vshrl.u32 %v887, 7
      %v889 = vsub.s32 %v886, %v888
      %v890 = vrot.slane %v870, %v889
      %v892 = vunpack.c.l.s4 857870592
      %v893 = vunpack.c.0.s8 %v892
      %v894 = vlaneseq
      %v895 = vshrl.u32 %v894, 7
      %v896 = vsub.s32 %v893, %v895
      %v897 = vrot.slane %v871, %v896
      %v899 = vunpack.c.l.s4 857870592
      %v900 = vunpack.c.0.s8 %v899
      %v901 = vlaneseq
      %v902 = vshrl.u32 %v901, 7
      %v903 = vsub.s32 %v900, %v902
      %v904 = vrot.slane %v872, %v903
      %v906 = vunpack.c.l.s4 857870592
      %v907 = vunpack.c.0.s8 %v906
      %v908 = vlaneseq
      %v909 = vshrl.u32 %v908, 7
      %v910 = vsub.s32 %v907, %v909
      %v911 = vrot.slane %v873, %v910
      %v913 = vunpack.c.l.s4 857870592
      %v914 = vunpack.c.0.s8 %v913
      %v915 = vlaneseq
      %v916 = vshrl.u32 %v915, 7
      %v917 = vsub.s32 %v914, %v916
      %v918 = vrot.slane %v874, %v917
      %v920 = vunpack.c.l.s4 857870592
      %v921 = vunpack.c.0.s8 %v920
      %v922 = vlaneseq
      %v923 = vshrl.u32 %v922, 7
      %v924 = vsub.s32 %v921, %v923
      %v925 = vrot.slane %v875, %v924
      %v927 = vunpack.c.l.s4 857870592
      %v928 = vunpack.c.0.s8 %v927
      %v929 = vlaneseq
      %v930 = vshrl.u32 %v929, 7
      %v931 = vsub.s32 %v928, %v930
      %v932 = vrot.slane %v876, %v931
      %vm941 = vsmask.f32 7938
      %vm942 = vmand %vm762, %vm941
      %v943 = vld [vmem:[#allocation5] sm:$0x1]
      %v944 = vsel %vm942, %v883, %v943
      %945 = vst [vmem:[#allocation5] sm:$0x1] %v944
      %v946 = vld [vmem:[#allocation5 + $0x2] sm:$0x1]
      %v947 = vsel %vm942, %v890, %v946
      %948 = vst [vmem:[#allocation5 + $0x2] sm:$0x1] %v947
      %v949 = vld [vmem:[#allocation5 + $0x4] sm:$0x1]
      %v950 = vsel %vm942, %v897, %v949
      %951 = vst [vmem:[#allocation5 + $0x4] sm:$0x1] %v950
      %v952 = vld [vmem:[#allocation5 + $0x6] sm:$0x1]
      %v953 = vsel %vm942, %v904, %v952
      %954 = vst [vmem:[#allocation5 + $0x6] sm:$0x1] %v953
      %v955 = vld [vmem:[#allocation5 + $0x8] sm:$0x1]
      %v956 = vsel %vm942, %v911, %v955
      %957 = vst [vmem:[#allocation5 + $0x8] sm:$0x1] %v956
      %v958 = vld [vmem:[#allocation5 + $0xa] sm:$0x1]
      %v959 = vsel %vm942, %v918, %v958
      %960 = vst [vmem:[#allocation5 + $0xa] sm:$0x1] %v959
      %v961 = vld [vmem:[#allocation5 + $0xc] sm:$0x1]
      %v962 = vsel %vm942, %v925, %v961
      %963 = vst [vmem:[#allocation5 + $0xc] sm:$0x1] %v962
      %v964 = vld [vmem:[#allocation5 + $0xe] sm:$0x1]
      %v965 = vsel %vm942, %v932, %v964
      %966 = vst [vmem:[#allocation5 + $0xe] sm:$0x1] %v965
      %967 = vrot.lane.b32.xlu0 %v606, 116
      %v968 = vpop.permute.xlu0 %967
      %v970 = vsel %vm608, %v968, 0
      %972 = vmatprep.subr.bf16.mxu0 0
      %973 = vmatpush1.bf16.msra.mxu0 %v614
      %974 = vmatprep.subr.bf16.mxu0 0
      %975 = vmatpush1.bf16.msra.mxu0 0
      %976 = vmatprep.subr.bf16.mxu0 0
      %977 = vmatpush1.bf16.msra.mxu0 0
      %978 = vmatprep.subr.bf16.mxu0 0
      %979 = vmatpush1.bf16.msra.mxu0 0
      %980 = vmatprep.subr.bf16.mxu0 0
      %981 = vmatpush1.bf16.msra.mxu0 0
      %982 = vmatprep.subr.bf16.mxu0 0
      %983 = vmatpush1.bf16.msra.mxu0 0
      %984 = vmatprep.subr.bf16.mxu0 0
      %985 = vmatpush1.bf16.msra.mxu0 0
      %986 = vmatprep.subr.bf16.mxu0 0
      %987 = vmatpush1.bf16.msra.mxu0 0
      %988 = vmatprep.subr.bf16.mxu0 0
      %989 = vmatpush1.bf16.msra.mxu0 0
      %990 = vmatprep.subr.bf16.mxu0 0
      %991 = vmatpush1.bf16.msra.mxu0 0
      %992 = vmatprep.subr.bf16.mxu0 0
      %993 = vmatpush1.bf16.msra.mxu0 0
      %994 = vmatprep.subr.bf16.mxu0 0
      %995 = vmatpush1.bf16.msra.mxu0 0
      %996 = vmatprep.subr.bf16.mxu0 0
      %997 = vmatpush1.bf16.msra.mxu0 0
      %998 = vmatprep.subr.bf16.mxu0 0
      %999 = vmatpush1.bf16.msra.mxu0 0
      %1000 = vmatprep.subr.bf16.mxu0 0
      %1001 = vmatpush1.bf16.msra.mxu0 0
      %1002 = vmatprep.subr.bf16.mxu0 0
      %1003 = vmatpush1.bf16.msra.mxu0 0
      %1004 = vmatprep.mubr.bf16.mxu0 0
      %1005 = vmatmul.mubr.bf16.gmra.mrb[0].mxu0 %v970
      %v1006 = vpop.f32.mrb[0].mxu0
      %v1007 = vadd.f32 0.0, %v1006
      %v1008 = vpop.f32.mrb[0].mxu0
      %v1009 = vpop.f32.mrb[0].mxu0
      %v1010 = vpop.f32.mrb[0].mxu0
      %1011 = vdwg.mxu0
      %v1012 = vpack.c.bf16 %v1007, %v1007
      %v1015 = vunpack.c.l.s4 1966171168
      %v1016 = vunpack.c.0.s8 %v1015
      %v1017 = vlaneseq
      %v1018 = vshrl.u32 %v1017, 7
      %v1019 = vsub.s32 %v1016, %v1018
      %v1020 = vrot.slane %v1012, %v1019
      %v1021 = vcombine.high %v1020, %v1020
      %v1023 = vunpack.c.l.s4 1966171168
      %v1024 = vunpack.c.0.s8 %v1023
      %v1025 = vlaneseq
      %v1026 = vshrl.u32 %v1025, 7
      %v1027 = vsub.s32 %v1024, %v1026
      %v1028 = vrot.slane %v1020, %v1027
      %v1030 = vunpack.c.l.s4 1966171168
      %v1031 = vunpack.c.0.s8 %v1030
      %v1032 = vlaneseq
      %v1033 = vshrl.u32 %v1032, 7
      %v1034 = vsub.s32 %v1031, %v1033
      %v1035 = vrot.slane %v1021, %v1034
      %v1036 = vcombine.high %v1028, %v1028
      %v1037 = vcombine.high %v1035, %v1035
      %v1038 = vunpack.i.l.s16 %v1028
      %v1039 = vunpack.i.h.s16 %v1028
      %v1040 = vunpack.i.l.s16 %v1035
      %v1041 = vunpack.i.h.s16 %v1035
      %v1042 = vunpack.i.l.s16 %v1036
      %v1043 = vunpack.i.h.s16 %v1036
      %v1044 = vunpack.i.l.s16 %v1037
      %v1045 = vunpack.i.h.s16 %v1037
      %v1046 = vpack.i.b16 %v1038, %v1038
      %v1047 = vpack.i.b16 %v1039, %v1039
      %v1048 = vpack.i.b16 %v1040, %v1040
      %v1049 = vpack.i.b16 %v1041, %v1041
      %v1050 = vpack.i.b16 %v1042, %v1042
      %v1051 = vpack.i.b16 %v1043, %v1043
      %v1052 = vpack.i.b16 %v1044, %v1044
      %v1053 = vpack.i.b16 %v1045, %v1045
      %v1055 = vunpack.c.l.s4 857870592
      %v1056 = vunpack.c.0.s8 %v1055
      %v1057 = vlaneseq
      %v1058 = vshrl.u32 %v1057, 7
      %v1059 = vsub.s32 %v1056, %v1058
      %v1060 = vrot.slane %v1046, %v1059
      %v1062 = vunpack.c.l.s4 857870592
      %v1063 = vunpack.c.0.s8 %v1062
      %v1064 = vlaneseq
      %v1065 = vshrl.u32 %v1064, 7
      %v1066 = vsub.s32 %v1063, %v1065
      %v1067 = vrot.slane %v1047, %v1066
      %v1069 = vunpack.c.l.s4 857870592
      %v1070 = vunpack.c.0.s8 %v1069
      %v1071 = vlaneseq
      %v1072 = vshrl.u32 %v1071, 7
      %v1073 = vsub.s32 %v1070, %v1072
      %v1074 = vrot.slane %v1048, %v1073
      %v1076 = vunpack.c.l.s4 857870592
      %v1077 = vunpack.c.0.s8 %v1076
      %v1078 = vlaneseq
      %v1079 = vshrl.u32 %v1078, 7
      %v1080 = vsub.s32 %v1077, %v1079
      %v1081 = vrot.slane %v1049, %v1080
      %v1083 = vunpack.c.l.s4 857870592
      %v1084 = vunpack.c.0.s8 %v1083
      %v1085 = vlaneseq
      %v1086 = vshrl.u32 %v1085, 7
      %v1087 = vsub.s32 %v1084, %v1086
      %v1088 = vrot.slane %v1050, %v1087
      %v1090 = vunpack.c.l.s4 857870592
      %v1091 = vunpack.c.0.s8 %v1090
      %v1092 = vlaneseq
      %v1093 = vshrl.u32 %v1092, 7
      %v1094 = vsub.s32 %v1091, %v1093
      %v1095 = vrot.slane %v1051, %v1094
      %v1097 = vunpack.c.l.s4 857870592
      %v1098 = vunpack.c.0.s8 %v1097
      %v1099 = vlaneseq
      %v1100 = vshrl.u32 %v1099, 7
      %v1101 = vsub.s32 %v1098, %v1100
      %v1102 = vrot.slane %v1052, %v1101
      %v1104 = vunpack.c.l.s4 857870592
      %v1105 = vunpack.c.0.s8 %v1104
      %v1106 = vlaneseq
      %v1107 = vshrl.u32 %v1106, 7
      %v1108 = vsub.s32 %v1105, %v1107
      %v1109 = vrot.slane %v1053, %v1108
      %vm1118 = vcmask 123905
      %vm1119 = vsmask.f32 1280
      %vm1120 = vmand %vm1118, %vm1119
      %v1121 = vld [vmem:[#allocation5] sm:$0x2]
      %v1122 = vsel %vm1120, %v1060, %v1121
      %1123 = vst [vmem:[#allocation5] sm:$0x2] %v1122
      %v1124 = vld [vmem:[#allocation5 + $0x2] sm:$0x2]
      %v1125 = vsel %vm1120, %v1067, %v1124
      %1126 = vst [vmem:[#allocation5 + $0x2] sm:$0x2] %v1125
      %v1127 = vld [vmem:[#allocation5 + $0x4] sm:$0x2]
      %v1128 = vsel %vm1120, %v1074, %v1127
      %1129 = vst [vmem:[#allocation5 + $0x4] sm:$0x2] %v1128
      %v1130 = vld [vmem:[#allocation5 + $0x6] sm:$0x2]
      %v1131 = vsel %vm1120, %v1081, %v1130
      %1132 = vst [vmem:[#allocation5 + $0x6] sm:$0x2] %v1131
      %v1133 = vld [vmem:[#allocation5 + $0x8] sm:$0x2]
      %v1134 = vsel %vm1120, %v1088, %v1133
      %1135 = vst [vmem:[#allocation5 + $0x8] sm:$0x2] %v1134
      %v1136 = vld [vmem:[#allocation5 + $0xa] sm:$0x2]
      %v1137 = vsel %vm1120, %v1095, %v1136
      %1138 = vst [vmem:[#allocation5 + $0xa] sm:$0x2] %v1137
      %v1139 = vld [vmem:[#allocation5 + $0xc] sm:$0x2]
      %v1140 = vsel %vm1120, %v1102, %v1139
      %1141 = vst [vmem:[#allocation5 + $0xc] sm:$0x2] %v1140
      %v1142 = vld [vmem:[#allocation5 + $0xe] sm:$0x2]
      %v1143 = vsel %vm1120, %v1109, %v1142
      %1144 = vst [vmem:[#allocation5 + $0xe] sm:$0x2] %v1143
      %1145 = vrot.lane.b32.xlu0 %v606, 110
      %v1146 = vpop.permute.xlu0 %1145
      %v1148 = vsel %vm608, %v1146, 0
      %1150 = vmatprep.subr.bf16.mxu0 0
      %1151 = vmatpush1.bf16.msra.mxu0 %v614
      %1152 = vmatprep.subr.bf16.mxu0 0
      %1153 = vmatpush1.bf16.msra.mxu0 0
      %1154 = vmatprep.subr.bf16.mxu0 0
      %1155 = vmatpush1.bf16.msra.mxu0 0
      %1156 = vmatprep.subr.bf16.mxu0 0
      %1157 = vmatpush1.bf16.msra.mxu0 0
      %1158 = vmatprep.subr.bf16.mxu0 0
      %1159 = vmatpush1.bf16.msra.mxu0 0
      %1160 = vmatprep.subr.bf16.mxu0 0
      %1161 = vmatpush1.bf16.msra.mxu0 0
      %1162 = vmatprep.subr.bf16.mxu0 0
      %1163 = vmatpush1.bf16.msra.mxu0 0
      %1164 = vmatprep.subr.bf16.mxu0 0
      %1165 = vmatpush1.bf16.msra.mxu0 0
      %1166 = vmatprep.subr.bf16.mxu0 0
      %1167 = vmatpush1.bf16.msra.mxu0 0
      %1168 = vmatprep.subr.bf16.mxu0 0
      %1169 = vmatpush1.bf16.msra.mxu0 0
      %1170 = vmatprep.subr.bf16.mxu0 0
      %1171 = vmatpush1.bf16.msra.mxu0 0
      %1172 = vmatprep.subr.bf16.mxu0 0
      %1173 = vmatpush1.bf16.msra.mxu0 0
      %1174 = vmatprep.subr.bf16.mxu0 0
      %1175 = vmatpush1.bf16.msra.mxu0 0
      %1176 = vmatprep.subr.bf16.mxu0 0
      %1177 = vmatpush1.bf16.msra.mxu0 0
      %1178 = vmatprep.subr.bf16.mxu0 0
      %1179 = vmatpush1.bf16.msra.mxu0 0
      %1180 = vmatprep.subr.bf16.mxu0 0
      %1181 = vmatpush1.bf16.msra.mxu0 0
      %1182 = vmatprep.mubr.bf16.mxu0 0
      %1183 = vmatmul.mubr.bf16.gmra.mrb[0].mxu0 %v1148
      %v1184 = vpop.f32.mrb[0].mxu0
      %v1185 = vadd.f32 0.0, %v1184
      %v1186 = vpop.f32.mrb[0].mxu0
      %v1187 = vpop.f32.mrb[0].mxu0
      %v1188 = vpop.f32.mrb[0].mxu0
      %1189 = vdwg.mxu0
      %v1190 = vpack.c.bf16 %v1185, %v1185
      %v1193 = vunpack.c.l.s4 1966171168
      %v1194 = vunpack.c.0.s8 %v1193
      %v1195 = vlaneseq
      %v1196 = vshrl.u32 %v1195, 7
      %v1197 = vsub.s32 %v1194, %v1196
      %v1198 = vrot.slane %v1190, %v1197
      %v1199 = vcombine.high %v1198, %v1198
      %v1201 = vunpack.c.l.s4 1966171168
      %v1202 = vunpack.c.0.s8 %v1201
      %v1203 = vlaneseq
      %v1204 = vshrl.u32 %v1203, 7
      %v1205 = vsub.s32 %v1202, %v1204
      %v1206 = vrot.slane %v1198, %v1205
      %v1208 = vunpack.c.l.s4 1966171168
      %v1209 = vunpack.c.0.s8 %v1208
      %v1210 = vlaneseq
      %v1211 = vshrl.u32 %v1210, 7
      %v1212 = vsub.s32 %v1209, %v1211
      %v1213 = vrot.slane %v1199, %v1212
      %v1214 = vcombine.high %v1206, %v1206
      %v1215 = vcombine.high %v1213, %v1213
      %v1216 = vunpack.i.l.s16 %v1206
      %v1217 = vunpack.i.h.s16 %v1206
      %v1218 = vunpack.i.l.s16 %v1213
      %v1219 = vunpack.i.h.s16 %v1213
      %v1220 = vunpack.i.l.s16 %v1214
      %v1221 = vunpack.i.h.s16 %v1214
      %v1222 = vunpack.i.l.s16 %v1215
      %v1223 = vunpack.i.h.s16 %v1215
      %v1224 = vpack.i.b16 %v1216, %v1216
      %v1225 = vpack.i.b16 %v1217, %v1217
      %v1226 = vpack.i.b16 %v1218, %v1218
      %v1227 = vpack.i.b16 %v1219, %v1219
      %v1228 = vpack.i.b16 %v1220, %v1220
      %v1229 = vpack.i.b16 %v1221, %v1221
      %v1230 = vpack.i.b16 %v1222, %v1222
      %v1231 = vpack.i.b16 %v1223, %v1223
      %v1233 = vunpack.c.l.s4 857870592
      %v1234 = vunpack.c.0.s8 %v1233
      %v1235 = vlaneseq
      %v1236 = vshrl.u32 %v1235, 7
      %v1237 = vsub.s32 %v1234, %v1236
      %v1238 = vrot.slane %v1224, %v1237
      %v1240 = vunpack.c.l.s4 857870592
      %v1241 = vunpack.c.0.s8 %v1240
      %v1242 = vlaneseq
      %v1243 = vshrl.u32 %v1242, 7
      %v1244 = vsub.s32 %v1241, %v1243
      %v1245 = vrot.slane %v1225, %v1244
      %v1247 = vunpack.c.l.s4 857870592
      %v1248 = vunpack.c.0.s8 %v1247
      %v1249 = vlaneseq
      %v1250 = vshrl.u32 %v1249, 7
      %v1251 = vsub.s32 %v1248, %v1250
      %v1252 = vrot.slane %v1226, %v1251
      %v1254 = vunpack.c.l.s4 857870592
      %v1255 = vunpack.c.0.s8 %v1254
      %v1256 = vlaneseq
      %v1257 = vshrl.u32 %v1256, 7
      %v1258 = vsub.s32 %v1255, %v1257
      %v1259 = vrot.slane %v1227, %v1258
      %v1261 = vunpack.c.l.s4 857870592
      %v1262 = vunpack.c.0.s8 %v1261
      %v1263 = vlaneseq
      %v1264 = vshrl.u32 %v1263, 7
      %v1265 = vsub.s32 %v1262, %v1264
      %v1266 = vrot.slane %v1228, %v1265
      %v1268 = vunpack.c.l.s4 857870592
      %v1269 = vunpack.c.0.s8 %v1268
      %v1270 = vlaneseq
      %v1271 = vshrl.u32 %v1270, 7
      %v1272 = vsub.s32 %v1269, %v1271
      %v1273 = vrot.slane %v1229, %v1272
      %v1275 = vunpack.c.l.s4 857870592
      %v1276 = vunpack.c.0.s8 %v1275
      %v1277 = vlaneseq
      %v1278 = vshrl.u32 %v1277, 7
      %v1279 = vsub.s32 %v1276, %v1278
      %v1280 = vrot.slane %v1230, %v1279
      %v1282 = vunpack.c.l.s4 857870592
      %v1283 = vunpack.c.0.s8 %v1282
      %v1284 = vlaneseq
      %v1285 = vshrl.u32 %v1284, 7
      %v1286 = vsub.s32 %v1283, %v1285
      %v1287 = vrot.slane %v1231, %v1286
      %vm1296 = vsmask.f32 7942
      %vm1297 = vmand %vm1118, %vm1296
      %v1298 = vld [vmem:[#allocation5] sm:$0x2]
      %v1299 = vsel %vm1297, %v1238, %v1298
      %1300 = vst [vmem:[#allocation5] sm:$0x2] %v1299
      %v1301 = vld [vmem:[#allocation5 + $0x2] sm:$0x2]
      %v1302 = vsel %vm1297, %v1245, %v1301
      %1303 = vst [vmem:[#allocation5 + $0x2] sm:$0x2] %v1302
      %v1304 = vld [vmem:[#allocation5 + $0x4] sm:$0x2]
      %v1305 = vsel %vm1297, %v1252, %v1304
      %1306 = vst [vmem:[#allocation5 + $0x4] sm:$0x2] %v1305
      %v1307 = vld [vmem:[#allocation5 + $0x6] sm:$0x2]
      %v1308 = vsel %vm1297, %v1259, %v1307
      %1309 = vst [vmem:[#allocation5 + $0x6] sm:$0x2] %v1308
      %v1310 = vld [vmem:[#allocation5 + $0x8] sm:$0x2]
      %v1311 = vsel %vm1297, %v1266, %v1310
      %1312 = vst [vmem:[#allocation5 + $0x8] sm:$0x2] %v1311
      %v1313 = vld [vmem:[#allocation5 + $0xa] sm:$0x2]
      %v1314 = vsel %vm1297, %v1273, %v1313
      %1315 = vst [vmem:[#allocation5 + $0xa] sm:$0x2] %v1314
      %v1316 = vld [vmem:[#allocation5 + $0xc] sm:$0x2]
      %v1317 = vsel %vm1297, %v1280, %v1316
      %1318 = vst [vmem:[#allocation5 + $0xc] sm:$0x2] %v1317
      %v1319 = vld [vmem:[#allocation5 + $0xe] sm:$0x2]
      %v1320 = vsel %vm1297, %v1287, %v1319
      %1321 = vst [vmem:[#allocation5 + $0xe] sm:$0x2] %v1320
      %v1322 = vld [vmem:[%s6] sm:$0xf]
      %v1323 = vld [vmem:[%s6 + $0x4] sm:$0xf]
      %v1324 = vld [vmem:[#allocation5] sm:$0x3]
      %v1327 = vunpack.c.l.b16 %v1322
      %v1328 = vunpack.c.l.b16 %v1323
      %v1329 = vpack.c.b16 %v1328, %v1327
      %v1331 = vsel %vm608, %v1329, 0
      %v1334 = vsel %vm612, %v1324, 0
      %1336 = vmatprep.subr.bf16.mxu0 0
      %1337 = vmatpush1.bf16.msra.mxu0 %v1334
      %1338 = vmatprep.subr.bf16.mxu0 0
      %1339 = vmatpush1.bf16.msra.mxu0 0
      %1340 = vmatprep.subr.bf16.mxu0 0
      %1341 = vmatpush1.bf16.msra.mxu0 0
      %1342 = vmatprep.subr.bf16.mxu0 0
      %1343 = vmatpush1.bf16.msra.mxu0 0
      %1344 = vmatprep.subr.bf16.mxu0 0
      %1345 = vmatpush1.bf16.msra.mxu0 0
      %1346 = vmatprep.subr.bf16.mxu0 0
      %1347 = vmatpush1.bf16.msra.mxu0 0
      %1348 = vmatprep.subr.bf16.mxu0 0
      %1349 = vmatpush1.bf16.msra.mxu0 0
      %1350 = vmatprep.subr.bf16.mxu0 0
      %1351 = vmatpush1.bf16.msra.mxu0 0
      %1352 = vmatprep.subr.bf16.mxu0 0
      %1353 = vmatpush1.bf16.msra.mxu0 0
      %1354 = vmatprep.subr.bf16.mxu0 0
      %1355 = vmatpush1.bf16.msra.mxu0 0
      %1356 = vmatprep.subr.bf16.mxu0 0
      %1357 = vmatpush1.bf16.msra.mxu0 0
      %1358 = vmatprep.subr.bf16.mxu0 0
      %1359 = vmatpush1.bf16.msra.mxu0 0
      %1360 = vmatprep.subr.bf16.mxu0 0
      %1361 = vmatpush1.bf16.msra.mxu0 0
      %1362 = vmatprep.subr.bf16.mxu0 0
      %1363 = vmatpush1.bf16.msra.mxu0 0
      %1364 = vmatprep.subr.bf16.mxu0 0
      %1365 = vmatpush1.bf16.msra.mxu0 0
      %1366 = vmatprep.subr.bf16.mxu0 0
      %1367 = vmatpush1.bf16.msra.mxu0 0
      %1368 = vmatprep.mubr.bf16.mxu0 0
      %1369 = vmatmul.mubr.bf16.gmra.mrb[0].mxu0 %v1331
      %v1370 = vpop.f32.mrb[0].mxu0
      %v1371 = vadd.f32 0.0, %v1370
      %v1372 = vpop.f32.mrb[0].mxu0
      %v1373 = vpop.f32.mrb[0].mxu0
      %v1374 = vadd.f32 0.0, %v1373
      %v1375 = vpop.f32.mrb[0].mxu0
      %1376 = vdwg.mxu0
      %v1377 = vpack.c.bf16 %v1374, %v1371
      %v1379 = vunpack.c.l.b16 %v1377
      %v1380 = vunpack.c.h.b16 %v1377
      %v1381 = vpack.c.b16 %v1379, %v1379
      %v1382 = vpack.c.b16 %v1380, %v1380
      %vm1385 = vcmask 125952
      %1386 = vst.msk [vmem:[%s302] sm:$0xf] %vm1385, %v1381
      %1387 = vst.msk [vmem:[%s302 + $0x4] sm:$0xf] %vm1385, %v1382
      %s1388 = scalar_lea.vmem [#allocation5], 2
      %v1389 = vld [vmem:[%s1388] sm:$0x3]
      %v1391 = vsel %vm612, %v1389, 0
      %1393 = vmatprep.subr.bf16.mxu0 0
      %1394 = vmatpush1.bf16.msra.mxu0 %v1391
      %1395 = vmatprep.subr.bf16.mxu0 0
      %1396 = vmatpush1.bf16.msra.mxu0 0
      %1397 = vmatprep.subr.bf16.mxu0 0
      %1398 = vmatpush1.bf16.msra.mxu0 0
      %1399 = vmatprep.subr.bf16.mxu0 0
      %1400 = vmatpush1.bf16.msra.mxu0 0
      %1401 = vmatprep.subr.bf16.mxu0 0
      %1402 = vmatpush1.bf16.msra.mxu0 0
      %1403 = vmatprep.subr.bf16.mxu0 0
      %1404 = vmatpush1.bf16.msra.mxu0 0
      %1405 = vmatprep.subr.bf16.mxu0 0
      %1406 = vmatpush1.bf16.msra.mxu0 0
      %1407 = vmatprep.subr.bf16.mxu0 0
      %1408 = vmatpush1.bf16.msra.mxu0 0
      %1409 = vmatprep.subr.bf16.mxu0 0
      %1410 = vmatpush1.bf16.msra.mxu0 0
      %1411 = vmatprep.subr.bf16.mxu0 0
      %1412 = vmatpush1.bf16.msra.mxu0 0
      %1413 = vmatprep.subr.bf16.mxu0 0
      %1414 = vmatpush1.bf16.msra.mxu0 0
      %1415 = vmatprep.subr.bf16.mxu0 0
      %1416 = vmatpush1.bf16.msra.mxu0 0
      %1417 = vmatprep.subr.bf16.mxu0 0
      %1418 = vmatpush1.bf16.msra.mxu0 0
      %1419 = vmatprep.subr.bf16.mxu0 0
      %1420 = vmatpush1.bf16.msra.mxu0 0
      %1421 = vmatprep.subr.bf16.mxu0 0
      %1422 = vmatpush1.bf16.msra.mxu0 0
      %1423 = vmatprep.subr.bf16.mxu0 0
      %1424 = vmatpush1.bf16.msra.mxu0 0
      %1425 = vmatprep.mubr.bf16.mxu0 0
      %1426 = vmatmul.mubr.bf16.gmra.mrb[0].mxu0 %v1331
      %v1427 = vpop.f32.mrb[0].mxu0
      %v1428 = vadd.f32 0.0, %v1427
      %v1429 = vpop.f32.mrb[0].mxu0
      %v1430 = vpop.f32.mrb[0].mxu0
      %v1431 = vadd.f32 0.0, %v1430
      %v1432 = vpop.f32.mrb[0].mxu0
      %1433 = vdwg.mxu0
      %v1434 = vpack.c.bf16 %v1431, %v1428
      %v1436 = vunpack.c.l.b16 %v1434
      %v1437 = vunpack.c.h.b16 %v1434
      %v1438 = vpack.c.b16 %v1436, %v1436
      %v1439 = vpack.c.b16 %v1437, %v1437
      %s1442 = scalar_lea.vmem %s302, 8
      %1443 = vst.msk [vmem:[%s1442] sm:$0xf] %vm1385, %v1438
      %1444 = vst.msk [vmem:[%s1442 + $0x4] sm:$0xf] %vm1385, %v1439
      %s1445 = scalar_lea.vmem [#allocation5], 4
      %v1446 = vld [vmem:[%s1445] sm:$0x3]
      %v1448 = vsel %vm612, %v1446, 0
      %1450 = vmatprep.subr.bf16.mxu0 0
      %1451 = vmatpush1.bf16.msra.mxu0 %v1448
      %1452 = vmatprep.subr.bf16.mxu0 0
      %1453 = vmatpush1.bf16.msra.mxu0 0
      %1454 = vmatprep.subr.bf16.mxu0 0
      %1455 = vmatpush1.bf16.msra.mxu0 0
      %1456 = vmatprep.subr.bf16.mxu0 0
      %1457 = vmatpush1.bf16.msra.mxu0 0
      %1458 = vmatprep.subr.bf16.mxu0 0
      %1459 = vmatpush1.bf16.msra.mxu0 0
      %1460 = vmatprep.subr.bf16.mxu0 0
      %1461 = vmatpush1.bf16.msra.mxu0 0
      %1462 = vmatprep.subr.bf16.mxu0 0
      %1463 = vmatpush1.bf16.msra.mxu0 0
      %1464 = vmatprep.subr.bf16.mxu0 0
      %1465 = vmatpush1.bf16.msra.mxu0 0
      %1466 = vmatprep.subr.bf16.mxu0 0
      %1467 = vmatpush1.bf16.msra.mxu0 0
      %1468 = vmatprep.subr.bf16.mxu0 0
      %1469 = vmatpush1.bf16.msra.mxu0 0
      %1470 = vmatprep.subr.bf16.mxu0 0
      %1471 = vmatpush1.bf16.msra.mxu0 0
      %1472 = vmatprep.subr.bf16.mxu0 0
      %1473 = vmatpush1.bf16.msra.mxu0 0
      %1474 = vmatprep.subr.bf16.mxu0 0
      %1475 = vmatpush1.bf16.msra.mxu0 0
      %1476 = vmatprep.subr.bf16.mxu0 0
      %1477 = vmatpush1.bf16.msra.mxu0 0
      %1478 = vmatprep.subr.bf16.mxu0 0
      %1479 = vmatpush1.bf16.msra.mxu0 0
      %1480 = vmatprep.subr.bf16.mxu0 0
      %1481 = vmatpush1.bf16.msra.mxu0 0
      %1482 = vmatprep.mubr.bf16.mxu0 0
      %1483 = vmatmul.mubr.bf16.gmra.mrb[0].mxu0 %v1331
      %v1484 = vpop.f32.mrb[0].mxu0
      %v1485 = vadd.f32 0.0, %v1484
      %v1486 = vpop.f32.mrb[0].mxu0
      %v1487 = vpop.f32.mrb[0].mxu0
      %v1488 = vadd.f32 0.0, %v1487
      %v1489 = vpop.f32.mrb[0].mxu0
      %1490 = vdwg.mxu0
      %v1491 = vpack.c.bf16 %v1488, %v1485
      %v1493 = vunpack.c.l.b16 %v1491
      %v1494 = vunpack.c.h.b16 %v1491
      %v1495 = vpack.c.b16 %v1493, %v1493
      %v1496 = vpack.c.b16 %v1494, %v1494
      %s1499 = scalar_lea.vmem %s302, 16
      %1500 = vst.msk [vmem:[%s1499] sm:$0xf] %vm1385, %v1495
      %1501 = vst.msk [vmem:[%s1499 + $0x4] sm:$0xf] %vm1385, %v1496
      %s1502 = scalar_lea.vmem [#allocation5], 6
      %v1503 = vld [vmem:[%s1502] sm:$0x3]
      %v1505 = vsel %vm612, %v1503, 0
      %1507 = vmatprep.subr.bf16.mxu0 0
      %1508 = vmatpush1.bf16.msra.mxu0 %v1505
      %1509 = vmatprep.subr.bf16.mxu0 0
      %1510 = vmatpush1.bf16.msra.mxu0 0
      %1511 = vmatprep.subr.bf16.mxu0 0
      %1512 = vmatpush1.bf16.msra.mxu0 0
      %1513 = vmatprep.subr.bf16.mxu0 0
      %1514 = vmatpush1.bf16.msra.mxu0 0
      %1515 = vmatprep.subr.bf16.mxu0 0
      %1516 = vmatpush1.bf16.msra.mxu0 0
      %1517 = vmatprep.subr.bf16.mxu0 0
      %1518 = vmatpush1.bf16.msra.mxu0 0
      %1519 = vmatprep.subr.bf16.mxu0 0
      %1520 = vmatpush1.bf16.msra.mxu0 0
      %1521 = vmatprep.subr.bf16.mxu0 0
      %1522 = vmatpush1.bf16.msra.mxu0 0
      %1523 = vmatprep.subr.bf16.mxu0 0
      %1524 = vmatpush1.bf16.msra.mxu0 0
      %1525 = vmatprep.subr.bf16.mxu0 0
      %1526 = vmatpush1.bf16.msra.mxu0 0
      %1527 = vmatprep.subr.bf16.mxu0 0
      %1528 = vmatpush1.bf16.msra.mxu0 0
      %1529 = vmatprep.subr.bf16.mxu0 0
      %1530 = vmatpush1.bf16.msra.mxu0 0
      %1531 = vmatprep.subr.bf16.mxu0 0
      %1532 = vmatpush1.bf16.msra.mxu0 0
      %1533 = vmatprep.subr.bf16.mxu0 0
      %1534 = vmatpush1.bf16.msra.mxu0 0
      %1535 = vmatprep.subr.bf16.mxu0 0
      %1536 = vmatpush1.bf16.msra.mxu0 0
      %1537 = vmatprep.subr.bf16.mxu0 0
      %1538 = vmatpush1.bf16.msra.mxu0 0
      %1539 = vmatprep.mubr.bf16.mxu0 0
      %1540 = vmatmul.mubr.bf16.gmra.mrb[0].mxu0 %v1331
      %v1541 = vpop.f32.mrb[0].mxu0
      %v1542 = vadd.f32 0.0, %v1541
      %v1543 = vpop.f32.mrb[0].mxu0
      %v1544 = vpop.f32.mrb[0].mxu0
      %v1545 = vadd.f32 0.0, %v1544
      %v1546 = vpop.f32.mrb[0].mxu0
      %1547 = vdwg.mxu0
      %v1548 = vpack.c.bf16 %v1545, %v1542
      %v1550 = vunpack.c.l.b16 %v1548
      %v1551 = vunpack.c.h.b16 %v1548
      %v1552 = vpack.c.b16 %v1550, %v1550
      %v1553 = vpack.c.b16 %v1551, %v1551
      %s1556 = scalar_lea.vmem %s302, 24
      %1557 = vst.msk [vmem:[%s1556] sm:$0xf] %vm1385, %v1552
      %1558 = vst.msk [vmem:[%s1556 + $0x4] sm:$0xf] %vm1385, %v1553
      %p1559 = scmp.lt.s32.totalorder %s19, 1
      %s1560 = scalar_select %p1559, %s19, 1
      %s1561 = smul.addr %s1560, 8
      %s1562 = smul.addr %s1561, 4
      %s1563 = scalar_lea.vmem %s8, %s1562
      // Predicated region
      $region53: #{hcolumns_forward.2} parent=51 // pred_check
        %p1564 = pneg %p210
      $region54: #{hcolumns_forward.2} parent=51 // pred_check_branch
        %1566 = sbr.rel (%p1564) target = $region56
      $region55: #{hcolumns_forward.2} parent=51 // pred_region
        _
      $region56: #{hcolumns_forward.2} parent=51 // pred_fallthru
        _
    $region52: #{hcolumns_forward.2} parent=5 // pred_fallthru
      _
    %p1567 = scmp.le.s32.totalorder 2, %s14
    // Predicated region
    $region57: #{hcolumns_forward.2} parent=5 // pred_check
      %p1568 = pneg %p1567
    $region58: #{hcolumns_forward.2} parent=5 // pred_check_branch
      %1570 = sbr.rel (%p1568) target = $region60
    $region59: #{hcolumns_forward.2} parent=5 // pred_region
      %s1571 = ssub.s32 %s14, 2
      // Predicated region
      $region61: #{hcolumns_forward.2} parent=59 // pred_check
        %p1572 = pneg %p216
      $region62: #{hcolumns_forward.2} parent=59 // pred_check_branch
        %1574 = sbr.rel (%p1572) target = $region64
      $region63: #{hcolumns_forward.2} parent=59 // pred_region
        %p1575 = scmp.lt.s32.totalorder %s20, 1
        %s1576 = scalar_select %p1575, %s20, 1
        %s1577 = smul.addr %s1576, 8
        %s1578 = smul.addr %s1577, 4
        %s1579 = scalar_lea.vmem %s8, %s1578
      $region64: #{hcolumns_forward.2} parent=59 // pred_fallthru
        _
    $region60: #{hcolumns_forward.2} parent=5 // pred_fallthru
      _
  $region6: #{hcolumns_forward.2} parent=0 // loop_footer
    %s18 = sadd.s32 1, %s14
  $region7: #{hcolumns_forward.2} parent=0 // loop_footer_branch
    %13 = sbr.rel target = $region3
  $region8: #{hcolumns_forward.2} parent=0 // loop_exit
    _

// kernel: hcolumns_forward.3
$region0: #{hcolumns_forward.3}
  #allocation0 [shape = 'u32[]', space=smem, size = 0x4, offset = 0x4, fixed_abs, tag = 'smem constant byte address 0x4 - core index']
  #allocation1 [shape = 'u32[144,128]{1,0:T(1,128)}', space=vmem, size = 0x12000, scoped, tag = 'internal scratch']
  #allocation2 [shape = 'bf16[54,78]{1,0:T(8,128)(2,1)}', space=vmem, size = 0x3800, scoped, tag = 'scratch operand']
  #allocation3 [shape = 'bf16[8,100]{1,0:T(8,128)(2,1)}', space=vmem, size = 0x800, scoped, tag = 'scratch operand']
  #allocation4 [shape = 'bf16[72,78]{1,0:T(8,128)(2,1)}', space=vmem, size = 0x4800, scoped, tag = 'scratch operand']
  #allocation5 [shape = 'bf16[8,8,16]{2,1,0:T(8,128)(2,1)}', space=vmem, size = 0x4000, scoped, tag = 'scratch operand']
  %s0 = inlined_call_operand.vmem [shape: bf16[2,6,100], index: 0, kind: input, shape index: {}]
  %s1 = inlined_call_operand.vmem [shape: bf16[8,54], index: 1, kind: input, shape index: {}]
  %s2 = inlined_call_operand.vmem [shape: f32[8,1], index: 2, kind: input, shape index: {}]
  %s3 = inlined_call_operand.vmem [shape: bf16[8,72], index: 3, kind: input, shape index: {}]
  %s4 = inlined_call_operand.vmem [shape: f32[8,1], index: 4, kind: input, shape index: {}]
  %s5 = inlined_call_operand.vmem [shape: bf16[8,16], index: 5, kind: input, shape index: {}]
  %s6 = inlined_call_operand.vmem [shape: bf16[16,8], index: 6, kind: input, shape index: {}]
  %s7 = inlined_call_operand.vmem [shape: f32[1,78], index: 7, kind: input, shape index: {}]
  %s8 = inlined_call_operand.vmem [shape: bf16[2,4,16,16], index: 8, kind: output, shape index: {}]
  %s9 = sld [smem:[#allocation0]]
  $region65: #{hcolumns_forward.3} parent=0
    _
  %s11 = ssub.s32 1, %s9
  %s12 = scalar_select 0, %s11, %s9
  loop: start=0, step=1, limit=4
  $region2: #{hcolumns_forward.3} parent=0 // loop_pre_header
    _
  $region3: #{hcolumns_forward.3} parent=0 // loop_header
    %s14 = sphi 0, %s18
    %p15 = scmp.ge.s32.totalorder %s14, 4
    %s24 = sphi 0, %s26
    %s27 = sphi 0, %s24
    %s28 = sphi 0, %s27
    %s44 = sphi 0, %s28
    %s48 = sphi 0, %s48
    %s50 = sphi 0, %s48
    %s51 = sphi 0, %s50
    %s65 = sphi 0, %s51
    %s69 = sphi 0, %s69
    %s71 = sphi 0, %s69
    %s72 = sphi 0, %s71
    %s86 = sphi 0, %s72
    %s90 = sphi 0, %s90
    %s92 = sphi 0, %s90
    %s93 = sphi 0, %s92
    %s107 = sphi 0, %s93
    %s111 = sphi 0, %s111
    %s113 = sphi 0, %s111
    %s114 = sphi 0, %s113
    %s128 = sphi 0, %s114
    %s132 = sphi 0, %s132
    %s134 = sphi 0, %s132
    %s135 = sphi 0, %s134
    %s149 = sphi 0, %s135
    %s153 = sphi 0, %s153
    %s155 = sphi 0, %s153
    %s156 = sphi 0, %s155
    %s170 = sphi 0, %s156
    %s174 = sphi 0, %s174
    %s176 = sphi 0, %s174
    %s177 = sphi 0, %s176
    %s191 = sphi 0, %s177
    %s197 = sphi 0, %s199
    %s200 = sphi 0, %s197
    %s201 = sphi 0, %s200
    %s217 = sphi 0, %s201
  $region4: #{hcolumns_forward.3} parent=0 // loop_header_branch
    %17 = sbr.rel (%p15) target = $region8
  $region5: #{hcolumns_forward.3} parent=0 // loop_body
    %s19 = ssub.s32 %s14, 1
    %s20 = ssub.s32 %s14, 2
    %s21 = sadd.s32 %s14, 1
    %s22 = ssub.s32 %s14, %s21
    %p23 = scmp.eq.s32.totalorder %s22, 0
    %s25 = sadd.s32 %s24, 1
    %s26 = scalar_select %p23, %s24, %s25
    %p29 = pneg %p23
    %p30 = scmp.eq.s32.totalorder %s14, 1
    %p31 = por %p29, %p30
    %p32 = scmp.ne.s32.totalorder %s24, %s27
    %p33 = scmp.eq.s32.totalorder %s14, 0
    %p34 = por %p32, %p33
    %p35 = scmp.ne.s32.totalorder %s24, %s27
    %p36 = scmp.eq.s32.totalorder %s19, 1
    %p37 = por %p35, %p36
    %p38 = scmp.ne.s32.totalorder %s27, %s28
    %p39 = scmp.eq.s32.totalorder %s19, 0
    %p40 = por %p38, %p39
    %p41 = scmp.ne.s32.totalorder %s27, %s28
    %p42 = scmp.eq.s32.totalorder %s20, 1
    %p43 = por %p41, %p42
    %p45 = scmp.ne.s32.totalorder %s28, %s44
    %p46 = scmp.eq.s32.totalorder %s20, 0
    %p47 = por %p45, %p46
    %s49 = sadd.s32 %s48, 1
    %p52 = scmp.eq.s32.totalorder %s14, 1
    %p53 = scmp.ne.s32.totalorder %s48, %s50
    %p54 = scmp.eq.s32.totalorder %s14, 0
    %p55 = por %p53, %p54
    %p56 = scmp.ne.s32.totalorder %s48, %s50
    %p57 = scmp.eq.s32.totalorder %s19, 1
    %p58 = por %p56, %p57
    %p59 = scmp.ne.s32.totalorder %s50, %s51
    %p60 = scmp.eq.s32.totalorder %s19, 0
    %p61 = por %p59, %p60
    %p62 = scmp.ne.s32.totalorder %s50, %s51
    %p63 = scmp.eq.s32.totalorder %s20, 1
    %p64 = por %p62, %p63
    %p66 = scmp.ne.s32.totalorder %s51, %s65
    %p67 = scmp.eq.s32.totalorder %s20, 0
    %p68 = por %p66, %p67
    %s70 = sadd.s32 %s69, 1
    %p73 = scmp.eq.s32.totalorder %s14, 1
    %p74 = scmp.ne.s32.totalorder %s69, %s71
    %p75 = scmp.eq.s32.totalorder %s14, 0
    %p76 = por %p74, %p75
    %p77 = scmp.ne.s32.totalorder %s69, %s71
    %p78 = scmp.eq.s32.totalorder %s19, 1
    %p79 = por %p77, %p78
    %p80 = scmp.ne.s32.totalorder %s71, %s72
    %p81 = scmp.eq.s32.totalorder %s19, 0
    %p82 = por %p80, %p81
    %p83 = scmp.ne.s32.totalorder %s71, %s72
    %p84 = scmp.eq.s32.totalorder %s20, 1
    %p85 = por %p83, %p84
    %p87 = scmp.ne.s32.totalorder %s72, %s86
    %p88 = scmp.eq.s32.totalorder %s20, 0
    %p89 = por %p87, %p88
    %s91 = sadd.s32 %s90, 1
    %p94 = scmp.eq.s32.totalorder %s14, 1
    %p95 = scmp.ne.s32.totalorder %s90, %s92
    %p96 = scmp.eq.s32.totalorder %s14, 0
    %p97 = por %p95, %p96
    %p98 = scmp.ne.s32.totalorder %s90, %s92
    %p99 = scmp.eq.s32.totalorder %s19, 1
    %p100 = por %p98, %p99
    %p101 = scmp.ne.s32.totalorder %s92, %s93
    %p102 = scmp.eq.s32.totalorder %s19, 0
    %p103 = por %p101, %p102
    %p104 = scmp.ne.s32.totalorder %s92, %s93
    %p105 = scmp.eq.s32.totalorder %s20, 1
    %p106 = por %p104, %p105
    %p108 = scmp.ne.s32.totalorder %s93, %s107
    %p109 = scmp.eq.s32.totalorder %s20, 0
    %p110 = por %p108, %p109
    %s112 = sadd.s32 %s111, 1
    %p115 = scmp.eq.s32.totalorder %s14, 1
    %p116 = scmp.ne.s32.totalorder %s111, %s113
    %p117 = scmp.eq.s32.totalorder %s14, 0
    %p118 = por %p116, %p117
    %p119 = scmp.ne.s32.totalorder %s111, %s113
    %p120 = scmp.eq.s32.totalorder %s19, 1
    %p121 = por %p119, %p120
    %p122 = scmp.ne.s32.totalorder %s113, %s114
    %p123 = scmp.eq.s32.totalorder %s19, 0
    %p124 = por %p122, %p123
    %p125 = scmp.ne.s32.totalorder %s113, %s114
    %p126 = scmp.eq.s32.totalorder %s20, 1
    %p127 = por %p125, %p126
    %p129 = scmp.ne.s32.totalorder %s114, %s128
    %p130 = scmp.eq.s32.totalorder %s20, 0
    %p131 = por %p129, %p130
    %s133 = sadd.s32 %s132, 1
    %p136 = scmp.eq.s32.totalorder %s14, 1
    %p137 = scmp.ne.s32.totalorder %s132, %s134
    %p138 = scmp.eq.s32.totalorder %s14, 0
    %p139 = por %p137, %p138
    %p140 = scmp.ne.s32.totalorder %s132, %s134
    %p141 = scmp.eq.s32.totalorder %s19, 1
    %p142 = por %p140, %p141
    %p143 = scmp.ne.s32.totalorder %s134, %s135
    %p144 = scmp.eq.s32.totalorder %s19, 0
    %p145 = por %p143, %p144
    %p146 = scmp.ne.s32.totalorder %s134, %s135
    %p147 = scmp.eq.s32.totalorder %s20, 1
    %p148 = por %p146, %p147
    %p150 = scmp.ne.s32.totalorder %s135, %s149
    %p151 = scmp.eq.s32.totalorder %s20, 0
    %p152 = por %p150, %p151
    %s154 = sadd.s32 %s153, 1
    %p157 = scmp.eq.s32.totalorder %s14, 1
    %p158 = scmp.ne.s32.totalorder %s153, %s155
    %p159 = scmp.eq.s32.totalorder %s14, 0
    %p160 = por %p158, %p159
    %p161 = scmp.ne.s32.totalorder %s153, %s155
    %p162 = scmp.eq.s32.totalorder %s19, 1
    %p163 = por %p161, %p162
    %p164 = scmp.ne.s32.totalorder %s155, %s156
    %p165 = scmp.eq.s32.totalorder %s19, 0
    %p166 = por %p164, %p165
    %p167 = scmp.ne.s32.totalorder %s155, %s156
    %p168 = scmp.eq.s32.totalorder %s20, 1
    %p169 = por %p167, %p168
    %p171 = scmp.ne.s32.totalorder %s156, %s170
    %p172 = scmp.eq.s32.totalorder %s20, 0
    %p173 = por %p171, %p172
    %s175 = sadd.s32 %s174, 1
    %p178 = scmp.eq.s32.totalorder %s14, 1
    %p179 = scmp.ne.s32.totalorder %s174, %s176
    %p180 = scmp.eq.s32.totalorder %s14, 0
    %p181 = por %p179, %p180
    %p182 = scmp.ne.s32.totalorder %s174, %s176
    %p183 = scmp.eq.s32.totalorder %s19, 1
    %p184 = por %p182, %p183
    %p185 = scmp.ne.s32.totalorder %s176, %s177
    %p186 = scmp.eq.s32.totalorder %s19, 0
    %p187 = por %p185, %p186
    %p188 = scmp.ne.s32.totalorder %s176, %s177
    %p189 = scmp.eq.s32.totalorder %s20, 1
    %p190 = por %p188, %p189
    %p192 = scmp.ne.s32.totalorder %s177, %s191
    %p193 = scmp.eq.s32.totalorder %s20, 0
    %p194 = por %p192, %p193
    %s195 = ssub.s32 %s14, %s21
    %p196 = scmp.eq.s32.totalorder %s195, 0
    %s198 = sadd.s32 %s197, 1
    %s199 = scalar_select %p196, %s197, %s198
    %p202 = pneg %p196
    %p203 = scmp.eq.s32.totalorder %s14, 1
    %p204 = por %p202, %p203
    %p205 = scmp.ne.s32.totalorder %s197, %s200
    %p206 = scmp.eq.s32.totalorder %s14, 0
    %p207 = por %p205, %p206
    %p208 = scmp.ne.s32.totalorder %s197, %s200
    %p209 = scmp.eq.s32.totalorder %s19, 1
    %p210 = por %p208, %p209
    %p211 = scmp.ne.s32.totalorder %s200, %s201
    %p212 = scmp.eq.s32.totalorder %s19, 0
    %p213 = por %p211, %p212
    %p214 = scmp.ne.s32.totalorder %s200, %s201
    %p215 = scmp.eq.s32.totalorder %s20, 1
    %p216 = por %p214, %p215
    %p218 = scmp.ne.s32.totalorder %s201, %s217
    %p219 = scmp.eq.s32.totalorder %s20, 0
    %p220 = por %p218, %p219
    %p221 = scmp.le.s32.totalorder 1, %s14
    %p222 = scmp.lt.s32.totalorder %s14, 3
    %p223 = pnand %p221, %p222
    %p224 = pneg %p223
    // Predicated region
    $region9: #{hcolumns_forward.3} parent=5 // pred_check
      _
    $region10: #{hcolumns_forward.3} parent=5 // pred_check_branch
      %226 = sbr.rel (%p223) target = $region12
    $region11: #{hcolumns_forward.3} parent=5 // pred_region
      %s227 = ssub.s32 %s14, 1
      // Predicated region
      $region13: #{hcolumns_forward.3} parent=11 // pred_check
        %p228 = pneg %p61
      $region14: #{hcolumns_forward.3} parent=11 // pred_check_branch
        %230 = sbr.rel (%p228) target = $region16
      $region15: #{hcolumns_forward.3} parent=11 // pred_region
        _
      $region16: #{hcolumns_forward.3} parent=11 // pred_fallthru
        _
      // Predicated region
      $region17: #{hcolumns_forward.3} parent=11 // pred_check
        %p231 = pneg %p82
      $region18: #{hcolumns_forward.3} parent=11 // pred_check_branch
        %233 = sbr.rel (%p231) target = $region20
      $region19: #{hcolumns_forward.3} parent=11 // pred_region
        _
      $region20: #{hcolumns_forward.3} parent=11 // pred_fallthru
        _
      // Predicated region
      $region21: #{hcolumns_forward.3} parent=11 // pred_check
        %p234 = pneg %p103
      $region22: #{hcolumns_forward.3} parent=11 // pred_check_branch
        %236 = sbr.rel (%p234) target = $region24
      $region23: #{hcolumns_forward.3} parent=11 // pred_region
        _
      $region24: #{hcolumns_forward.3} parent=11 // pred_fallthru
        _
      // Predicated region
      $region25: #{hcolumns_forward.3} parent=11 // pred_check
        %p237 = pneg %p124
      $region26: #{hcolumns_forward.3} parent=11 // pred_check_branch
        %239 = sbr.rel (%p237) target = $region28
      $region27: #{hcolumns_forward.3} parent=11 // pred_region
        _
      $region28: #{hcolumns_forward.3} parent=11 // pred_fallthru
        _
      // Predicated region
      $region29: #{hcolumns_forward.3} parent=11 // pred_check
        %p240 = pneg %p145
      $region30: #{hcolumns_forward.3} parent=11 // pred_check_branch
        %242 = sbr.rel (%p240) target = $region32
      $region31: #{hcolumns_forward.3} parent=11 // pred_region
        _
      $region32: #{hcolumns_forward.3} parent=11 // pred_fallthru
        _
      // Predicated region
      $region33: #{hcolumns_forward.3} parent=11 // pred_check
        %p243 = pneg %p166
      $region34: #{hcolumns_forward.3} parent=11 // pred_check_branch
        %245 = sbr.rel (%p243) target = $region36
      $region35: #{hcolumns_forward.3} parent=11 // pred_region
        _
      $region36: #{hcolumns_forward.3} parent=11 // pred_fallthru
        _
      // Predicated region
      $region37: #{hcolumns_forward.3} parent=11 // pred_check
        %p246 = pneg %p187
      $region38: #{hcolumns_forward.3} parent=11 // pred_check_branch
        %248 = sbr.rel (%p246) target = $region40
      $region39: #{hcolumns_forward.3} parent=11 // pred_region
        _
      $region40: #{hcolumns_forward.3} parent=11 // pred_fallthru
        _
    $region12: #{hcolumns_forward.3} parent=5 // pred_fallthru
      _
    %p249 = scmp.lt.s32.totalorder %s14, 2
    // Predicated region
    $region41: #{hcolumns_forward.3} parent=5 // pred_check
      %p250 = pneg %p249
    $region42: #{hcolumns_forward.3} parent=5 // pred_check_branch
      %252 = sbr.rel (%p250) target = $region44
    $region43: #{hcolumns_forward.3} parent=5 // pred_region
      // Predicated region
      $region45: #{hcolumns_forward.3} parent=43 // pred_check
        %p253 = pneg %p34
      $region46: #{hcolumns_forward.3} parent=43 // pred_check_branch
        %255 = sbr.rel (%p253) target = $region48
      $region47: #{hcolumns_forward.3} parent=43 // pred_region
        %p256 = scmp.lt.s32.totalorder %s14, 1
        %s257 = scalar_select %p256, %s14, 1
        %s258 = smul.addr %s257, 4
        %s259 = scalar_lea.vmem %s0, %s258
      $region48: #{hcolumns_forward.3} parent=43 // pred_fallthru
        _
    $region44: #{hcolumns_forward.3} parent=5 // pred_fallthru
      _
    %p260 = scmp.le.s32.totalorder 1, %s14
    %p261 = scmp.lt.s32.totalorder %s14, 3
    %p262 = pnand %p260, %p261
    %p263 = pneg %p262
    // Predicated region
    $region49: #{hcolumns_forward.3} parent=5 // pred_check
      _
    $region50: #{hcolumns_forward.3} parent=5 // pred_check_branch
      %265 = sbr.rel (%p262) target = $region52
    $region51: #{hcolumns_forward.3} parent=5 // pred_region
      %s266 = ssub.s32 %s14, 1
      %p267 = scmp.lt.s32.totalorder %s19, 1
      %s268 = scalar_select %p267, %s19, 1
      %s269 = smul.addr %s268, 4
      %s270 = scalar_lea.vmem %s0, %s269
      %p271 = pneg %p40
      %p272 = pneg %p37
      %p273 = pneg %p61
      %p274 = pneg %p58
      %p275 = pneg %p82
      %p276 = pneg %p79
      %p277 = pneg %p103
      %p278 = pneg %p100
      %p279 = pneg %p124
      %p280 = pneg %p121
      %p281 = pneg %p145
      %p282 = pneg %p142
      %p283 = pneg %p166
      %p284 = pneg %p163
      %p285 = pneg %p187
      %p286 = pneg %p184
      %p287 = pneg %p213
      %p288 = pneg %p210
      %p289 = scmp.lt.s32.totalorder %s19, 1
      %s290 = scalar_select %p289, %s19, 1
      %s291 = smul.addr %s290, 8
      %s292 = smul.addr %s291, 4
      %s293 = scalar_lea.vmem %s8, %s292
      %p294 = scmp.lt.s32.totalorder %s19, 1
      %s295 = scalar_select %p294, %s19, 1
      %s296 = smul.addr %s295, 4
      %s297 = scalar_lea.vmem %s0, %s296
      %p298 = scmp.lt.s32.totalorder %s19, 1
      %s299 = scalar_select %p298, %s19, 1
      %s300 = smul.addr %s299, 8
      %s301 = smul.addr %s300, 4
      %s302 = scalar_lea.vmem %s8, %s301
      %v304 = vld [vmem:[%s297] sm:$0x7]
      %vm305 = vcmask 632832
      %306 = vst.msk [vmem:[#allocation2] sm:$0x7] %vm305, %v304
      %v307 = vld [vmem:[%s297] sm:$0x7]
      %v309 = vrot.slane %v307, 5
      %v310 = vrot.slane %v309, 4
      %311 = vrot.lane.b32.xlu0 %v309, 127
      %v312 = vpop.permute.xlu0 %311
      %313 = vrot.lane.b32.xlu0 %v310, 127
      %v314 = vpop.permute.xlu0 %313
      %vm317 = vcmask 633859
      %318 = vst.msk [vmem:[#allocation2] sm:$0x8] %vm317, %v312
      %vm319 = vcmask 631808
      %320 = vst.msk [vmem:[#allocation2 + $0x4] sm:$0x3] %vm319, %v314
      %v321 = vld [vmem:[%s297] sm:$0x7]
      %v323 = vrot.slane %v321, 6
      %v324 = vrot.slane %v323, 4
      %325 = vrot.lane.b32.xlu0 %v323, 126
      %v326 = vpop.permute.xlu0 %325
      %327 = vrot.lane.b32.xlu0 %v324, 126
      %v328 = vpop.permute.xlu0 %327
      %vm331 = vcmask 633858
      %332 = vst.msk [vmem:[#allocation2 + $0x4] sm:$0xc] %vm331, %v326
      %vm333 = vcmask 630784
      %334 = vst.msk [vmem:[#allocation2 + $0x8] sm:$0x1] %vm333, %v328
      %v335 = vld [vmem:[%s297] sm:$0x7]
      %v337 = vrot.slane %v335, 7
      %338 = vrot.lane.b32.xlu0 %v337, 118
      %v339 = vpop.permute.xlu0 %338
      %vm341 = vcmask 633857
      %342 = vst.msk [vmem:[#allocation2 + $0x8] sm:$0xe] %vm341, %v339
      %v343 = vld [vmem:[%s297] sm:$0x7]
      %345 = vrot.lane.b32.xlu0 %v343, 117
      %v346 = vpop.permute.xlu0 %345
      %348 = vst.msk [vmem:[#allocation2 + $0xc] sm:$0x7] %vm305, %v346
      %v349 = vld [vmem:[%s297] sm:$0x7]
      %v351 = vrot.slane %v349, 5
      %v352 = vrot.slane %v351, 4
      %353 = vrot.lane.b32.xlu0 %v351, 116
      %v354 = vpop.permute.xlu0 %353
      %355 = vrot.lane.b32.xlu0 %v352, 116
      %v356 = vpop.permute.xlu0 %355
      %359 = vst.msk [vmem:[#allocation2 + $0xc] sm:$0x8] %vm317, %v354
      %360 = vst.msk [vmem:[#allocation2 + $0x10] sm:$0x3] %vm319, %v356
      %v361 = vld [vmem:[%s297] sm:$0x7]
      %v363 = vrot.slane %v361, 6
      %v364 = vrot.slane %v363, 4
      %365 = vrot.lane.b32.xlu0 %v363, 108
      %v366 = vpop.permute.xlu0 %365
      %367 = vrot.lane.b32.xlu0 %v364, 108
      %v368 = vpop.permute.xlu0 %367
      %371 = vst.msk [vmem:[#allocation2 + $0x10] sm:$0xc] %vm331, %v366
      %372 = vst.msk [vmem:[#allocation2 + $0x14] sm:$0x1] %vm333, %v368
      %v373 = vld [vmem:[%s297] sm:$0x7]
      %v375 = vrot.slane %v373, 7
      %376 = vrot.lane.b32.xlu0 %v375, 107
      %v377 = vpop.permute.xlu0 %376
      %379 = vst.msk [vmem:[#allocation2 + $0x14] sm:$0xe] %vm341, %v377
      %v380 = vld [vmem:[%s297] sm:$0x7]
      %382 = vrot.lane.b32.xlu0 %v380, 106
      %v383 = vpop.permute.xlu0 %382
      %385 = vst.msk [vmem:[#allocation2 + $0x18] sm:$0x7] %vm305, %v383
      %v386 = vld [vmem:[%s1] sm:$0xf]
      %v387 = vld [vmem:[#allocation2] sm:$0xf]
      %v388 = vld [vmem:[#allocation2 + $0x4] sm:$0xf]
      %v389 = vld [vmem:[#allocation2 + $0x8] sm:$0xf]
      %v390 = vld [vmem:[#allocation2 + $0xc] sm:$0xf]
      %v391 = vld [vmem:[#allocation2 + $0x10] sm:$0xf]
      %v392 = vld [vmem:[#allocation2 + $0x14] sm:$0xf]
      %v393 = vld [vmem:[#allocation2 + $0x18] sm:$0x7]
      %v394 = vld [vmem:[%s2] sm:$0xff]
      %396 = vset.pattern.permute.xlu0 0
      %397 = vperm.xlu0 %396, %v394
      %v398 = vpop.permute.xlu0 %397
      %v407 = vunpack.c.l.b16 %v387
      %v408 = vunpack.c.l.b16 %v388
      %v409 = vunpack.c.l.b16 %v389
      %v410 = vunpack.c.l.b16 %v390
      %v411 = vunpack.c.l.b16 %v391
      %v412 = vunpack.c.l.b16 %v392
      %v413 = vunpack.c.l.b16 %v393
      %v414 = vpack.c.b16 %v408, %v407
      %v415 = vpack.c.b16 %v410, %v409
      %v416 = vpack.c.b16 %v412, %v411
      %v417 = vpack.c.b16 %v413, %v413
      %vm421 = vcmask 441344
      %v423 = vsel %vm421, %v386, 0
      %vm425 = vcmask 1042432
      %v427 = vsel %vm425, %v417, 0
      %429 = vmatprep.subr.bf16.mxu0 0
      %430 = vmatpush1.bf16.msra.mxu0 %v414
      %431 = vmatprep.subr.bf16.mxu0 0
      %432 = vmatpush1.bf16.msra.mxu0 %v415
      %433 = vmatprep.subr.bf16.mxu0 0
      %434 = vmatpush1.bf16.msra.mxu0 %v416
      %435 = vmatprep.subr.bf16.mxu0 0
      %436 = vmatpush1.bf16.msra.mxu0 %v427
      %437 = vmatprep.subr.bf16.mxu0 0
      %438 = vmatpush1.bf16.msra.mxu0 0
      %439 = vmatprep.subr.bf16.mxu0 0
      %440 = vmatpush1.bf16.msra.mxu0 0
      %441 = vmatprep.subr.bf16.mxu0 0
      %442 = vmatpush1.bf16.msra.mxu0 0
      %443 = vmatprep.subr.bf16.mxu0 0
      %444 = vmatpush1.bf16.msra.mxu0 0
      %445 = vmatprep.subr.bf16.mxu0 0
      %446 = vmatpush1.bf16.msra.mxu0 0
      %447 = vmatprep.subr.bf16.mxu0 0
      %448 = vmatpush1.bf16.msra.mxu0 0
      %449 = vmatprep.subr.bf16.mxu0 0
      %450 = vmatpush1.bf16.msra.mxu0 0
      %451 = vmatprep.subr.bf16.mxu0 0
      %452 = vmatpush1.bf16.msra.mxu0 0
      %453 = vmatprep.subr.bf16.mxu0 0
      %454 = vmatpush1.bf16.msra.mxu0 0
      %455 = vmatprep.subr.bf16.mxu0 0
      %456 = vmatpush1.bf16.msra.mxu0 0
      %457 = vmatprep.subr.bf16.mxu0 0
      %458 = vmatpush1.bf16.msra.mxu0 0
      %459 = vmatprep.subr.bf16.mxu0 0
      %460 = vmatpush1.bf16.msra.mxu0 0
      %461 = vmatprep.mubr.bf16.mxu0 0
      %462 = vmatmul.mubr.bf16.gmra.mrb[0].mxu0 %v423
      %v463 = vpop.f32.mrb[0].mxu0
      %v464 = vadd.f32 %v398, %v463
      %v465 = vpop.f32.mrb[0].mxu0
      %v466 = vpop.f32.mrb[0].mxu0
      %v467 = vpop.f32.mrb[0].mxu0
      %468 = vdwg.mxu0
      %vm469 = vcmask 84992
      %470 = vst.msk [vmem:[#allocation3] sm:$0xf] %vm469, 0
      %vm471 = vcmask 814792
      %472 = vst.msk [vmem:[#allocation3] sm:$0xf] %vm471, 0
      %v473 = vld [vmem:[%s7] sm:$0x1]
      %v475 = vlaneseq
      %v476 = vshrl.u32 %v475, 7
      %v477 = vsub.s32 0, %v476
      %v478 = vrot.slane %v473, %v477
      %v480 = vmul.f32 %v464, %v478
      %v481 = vpack.c.bf16 %v480, %v480
      %v483 = vunpack.c.l.b16 %v481
      %v484 = vpack.c.b16 %v483, %v483
      %485 = vrot.lane.b32.xlu0 %v484, 11
      %v486 = vpop.permute.xlu0 %485
      %vm488 = vcmask 724056
      %489 = vst.msk [vmem:[#allocation3] sm:$0xf] %vm488, %v486
      %v490 = vld [vmem:[#allocation3] sm:$0xf]
      %vm491 = vcmask 633856
      %492 = vst.msk [vmem:[#allocation4] sm:$0xf] %vm491, %v490
      %v493 = vld [vmem:[#allocation3] sm:$0xf]
      %495 = vrot.lane.b32.xlu0 %v493, 127
      %v496 = vpop.permute.xlu0 %495
      %498 = vst.msk [vmem:[#allocation4 + $0x4] sm:$0xf] %vm491, %v496
      %v499 = vld [vmem:[#allocation3] sm:$0xf]
      %501 = vrot.lane.b32.xlu0 %v499, 126
      %v502 = vpop.permute.xlu0 %501
      %504 = vst.msk [vmem:[#allocation4 + $0x8] sm:$0xf] %vm491, %v502
      %v505 = vld [vmem:[#allocation3] sm:$0xf]
      %507 = vrot.lane.b32.xlu0 %v505, 118
      %v508 = vpop.permute.xlu0 %507
      %510 = vst.msk [vmem:[#allocation4 + $0xc] sm:$0xf] %vm491, %v508
      %v511 = vld [vmem:[#allocation3] sm:$0xf]
      %513 = vrot.lane.b32.xlu0 %v511, 117
      %v514 = vpop.permute.xlu0 %513
      %516 = vst.msk [vmem:[#allocation4 + $0x10] sm:$0xf] %vm491, %v514
      %v517 = vld [vmem:[#allocation3] sm:$0xf]
      %519 = vrot.lane.b32.xlu0 %v517, 116
      %v520 = vpop.permute.xlu0 %519
      %522 = vst.msk [vmem:[#allocation4 + $0x14] sm:$0xf] %vm491, %v520
      %v523 = vld [vmem:[#allocation3] sm:$0xf]
      %525 = vrot.lane.b32.xlu0 %v523, 108
      %v526 = vpop.permute.xlu0 %525
      %528 = vst.msk [vmem:[#allocation4 + $0x18] sm:$0xf] %vm491, %v526
      %v529 = vld [vmem:[#allocation3] sm:$0xf]
      %531 = vrot.lane.b32.xlu0 %v529, 107
      %v532 = vpop.permute.xlu0 %531
      %534 = vst.msk [vmem:[#allocation4 + $0x1c] sm:$0xf] %vm491, %v532
      %v535 = vld [vmem:[#allocation3] sm:$0xf]
      %537 = vrot.lane.b32.xlu0 %v535, 106
      %v538 = vpop.permute.xlu0 %537
      %540 = vst.msk [vmem:[#allocation4 + $0x20] sm:$0xf] %vm491, %v538
      %v541 = vld [vmem:[%s3] sm:$0xf]
      %v542 = vld [vmem:[#allocation4] sm:$0xf]
      %v543 = vld [vmem:[#allocation4 + $0x4] sm:$0xf]
      %v544 = vld [vmem:[#allocation4 + $0x8] sm:$0xf]
      %v545 = vld [vmem:[#allocation4 + $0xc] sm:$0xf]
      %v546 = vld [vmem:[#allocation4 + $0x10] sm:$0xf]
      %v547 = vld [vmem:[#allocation4 + $0x14] sm:$0xf]
      %v548 = vld [vmem:[#allocation4 + $0x18] sm:$0xf]
      %v549 = vld [vmem:[#allocation4 + $0x1c] sm:$0xf]
      %v550 = vld [vmem:[#allocation4 + $0x20] sm:$0xf]
      %v551 = vld [vmem:[%s4] sm:$0xff]
      %553 = vset.pattern.permute.xlu0 0
      %554 = vperm.xlu0 %553, %v551
      %v555 = vpop.permute.xlu0 %554
      %v566 = vunpack.c.l.b16 %v542
      %v567 = vunpack.c.l.b16 %v543
      %v568 = vunpack.c.l.b16 %v544
      %v569 = vunpack.c.l.b16 %v545
      %v570 = vunpack.c.l.b16 %v546
      %v571 = vunpack.c.l.b16 %v547
      %v572 = vunpack.c.l.b16 %v548
      %v573 = vunpack.c.l.b16 %v549
      %v574 = vunpack.c.l.b16 %v550
      %v575 = vpack.c.b16 %v567, %v566
      %v576 = vpack.c.b16 %v569, %v568
      %v577 = vpack.c.b16 %v571, %v570
      %v578 = vpack.c.b16 %v573, %v572
      %v579 = vpack.c.b16 %v574, %v574
      %vm584 = vcmask 588800
      %v586 = vsel %vm584, %v541, 0
      %vm588 = vcmask 1043456
      %v590 = vsel %vm588, %v579, 0
      %592 = vmatprep.subr.bf16.mxu0 0
      %593 = vmatpush1.bf16.msra.mxu0 %v575
      %594 = vmatprep.subr.bf16.mxu0 0
      %595 = vmatpush1.bf16.msra.mxu0 %v576
      %596 = vmatprep.subr.bf16.mxu0 0
      %597 = vmatpush1.bf16.msra.mxu0 %v577
      %598 = vmatprep.subr.bf16.mxu0 0
      %599 = vmatpush1.bf16.msra.mxu0 %v578
      %600 = vmatprep.subr.bf16.mxu0 0
      %601 = vmatpush1.bf16.msra.mxu0 %v590
      %602 = vmatprep.subr.bf16.mxu0 0
      %603 = vmatpush1.bf16.msra.mxu0 0
      %604 = vmatprep.subr.bf16.mxu0 0
      %605 = vmatpush1.bf16.msra.mxu0 0
      %606 = vmatprep.subr.bf16.mxu0 0
      %607 = vmatpush1.bf16.msra.mxu0 0
      %608 = vmatprep.subr.bf16.mxu0 0
      %609 = vmatpush1.bf16.msra.mxu0 0
      %610 = vmatprep.subr.bf16.mxu0 0
      %611 = vmatpush1.bf16.msra.mxu0 0
      %612 = vmatprep.subr.bf16.mxu0 0
      %613 = vmatpush1.bf16.msra.mxu0 0
      %614 = vmatprep.subr.bf16.mxu0 0
      %615 = vmatpush1.bf16.msra.mxu0 0
      %616 = vmatprep.subr.bf16.mxu0 0
      %617 = vmatpush1.bf16.msra.mxu0 0
      %618 = vmatprep.subr.bf16.mxu0 0
      %619 = vmatpush1.bf16.msra.mxu0 0
      %620 = vmatprep.subr.bf16.mxu0 0
      %621 = vmatpush1.bf16.msra.mxu0 0
      %622 = vmatprep.subr.bf16.mxu0 0
      %623 = vmatpush1.bf16.msra.mxu0 0
      %624 = vmatprep.mubr.bf16.mxu0 0
      %625 = vmatmul.mubr.bf16.gmra.mrb[0].mxu0 %v586
      %v626 = vpop.f32.mrb[0].mxu0
      %v627 = vadd.f32 %v555, %v626
      %v628 = vpop.f32.mrb[0].mxu0
      %v629 = vpop.f32.mrb[0].mxu0
      %v630 = vpop.f32.mrb[0].mxu0
      %631 = vdwg.mxu0
      %v632 = vpack.c.bf16 %v627, %v627
      %v633 = vld [vmem:[%s5] sm:$0xf]
      %vm634 = vcmask 64512
      %v636 = vsel %vm634, %v632, 0
      %v639 = vsel %vm588, %v633, 0
      %641 = vmatprep.subr.bf16.mxu0 0
      %642 = vmatpush1.bf16.msra.mxu0 %v639
      %643 = vmatprep.subr.bf16.mxu0 0
      %644 = vmatpush1.bf16.msra.mxu0 0
      %645 = vmatprep.subr.bf16.mxu0 0
      %646 = vmatpush1.bf16.msra.mxu0 0
      %647 = vmatprep.subr.bf16.mxu0 0
      %648 = vmatpush1.bf16.msra.mxu0 0
      %649 = vmatprep.subr.bf16.mxu0 0
      %650 = vmatpush1.bf16.msra.mxu0 0
      %651 = vmatprep.subr.bf16.mxu0 0
      %652 = vmatpush1.bf16.msra.mxu0 0
      %653 = vmatprep.subr.bf16.mxu0 0
      %654 = vmatpush1.bf16.msra.mxu0 0
      %655 = vmatprep.subr.bf16.mxu0 0
      %656 = vmatpush1.bf16.msra.mxu0 0
      %657 = vmatprep.subr.bf16.mxu0 0
      %658 = vmatpush1.bf16.msra.mxu0 0
      %659 = vmatprep.subr.bf16.mxu0 0
      %660 = vmatpush1.bf16.msra.mxu0 0
      %661 = vmatprep.subr.bf16.mxu0 0
      %662 = vmatpush1.bf16.msra.mxu0 0
      %663 = vmatprep.subr.bf16.mxu0 0
      %664 = vmatpush1.bf16.msra.mxu0 0
      %665 = vmatprep.subr.bf16.mxu0 0
      %666 = vmatpush1.bf16.msra.mxu0 0
      %667 = vmatprep.subr.bf16.mxu0 0
      %668 = vmatpush1.bf16.msra.mxu0 0
      %669 = vmatprep.subr.bf16.mxu0 0
      %670 = vmatpush1.bf16.msra.mxu0 0
      %671 = vmatprep.subr.bf16.mxu0 0
      %672 = vmatpush1.bf16.msra.mxu0 0
      %673 = vmatprep.mubr.bf16.mxu0 0
      %674 = vmatmul.mubr.bf16.gmra.mrb[0].mxu0 %v636
      %v675 = vpop.f32.mrb[0].mxu0
      %v676 = vadd.f32 0.0, %v675
      %v677 = vpop.f32.mrb[0].mxu0
      %v678 = vpop.f32.mrb[0].mxu0
      %v679 = vpop.f32.mrb[0].mxu0
      %680 = vdwg.mxu0
      %v681 = vpack.c.bf16 %v676, %v676
      %v684 = vunpack.c.l.s4 1966171168
      %v685 = vunpack.c.0.s8 %v684
      %v686 = vlaneseq
      %v687 = vshrl.u32 %v686, 7
      %v688 = vsub.s32 %v685, %v687
      %v689 = vrot.slane %v681, %v688
      %v690 = vcombine.high %v689, %v689
      %v692 = vunpack.c.l.s4 1966171168
      %v693 = vunpack.c.0.s8 %v692
      %v694 = vlaneseq
      %v695 = vshrl.u32 %v694, 7
      %v696 = vsub.s32 %v693, %v695
      %v697 = vrot.slane %v689, %v696
      %v699 = vunpack.c.l.s4 1966171168
      %v700 = vunpack.c.0.s8 %v699
      %v701 = vlaneseq
      %v702 = vshrl.u32 %v701, 7
      %v703 = vsub.s32 %v700, %v702
      %v704 = vrot.slane %v690, %v703
      %v705 = vcombine.high %v697, %v697
      %v706 = vcombine.high %v704, %v704
      %v707 = vunpack.i.l.s16 %v697
      %v708 = vunpack.i.h.s16 %v697
      %v709 = vunpack.i.l.s16 %v704
      %v710 = vunpack.i.h.s16 %v704
      %v711 = vunpack.i.l.s16 %v705
      %v712 = vunpack.i.h.s16 %v705
      %v713 = vunpack.i.l.s16 %v706
      %v714 = vunpack.i.h.s16 %v706
      %v715 = vpack.i.b16 %v707, %v707
      %v716 = vpack.i.b16 %v708, %v708
      %v717 = vpack.i.b16 %v709, %v709
      %v718 = vpack.i.b16 %v710, %v710
      %v719 = vpack.i.b16 %v711, %v711
      %v720 = vpack.i.b16 %v712, %v712
      %v721 = vpack.i.b16 %v713, %v713
      %v722 = vpack.i.b16 %v714, %v714
      %v724 = vunpack.c.l.s4 286326784
      %v725 = vunpack.c.0.s8 %v724
      %v726 = vlaneseq
      %v727 = vshrl.u32 %v726, 7
      %v728 = vsub.s32 %v725, %v727
      %v729 = vrot.slane %v715, %v728
      %v731 = vunpack.c.l.s4 286326784
      %v732 = vunpack.c.0.s8 %v731
      %v733 = vlaneseq
      %v734 = vshrl.u32 %v733, 7
      %v735 = vsub.s32 %v732, %v734
      %v736 = vrot.slane %v716, %v735
      %v738 = vunpack.c.l.s4 286326784
      %v739 = vunpack.c.0.s8 %v738
      %v740 = vlaneseq
      %v741 = vshrl.u32 %v740, 7
      %v742 = vsub.s32 %v739, %v741
      %v743 = vrot.slane %v717, %v742
      %v745 = vunpack.c.l.s4 286326784
      %v746 = vunpack.c.0.s8 %v745
      %v747 = vlaneseq
      %v748 = vshrl.u32 %v747, 7
      %v749 = vsub.s32 %v746, %v748
      %v750 = vrot.slane %v718, %v749
      %v752 = vunpack.c.l.s4 286326784
      %v753 = vunpack.c.0.s8 %v752
      %v754 = vlaneseq
      %v755 = vshrl.u32 %v754, 7
      %v756 = vsub.s32 %v753, %v755
      %v757 = vrot.slane %v719, %v756
      %v759 = vunpack.c.l.s4 286326784
      %v760 = vunpack.c.0.s8 %v759
      %v761 = vlaneseq
      %v762 = vshrl.u32 %v761, 7
      %v763 = vsub.s32 %v760, %v762
      %v764 = vrot.slane %v720, %v763
      %v766 = vunpack.c.l.s4 286326784
      %v767 = vunpack.c.0.s8 %v766
      %v768 = vlaneseq
      %v769 = vshrl.u32 %v768, 7
      %v770 = vsub.s32 %v767, %v769
      %v771 = vrot.slane %v721, %v770
      %v773 = vunpack.c.l.s4 286326784
      %v774 = vunpack.c.0.s8 %v773
      %v775 = vlaneseq
      %v776 = vshrl.u32 %v775, 7
      %v777 = vsub.s32 %v774, %v776
      %v778 = vrot.slane %v722, %v777
      %vm787 = vcmask 122880
      %vm788 = vsmask.f32 256
      %vm789 = vmand %vm787, %vm788
      %v790 = vld [vmem:[#allocation5] sm:$0x1]
      %v791 = vsel %vm789, %v729, %v790
      %792 = vst [vmem:[#allocation5] sm:$0x1] %v791
      %v793 = vld [vmem:[#allocation5 + $0x4] sm:$0x1]
      %v794 = vsel %vm789, %v736, %v793
      %795 = vst [vmem:[#allocation5 + $0x4] sm:$0x1] %v794
      %v796 = vld [vmem:[#allocation5 + $0x8] sm:$0x1]
      %v797 = vsel %vm789, %v743, %v796
      %798 = vst [vmem:[#allocation5 + $0x8] sm:$0x1] %v797
      %v799 = vld [vmem:[#allocation5 + $0xc] sm:$0x1]
      %v800 = vsel %vm789, %v750, %v799
      %801 = vst [vmem:[#allocation5 + $0xc] sm:$0x1] %v800
      %v802 = vld [vmem:[#allocation5 + $0x10] sm:$0x1]
      %v803 = vsel %vm789, %v757, %v802
      %804 = vst [vmem:[#allocation5 + $0x10] sm:$0x1] %v803
      %v805 = vld [vmem:[#allocation5 + $0x14] sm:$0x1]
      %v806 = vsel %vm789, %v764, %v805
      %807 = vst [vmem:[#allocation5 + $0x14] sm:$0x1] %v806
      %v808 = vld [vmem:[#allocation5 + $0x18] sm:$0x1]
      %v809 = vsel %vm789, %v771, %v808
      %810 = vst [vmem:[#allocation5 + $0x18] sm:$0x1] %v809
      %v811 = vld [vmem:[#allocation5 + $0x1c] sm:$0x1]
      %v812 = vsel %vm789, %v778, %v811
      %813 = vst [vmem:[#allocation5 + $0x1c] sm:$0x1] %v812
      %815 = vrot.lane.b32.xlu0 %v632, 118
      %v816 = vpop.permute.xlu0 %815
      %v818 = vsel %vm634, %v816, 0
      %820 = vmatprep.subr.bf16.mxu0 0
      %821 = vmatpush1.bf16.msra.mxu0 %v639
      %822 = vmatprep.subr.bf16.mxu0 0
      %823 = vmatpush1.bf16.msra.mxu0 0
      %824 = vmatprep.subr.bf16.mxu0 0
      %825 = vmatpush1.bf16.msra.mxu0 0
      %826 = vmatprep.subr.bf16.mxu0 0
      %827 = vmatpush1.bf16.msra.mxu0 0
      %828 = vmatprep.subr.bf16.mxu0 0
      %829 = vmatpush1.bf16.msra.mxu0 0
      %830 = vmatprep.subr.bf16.mxu0 0
      %831 = vmatpush1.bf16.msra.mxu0 0
      %832 = vmatprep.subr.bf16.mxu0 0
      %833 = vmatpush1.bf16.msra.mxu0 0
      %834 = vmatprep.subr.bf16.mxu0 0
      %835 = vmatpush1.bf16.msra.mxu0 0
      %836 = vmatprep.subr.bf16.mxu0 0
      %837 = vmatpush1.bf16.msra.mxu0 0
      %838 = vmatprep.subr.bf16.mxu0 0
      %839 = vmatpush1.bf16.msra.mxu0 0
      %840 = vmatprep.subr.bf16.mxu0 0
      %841 = vmatpush1.bf16.msra.mxu0 0
      %842 = vmatprep.subr.bf16.mxu0 0
      %843 = vmatpush1.bf16.msra.mxu0 0
      %844 = vmatprep.subr.bf16.mxu0 0
      %845 = vmatpush1.bf16.msra.mxu0 0
      %846 = vmatprep.subr.bf16.mxu0 0
      %847 = vmatpush1.bf16.msra.mxu0 0
      %848 = vmatprep.subr.bf16.mxu0 0
      %849 = vmatpush1.bf16.msra.mxu0 0
      %850 = vmatprep.subr.bf16.mxu0 0
      %851 = vmatpush1.bf16.msra.mxu0 0
      %852 = vmatprep.mubr.bf16.mxu0 0
      %853 = vmatmul.mubr.bf16.gmra.mrb[0].mxu0 %v818
      %v854 = vpop.f32.mrb[0].mxu0
      %v855 = vadd.f32 0.0, %v854
      %v856 = vpop.f32.mrb[0].mxu0
      %v857 = vpop.f32.mrb[0].mxu0
      %v858 = vpop.f32.mrb[0].mxu0
      %859 = vdwg.mxu0
      %v860 = vpack.c.bf16 %v855, %v855
      %v863 = vunpack.c.l.s4 1966171168
      %v864 = vunpack.c.0.s8 %v863
      %v865 = vlaneseq
      %v866 = vshrl.u32 %v865, 7
      %v867 = vsub.s32 %v864, %v866
      %v868 = vrot.slane %v860, %v867
      %v869 = vcombine.high %v868, %v868
      %v871 = vunpack.c.l.s4 1966171168
      %v872 = vunpack.c.0.s8 %v871
      %v873 = vlaneseq
      %v874 = vshrl.u32 %v873, 7
      %v875 = vsub.s32 %v872, %v874
      %v876 = vrot.slane %v868, %v875
      %v878 = vunpack.c.l.s4 1966171168
      %v879 = vunpack.c.0.s8 %v878
      %v880 = vlaneseq
      %v881 = vshrl.u32 %v880, 7
      %v882 = vsub.s32 %v879, %v881
      %v883 = vrot.slane %v869, %v882
      %v884 = vcombine.high %v876, %v876
      %v885 = vcombine.high %v883, %v883
      %v886 = vunpack.i.l.s16 %v876
      %v887 = vunpack.i.h.s16 %v876
      %v888 = vunpack.i.l.s16 %v883
      %v889 = vunpack.i.h.s16 %v883
      %v890 = vunpack.i.l.s16 %v884
      %v891 = vunpack.i.h.s16 %v884
      %v892 = vunpack.i.l.s16 %v885
      %v893 = vunpack.i.h.s16 %v885
      %v894 = vpack.i.b16 %v886, %v886
      %v895 = vpack.i.b16 %v887, %v887
      %v896 = vpack.i.b16 %v888, %v888
      %v897 = vpack.i.b16 %v889, %v889
      %v898 = vpack.i.b16 %v890, %v890
      %v899 = vpack.i.b16 %v891, %v891
      %v900 = vpack.i.b16 %v892, %v892
      %v901 = vpack.i.b16 %v893, %v893
      %v903 = vunpack.c.l.s4 286326784
      %v904 = vunpack.c.0.s8 %v903
      %v905 = vlaneseq
      %v906 = vshrl.u32 %v905, 7
      %v907 = vsub.s32 %v904, %v906
      %v908 = vrot.slane %v894, %v907
      %v910 = vunpack.c.l.s4 286326784
      %v911 = vunpack.c.0.s8 %v910
      %v912 = vlaneseq
      %v913 = vshrl.u32 %v912, 7
      %v914 = vsub.s32 %v911, %v913
      %v915 = vrot.slane %v895, %v914
      %v917 = vunpack.c.l.s4 286326784
      %v918 = vunpack.c.0.s8 %v917
      %v919 = vlaneseq
      %v920 = vshrl.u32 %v919, 7
      %v921 = vsub.s32 %v918, %v920
      %v922 = vrot.slane %v896, %v921
      %v924 = vunpack.c.l.s4 286326784
      %v925 = vunpack.c.0.s8 %v924
      %v926 = vlaneseq
      %v927 = vshrl.u32 %v926, 7
      %v928 = vsub.s32 %v925, %v927
      %v929 = vrot.slane %v897, %v928
      %v931 = vunpack.c.l.s4 286326784
      %v932 = vunpack.c.0.s8 %v931
      %v933 = vlaneseq
      %v934 = vshrl.u32 %v933, 7
      %v935 = vsub.s32 %v932, %v934
      %v936 = vrot.slane %v898, %v935
      %v938 = vunpack.c.l.s4 286326784
      %v939 = vunpack.c.0.s8 %v938
      %v940 = vlaneseq
      %v941 = vshrl.u32 %v940, 7
      %v942 = vsub.s32 %v939, %v941
      %v943 = vrot.slane %v899, %v942
      %v945 = vunpack.c.l.s4 286326784
      %v946 = vunpack.c.0.s8 %v945
      %v947 = vlaneseq
      %v948 = vshrl.u32 %v947, 7
      %v949 = vsub.s32 %v946, %v948
      %v950 = vrot.slane %v900, %v949
      %v952 = vunpack.c.l.s4 286326784
      %v953 = vunpack.c.0.s8 %v952
      %v954 = vlaneseq
      %v955 = vshrl.u32 %v954, 7
      %v956 = vsub.s32 %v953, %v955
      %v957 = vrot.slane %v901, %v956
      %vm966 = vsmask.f32 7938
      %vm967 = vmand %vm787, %vm966
      %v968 = vld [vmem:[#allocation5] sm:$0x1]
      %v969 = vsel %vm967, %v908, %v968
      %970 = vst [vmem:[#allocation5] sm:$0x1] %v969
      %v971 = vld [vmem:[#allocation5 + $0x4] sm:$0x1]
      %v972 = vsel %vm967, %v915, %v971
      %973 = vst [vmem:[#allocation5 + $0x4] sm:$0x1] %v972
      %v974 = vld [vmem:[#allocation5 + $0x8] sm:$0x1]
      %v975 = vsel %vm967, %v922, %v974
      %976 = vst [vmem:[#allocation5 + $0x8] sm:$0x1] %v975
      %v977 = vld [vmem:[#allocation5 + $0xc] sm:$0x1]
      %v978 = vsel %vm967, %v929, %v977
      %979 = vst [vmem:[#allocation5 + $0xc] sm:$0x1] %v978
      %v980 = vld [vmem:[#allocation5 + $0x10] sm:$0x1]
      %v981 = vsel %vm967, %v936, %v980
      %982 = vst [vmem:[#allocation5 + $0x10] sm:$0x1] %v981
      %v983 = vld [vmem:[#allocation5 + $0x14] sm:$0x1]
      %v984 = vsel %vm967, %v943, %v983
      %985 = vst [vmem:[#allocation5 + $0x14] sm:$0x1] %v984
      %v986 = vld [vmem:[#allocation5 + $0x18] sm:$0x1]
      %v987 = vsel %vm967, %v950, %v986
      %988 = vst [vmem:[#allocation5 + $0x18] sm:$0x1] %v987
      %v989 = vld [vmem:[#allocation5 + $0x1c] sm:$0x1]
      %v990 = vsel %vm967, %v957, %v989
      %991 = vst [vmem:[#allocation5 + $0x1c] sm:$0x1] %v990
      %992 = vrot.lane.b32.xlu0 %v632, 108
      %v993 = vpop.permute.xlu0 %992
      %v995 = vsel %vm634, %v993, 0
      %997 = vmatprep.subr.bf16.mxu0 0
      %998 = vmatpush1.bf16.msra.mxu0 %v639
      %999 = vmatprep.subr.bf16.mxu0 0
      %1000 = vmatpush1.bf16.msra.mxu0 0
      %1001 = vmatprep.subr.bf16.mxu0 0
      %1002 = vmatpush1.bf16.msra.mxu0 0
      %1003 = vmatprep.subr.bf16.mxu0 0
      %1004 = vmatpush1.bf16.msra.mxu0 0
      %1005 = vmatprep.subr.bf16.mxu0 0
      %1006 = vmatpush1.bf16.msra.mxu0 0
      %1007 = vmatprep.subr.bf16.mxu0 0
      %1008 = vmatpush1.bf16.msra.mxu0 0
      %1009 = vmatprep.subr.bf16.mxu0 0
      %1010 = vmatpush1.bf16.msra.mxu0 0
      %1011 = vmatprep.subr.bf16.mxu0 0
      %1012 = vmatpush1.bf16.msra.mxu0 0
      %1013 = vmatprep.subr.bf16.mxu0 0
      %1014 = vmatpush1.bf16.msra.mxu0 0
      %1015 = vmatprep.subr.bf16.mxu0 0
      %1016 = vmatpush1.bf16.msra.mxu0 0
      %1017 = vmatprep.subr.bf16.mxu0 0
      %1018 = vmatpush1.bf16.msra.mxu0 0
      %1019 = vmatprep.subr.bf16.mxu0 0
      %1020 = vmatpush1.bf16.msra.mxu0 0
      %1021 = vmatprep.subr.bf16.mxu0 0
      %1022 = vmatpush1.bf16.msra.mxu0 0
      %1023 = vmatprep.subr.bf16.mxu0 0
      %1024 = vmatpush1.bf16.msra.mxu0 0
      %1025 = vmatprep.subr.bf16.mxu0 0
      %1026 = vmatpush1.bf16.msra.mxu0 0
      %1027 = vmatprep.subr.bf16.mxu0 0
      %1028 = vmatpush1.bf16.msra.mxu0 0
      %1029 = vmatprep.mubr.bf16.mxu0 0
      %1030 = vmatmul.mubr.bf16.gmra.mrb[0].mxu0 %v995
      %v1031 = vpop.f32.mrb[0].mxu0
      %v1032 = vadd.f32 0.0, %v1031
      %v1033 = vpop.f32.mrb[0].mxu0
      %v1034 = vpop.f32.mrb[0].mxu0
      %v1035 = vpop.f32.mrb[0].mxu0
      %1036 = vdwg.mxu0
      %v1037 = vpack.c.bf16 %v1032, %v1032
      %v1040 = vunpack.c.l.s4 1966171168
      %v1041 = vunpack.c.0.s8 %v1040
      %v1042 = vlaneseq
      %v1043 = vshrl.u32 %v1042, 7
      %v1044 = vsub.s32 %v1041, %v1043
      %v1045 = vrot.slane %v1037, %v1044
      %v1046 = vcombine.high %v1045, %v1045
      %v1048 = vunpack.c.l.s4 1966171168
      %v1049 = vunpack.c.0.s8 %v1048
      %v1050 = vlaneseq
      %v1051 = vshrl.u32 %v1050, 7
      %v1052 = vsub.s32 %v1049, %v1051
      %v1053 = vrot.slane %v1045, %v1052
      %v1055 = vunpack.c.l.s4 1966171168
      %v1056 = vunpack.c.0.s8 %v1055
      %v1057 = vlaneseq
      %v1058 = vshrl.u32 %v1057, 7
      %v1059 = vsub.s32 %v1056, %v1058
      %v1060 = vrot.slane %v1046, %v1059
      %v1061 = vcombine.high %v1053, %v1053
      %v1062 = vcombine.high %v1060, %v1060
      %v1063 = vunpack.i.l.s16 %v1053
      %v1064 = vunpack.i.h.s16 %v1053
      %v1065 = vunpack.i.l.s16 %v1060
      %v1066 = vunpack.i.h.s16 %v1060
      %v1067 = vunpack.i.l.s16 %v1061
      %v1068 = vunpack.i.h.s16 %v1061
      %v1069 = vunpack.i.l.s16 %v1062
      %v1070 = vunpack.i.h.s16 %v1062
      %v1071 = vpack.i.b16 %v1063, %v1063
      %v1072 = vpack.i.b16 %v1064, %v1064
      %v1073 = vpack.i.b16 %v1065, %v1065
      %v1074 = vpack.i.b16 %v1066, %v1066
      %v1075 = vpack.i.b16 %v1067, %v1067
      %v1076 = vpack.i.b16 %v1068, %v1068
      %v1077 = vpack.i.b16 %v1069, %v1069
      %v1078 = vpack.i.b16 %v1070, %v1070
      %v1080 = vunpack.c.l.s4 286326784
      %v1081 = vunpack.c.0.s8 %v1080
      %v1082 = vlaneseq
      %v1083 = vshrl.u32 %v1082, 7
      %v1084 = vsub.s32 %v1081, %v1083
      %v1085 = vrot.slane %v1071, %v1084
      %v1087 = vunpack.c.l.s4 286326784
      %v1088 = vunpack.c.0.s8 %v1087
      %v1089 = vlaneseq
      %v1090 = vshrl.u32 %v1089, 7
      %v1091 = vsub.s32 %v1088, %v1090
      %v1092 = vrot.slane %v1072, %v1091
      %v1094 = vunpack.c.l.s4 286326784
      %v1095 = vunpack.c.0.s8 %v1094
      %v1096 = vlaneseq
      %v1097 = vshrl.u32 %v1096, 7
      %v1098 = vsub.s32 %v1095, %v1097
      %v1099 = vrot.slane %v1073, %v1098
      %v1101 = vunpack.c.l.s4 286326784
      %v1102 = vunpack.c.0.s8 %v1101
      %v1103 = vlaneseq
      %v1104 = vshrl.u32 %v1103, 7
      %v1105 = vsub.s32 %v1102, %v1104
      %v1106 = vrot.slane %v1074, %v1105
      %v1108 = vunpack.c.l.s4 286326784
      %v1109 = vunpack.c.0.s8 %v1108
      %v1110 = vlaneseq
      %v1111 = vshrl.u32 %v1110, 7
      %v1112 = vsub.s32 %v1109, %v1111
      %v1113 = vrot.slane %v1075, %v1112
      %v1115 = vunpack.c.l.s4 286326784
      %v1116 = vunpack.c.0.s8 %v1115
      %v1117 = vlaneseq
      %v1118 = vshrl.u32 %v1117, 7
      %v1119 = vsub.s32 %v1116, %v1118
      %v1120 = vrot.slane %v1076, %v1119
      %v1122 = vunpack.c.l.s4 286326784
      %v1123 = vunpack.c.0.s8 %v1122
      %v1124 = vlaneseq
      %v1125 = vshrl.u32 %v1124, 7
      %v1126 = vsub.s32 %v1123, %v1125
      %v1127 = vrot.slane %v1077, %v1126
      %v1129 = vunpack.c.l.s4 286326784
      %v1130 = vunpack.c.0.s8 %v1129
      %v1131 = vlaneseq
      %v1132 = vshrl.u32 %v1131, 7
      %v1133 = vsub.s32 %v1130, %v1132
      %v1134 = vrot.slane %v1078, %v1133
      %vm1143 = vcmask 123905
      %vm1144 = vsmask.f32 1280
      %vm1145 = vmand %vm1143, %vm1144
      %v1146 = vld [vmem:[#allocation5] sm:$0x2]
      %v1147 = vsel %vm1145, %v1085, %v1146
      %1148 = vst [vmem:[#allocation5] sm:$0x2] %v1147
      %v1149 = vld [vmem:[#allocation5 + $0x4] sm:$0x2]
      %v1150 = vsel %vm1145, %v1092, %v1149
      %1151 = vst [vmem:[#allocation5 + $0x4] sm:$0x2] %v1150
      %v1152 = vld [vmem:[#allocation5 + $0x8] sm:$0x2]
      %v1153 = vsel %vm1145, %v1099, %v1152
      %1154 = vst [vmem:[#allocation5 + $0x8] sm:$0x2] %v1153
      %v1155 = vld [vmem:[#allocation5 + $0xc] sm:$0x2]
      %v1156 = vsel %vm1145, %v1106, %v1155
      %1157 = vst [vmem:[#allocation5 + $0xc] sm:$0x2] %v1156
      %v1158 = vld [vmem:[#allocation5 + $0x10] sm:$0x2]
      %v1159 = vsel %vm1145, %v1113, %v1158
      %1160 = vst [vmem:[#allocation5 + $0x10] sm:$0x2] %v1159
      %v1161 = vld [vmem:[#allocation5 + $0x14] sm:$0x2]
      %v1162 = vsel %vm1145, %v1120, %v1161
      %1163 = vst [vmem:[#allocation5 + $0x14] sm:$0x2] %v1162
      %v1164 = vld [vmem:[#allocation5 + $0x18] sm:$0x2]
      %v1165 = vsel %vm1145, %v1127, %v1164
      %1166 = vst [vmem:[#allocation5 + $0x18] sm:$0x2] %v1165
      %v1167 = vld [vmem:[#allocation5 + $0x1c] sm:$0x2]
      %v1168 = vsel %vm1145, %v1134, %v1167
      %1169 = vst [vmem:[#allocation5 + $0x1c] sm:$0x2] %v1168
      %1170 = vrot.lane.b32.xlu0 %v632, 98
      %v1171 = vpop.permute.xlu0 %1170
      %v1173 = vsel %vm634, %v1171, 0
      %1175 = vmatprep.subr.bf16.mxu0 0
      %1176 = vmatpush1.bf16.msra.mxu0 %v639
      %1177 = vmatprep.subr.bf16.mxu0 0
      %1178 = vmatpush1.bf16.msra.mxu0 0
      %1179 = vmatprep.subr.bf16.mxu0 0
      %1180 = vmatpush1.bf16.msra.mxu0 0
      %1181 = vmatprep.subr.bf16.mxu0 0
      %1182 = vmatpush1.bf16.msra.mxu0 0
      %1183 = vmatprep.subr.bf16.mxu0 0
      %1184 = vmatpush1.bf16.msra.mxu0 0
      %1185 = vmatprep.subr.bf16.mxu0 0
      %1186 = vmatpush1.bf16.msra.mxu0 0
      %1187 = vmatprep.subr.bf16.mxu0 0
      %1188 = vmatpush1.bf16.msra.mxu0 0
      %1189 = vmatprep.subr.bf16.mxu0 0
      %1190 = vmatpush1.bf16.msra.mxu0 0
      %1191 = vmatprep.subr.bf16.mxu0 0
      %1192 = vmatpush1.bf16.msra.mxu0 0
      %1193 = vmatprep.subr.bf16.mxu0 0
      %1194 = vmatpush1.bf16.msra.mxu0 0
      %1195 = vmatprep.subr.bf16.mxu0 0
      %1196 = vmatpush1.bf16.msra.mxu0 0
      %1197 = vmatprep.subr.bf16.mxu0 0
      %1198 = vmatpush1.bf16.msra.mxu0 0
      %1199 = vmatprep.subr.bf16.mxu0 0
      %1200 = vmatpush1.bf16.msra.mxu0 0
      %1201 = vmatprep.subr.bf16.mxu0 0
      %1202 = vmatpush1.bf16.msra.mxu0 0
      %1203 = vmatprep.subr.bf16.mxu0 0
      %1204 = vmatpush1.bf16.msra.mxu0 0
      %1205 = vmatprep.subr.bf16.mxu0 0
      %1206 = vmatpush1.bf16.msra.mxu0 0
      %1207 = vmatprep.mubr.bf16.mxu0 0
      %1208 = vmatmul.mubr.bf16.gmra.mrb[0].mxu0 %v1173
      %v1209 = vpop.f32.mrb[0].mxu0
      %v1210 = vadd.f32 0.0, %v1209
      %v1211 = vpop.f32.mrb[0].mxu0
      %v1212 = vpop.f32.mrb[0].mxu0
      %v1213 = vpop.f32.mrb[0].mxu0
      %1214 = vdwg.mxu0
      %v1215 = vpack.c.bf16 %v1210, %v1210
      %v1218 = vunpack.c.l.s4 1966171168
      %v1219 = vunpack.c.0.s8 %v1218
      %v1220 = vlaneseq
      %v1221 = vshrl.u32 %v1220, 7
      %v1222 = vsub.s32 %v1219, %v1221
      %v1223 = vrot.slane %v1215, %v1222
      %v1224 = vcombine.high %v1223, %v1223
      %v1226 = vunpack.c.l.s4 1966171168
      %v1227 = vunpack.c.0.s8 %v1226
      %v1228 = vlaneseq
      %v1229 = vshrl.u32 %v1228, 7
      %v1230 = vsub.s32 %v1227, %v1229
      %v1231 = vrot.slane %v1223, %v1230
      %v1233 = vunpack.c.l.s4 1966171168
      %v1234 = vunpack.c.0.s8 %v1233
      %v1235 = vlaneseq
      %v1236 = vshrl.u32 %v1235, 7
      %v1237 = vsub.s32 %v1234, %v1236
      %v1238 = vrot.slane %v1224, %v1237
      %v1239 = vcombine.high %v1231, %v1231
      %v1240 = vcombine.high %v1238, %v1238
      %v1241 = vunpack.i.l.s16 %v1231
      %v1242 = vunpack.i.h.s16 %v1231
      %v1243 = vunpack.i.l.s16 %v1238
      %v1244 = vunpack.i.h.s16 %v1238
      %v1245 = vunpack.i.l.s16 %v1239
      %v1246 = vunpack.i.h.s16 %v1239
      %v1247 = vunpack.i.l.s16 %v1240
      %v1248 = vunpack.i.h.s16 %v1240
      %v1249 = vpack.i.b16 %v1241, %v1241
      %v1250 = vpack.i.b16 %v1242, %v1242
      %v1251 = vpack.i.b16 %v1243, %v1243
      %v1252 = vpack.i.b16 %v1244, %v1244
      %v1253 = vpack.i.b16 %v1245, %v1245
      %v1254 = vpack.i.b16 %v1246, %v1246
      %v1255 = vpack.i.b16 %v1247, %v1247
      %v1256 = vpack.i.b16 %v1248, %v1248
      %v1258 = vunpack.c.l.s4 286326784
      %v1259 = vunpack.c.0.s8 %v1258
      %v1260 = vlaneseq
      %v1261 = vshrl.u32 %v1260, 7
      %v1262 = vsub.s32 %v1259, %v1261
      %v1263 = vrot.slane %v1249, %v1262
      %v1265 = vunpack.c.l.s4 286326784
      %v1266 = vunpack.c.0.s8 %v1265
      %v1267 = vlaneseq
      %v1268 = vshrl.u32 %v1267, 7
      %v1269 = vsub.s32 %v1266, %v1268
      %v1270 = vrot.slane %v1250, %v1269
      %v1272 = vunpack.c.l.s4 286326784
      %v1273 = vunpack.c.0.s8 %v1272
      %v1274 = vlaneseq
      %v1275 = vshrl.u32 %v1274, 7
      %v1276 = vsub.s32 %v1273, %v1275
      %v1277 = vrot.slane %v1251, %v1276
      %v1279 = vunpack.c.l.s4 286326784
      %v1280 = vunpack.c.0.s8 %v1279
      %v1281 = vlaneseq
      %v1282 = vshrl.u32 %v1281, 7
      %v1283 = vsub.s32 %v1280, %v1282
      %v1284 = vrot.slane %v1252, %v1283
      %v1286 = vunpack.c.l.s4 286326784
      %v1287 = vunpack.c.0.s8 %v1286
      %v1288 = vlaneseq
      %v1289 = vshrl.u32 %v1288, 7
      %v1290 = vsub.s32 %v1287, %v1289
      %v1291 = vrot.slane %v1253, %v1290
      %v1293 = vunpack.c.l.s4 286326784
      %v1294 = vunpack.c.0.s8 %v1293
      %v1295 = vlaneseq
      %v1296 = vshrl.u32 %v1295, 7
      %v1297 = vsub.s32 %v1294, %v1296
      %v1298 = vrot.slane %v1254, %v1297
      %v1300 = vunpack.c.l.s4 286326784
      %v1301 = vunpack.c.0.s8 %v1300
      %v1302 = vlaneseq
      %v1303 = vshrl.u32 %v1302, 7
      %v1304 = vsub.s32 %v1301, %v1303
      %v1305 = vrot.slane %v1255, %v1304
      %v1307 = vunpack.c.l.s4 286326784
      %v1308 = vunpack.c.0.s8 %v1307
      %v1309 = vlaneseq
      %v1310 = vshrl.u32 %v1309, 7
      %v1311 = vsub.s32 %v1308, %v1310
      %v1312 = vrot.slane %v1256, %v1311
      %vm1321 = vsmask.f32 7942
      %vm1322 = vmand %vm1143, %vm1321
      %v1323 = vld [vmem:[#allocation5] sm:$0x2]
      %v1324 = vsel %vm1322, %v1263, %v1323
      %1325 = vst [vmem:[#allocation5] sm:$0x2] %v1324
      %v1326 = vld [vmem:[#allocation5 + $0x4] sm:$0x2]
      %v1327 = vsel %vm1322, %v1270, %v1326
      %1328 = vst [vmem:[#allocation5 + $0x4] sm:$0x2] %v1327
      %v1329 = vld [vmem:[#allocation5 + $0x8] sm:$0x2]
      %v1330 = vsel %vm1322, %v1277, %v1329
      %1331 = vst [vmem:[#allocation5 + $0x8] sm:$0x2] %v1330
      %v1332 = vld [vmem:[#allocation5 + $0xc] sm:$0x2]
      %v1333 = vsel %vm1322, %v1284, %v1332
      %1334 = vst [vmem:[#allocation5 + $0xc] sm:$0x2] %v1333
      %v1335 = vld [vmem:[#allocation5 + $0x10] sm:$0x2]
      %v1336 = vsel %vm1322, %v1291, %v1335
      %1337 = vst [vmem:[#allocation5 + $0x10] sm:$0x2] %v1336
      %v1338 = vld [vmem:[#allocation5 + $0x14] sm:$0x2]
      %v1339 = vsel %vm1322, %v1298, %v1338
      %1340 = vst [vmem:[#allocation5 + $0x14] sm:$0x2] %v1339
      %v1341 = vld [vmem:[#allocation5 + $0x18] sm:$0x2]
      %v1342 = vsel %vm1322, %v1305, %v1341
      %1343 = vst [vmem:[#allocation5 + $0x18] sm:$0x2] %v1342
      %v1344 = vld [vmem:[#allocation5 + $0x1c] sm:$0x2]
      %v1345 = vsel %vm1322, %v1312, %v1344
      %1346 = vst [vmem:[#allocation5 + $0x1c] sm:$0x2] %v1345
      %1347 = vrot.lane.b32.xlu0 %v632, 88
      %v1348 = vpop.permute.xlu0 %1347
      %v1350 = vsel %vm634, %v1348, 0
      %1352 = vmatprep.subr.bf16.mxu0 0
      %1353 = vmatpush1.bf16.msra.mxu0 %v639
      %1354 = vmatprep.subr.bf16.mxu0 0
      %1355 = vmatpush1.bf16.msra.mxu0 0
      %1356 = vmatprep.subr.bf16.mxu0 0
      %1357 = vmatpush1.bf16.msra.mxu0 0
      %1358 = vmatprep.subr.bf16.mxu0 0
      %1359 = vmatpush1.bf16.msra.mxu0 0
      %1360 = vmatprep.subr.bf16.mxu0 0
      %1361 = vmatpush1.bf16.msra.mxu0 0
      %1362 = vmatprep.subr.bf16.mxu0 0
      %1363 = vmatpush1.bf16.msra.mxu0 0
      %1364 = vmatprep.subr.bf16.mxu0 0
      %1365 = vmatpush1.bf16.msra.mxu0 0
      %1366 = vmatprep.subr.bf16.mxu0 0
      %1367 = vmatpush1.bf16.msra.mxu0 0
      %1368 = vmatprep.subr.bf16.mxu0 0
      %1369 = vmatpush1.bf16.msra.mxu0 0
      %1370 = vmatprep.subr.bf16.mxu0 0
      %1371 = vmatpush1.bf16.msra.mxu0 0
      %1372 = vmatprep.subr.bf16.mxu0 0
      %1373 = vmatpush1.bf16.msra.mxu0 0
      %1374 = vmatprep.subr.bf16.mxu0 0
      %1375 = vmatpush1.bf16.msra.mxu0 0
      %1376 = vmatprep.subr.bf16.mxu0 0
      %1377 = vmatpush1.bf16.msra.mxu0 0
      %1378 = vmatprep.subr.bf16.mxu0 0
      %1379 = vmatpush1.bf16.msra.mxu0 0
      %1380 = vmatprep.subr.bf16.mxu0 0
      %1381 = vmatpush1.bf16.msra.mxu0 0
      %1382 = vmatprep.subr.bf16.mxu0 0
      %1383 = vmatpush1.bf16.msra.mxu0 0
      %1384 = vmatprep.mubr.bf16.mxu0 0
      %1385 = vmatmul.mubr.bf16.gmra.mrb[0].mxu0 %v1350
      %v1386 = vpop.f32.mrb[0].mxu0
      %v1387 = vadd.f32 0.0, %v1386
      %v1388 = vpop.f32.mrb[0].mxu0
      %v1389 = vpop.f32.mrb[0].mxu0
      %v1390 = vpop.f32.mrb[0].mxu0
      %1391 = vdwg.mxu0
      %v1392 = vpack.c.bf16 %v1387, %v1387
      %v1395 = vunpack.c.l.s4 1966171168
      %v1396 = vunpack.c.0.s8 %v1395
      %v1397 = vlaneseq
      %v1398 = vshrl.u32 %v1397, 7
      %v1399 = vsub.s32 %v1396, %v1398
      %v1400 = vrot.slane %v1392, %v1399
      %v1401 = vcombine.high %v1400, %v1400
      %v1403 = vunpack.c.l.s4 1966171168
      %v1404 = vunpack.c.0.s8 %v1403
      %v1405 = vlaneseq
      %v1406 = vshrl.u32 %v1405, 7
      %v1407 = vsub.s32 %v1404, %v1406
      %v1408 = vrot.slane %v1400, %v1407
      %v1410 = vunpack.c.l.s4 1966171168
      %v1411 = vunpack.c.0.s8 %v1410
      %v1412 = vlaneseq
      %v1413 = vshrl.u32 %v1412, 7
      %v1414 = vsub.s32 %v1411, %v1413
      %v1415 = vrot.slane %v1401, %v1414
      %v1416 = vcombine.high %v1408, %v1408
      %v1417 = vcombine.high %v1415, %v1415
      %v1418 = vunpack.i.l.s16 %v1408
      %v1419 = vunpack.i.h.s16 %v1408
      %v1420 = vunpack.i.l.s16 %v1415
      %v1421 = vunpack.i.h.s16 %v1415
      %v1422 = vunpack.i.l.s16 %v1416
      %v1423 = vunpack.i.h.s16 %v1416
      %v1424 = vunpack.i.l.s16 %v1417
      %v1425 = vunpack.i.h.s16 %v1417
      %v1426 = vpack.i.b16 %v1418, %v1418
      %v1427 = vpack.i.b16 %v1419, %v1419
      %v1428 = vpack.i.b16 %v1420, %v1420
      %v1429 = vpack.i.b16 %v1421, %v1421
      %v1430 = vpack.i.b16 %v1422, %v1422
      %v1431 = vpack.i.b16 %v1423, %v1423
      %v1432 = vpack.i.b16 %v1424, %v1424
      %v1433 = vpack.i.b16 %v1425, %v1425
      %v1435 = vunpack.c.l.s4 286326784
      %v1436 = vunpack.c.0.s8 %v1435
      %v1437 = vlaneseq
      %v1438 = vshrl.u32 %v1437, 7
      %v1439 = vsub.s32 %v1436, %v1438
      %v1440 = vrot.slane %v1426, %v1439
      %v1442 = vunpack.c.l.s4 286326784
      %v1443 = vunpack.c.0.s8 %v1442
      %v1444 = vlaneseq
      %v1445 = vshrl.u32 %v1444, 7
      %v1446 = vsub.s32 %v1443, %v1445
      %v1447 = vrot.slane %v1427, %v1446
      %v1449 = vunpack.c.l.s4 286326784
      %v1450 = vunpack.c.0.s8 %v1449
      %v1451 = vlaneseq
      %v1452 = vshrl.u32 %v1451, 7
      %v1453 = vsub.s32 %v1450, %v1452
      %v1454 = vrot.slane %v1428, %v1453
      %v1456 = vunpack.c.l.s4 286326784
      %v1457 = vunpack.c.0.s8 %v1456
      %v1458 = vlaneseq
      %v1459 = vshrl.u32 %v1458, 7
      %v1460 = vsub.s32 %v1457, %v1459
      %v1461 = vrot.slane %v1429, %v1460
      %v1463 = vunpack.c.l.s4 286326784
      %v1464 = vunpack.c.0.s8 %v1463
      %v1465 = vlaneseq
      %v1466 = vshrl.u32 %v1465, 7
      %v1467 = vsub.s32 %v1464, %v1466
      %v1468 = vrot.slane %v1430, %v1467
      %v1470 = vunpack.c.l.s4 286326784
      %v1471 = vunpack.c.0.s8 %v1470
      %v1472 = vlaneseq
      %v1473 = vshrl.u32 %v1472, 7
      %v1474 = vsub.s32 %v1471, %v1473
      %v1475 = vrot.slane %v1431, %v1474
      %v1477 = vunpack.c.l.s4 286326784
      %v1478 = vunpack.c.0.s8 %v1477
      %v1479 = vlaneseq
      %v1480 = vshrl.u32 %v1479, 7
      %v1481 = vsub.s32 %v1478, %v1480
      %v1482 = vrot.slane %v1432, %v1481
      %v1484 = vunpack.c.l.s4 286326784
      %v1485 = vunpack.c.0.s8 %v1484
      %v1486 = vlaneseq
      %v1487 = vshrl.u32 %v1486, 7
      %v1488 = vsub.s32 %v1485, %v1487
      %v1489 = vrot.slane %v1433, %v1488
      %vm1498 = vcmask 124930
      %vm1499 = vsmask.f32 2304
      %vm1500 = vmand %vm1498, %vm1499
      %v1501 = vld [vmem:[#allocation5] sm:$0x4]
      %v1502 = vsel %vm1500, %v1440, %v1501
      %1503 = vst [vmem:[#allocation5] sm:$0x4] %v1502
      %v1504 = vld [vmem:[#allocation5 + $0x4] sm:$0x4]
      %v1505 = vsel %vm1500, %v1447, %v1504
      %1506 = vst [vmem:[#allocation5 + $0x4] sm:$0x4] %v1505
      %v1507 = vld [vmem:[#allocation5 + $0x8] sm:$0x4]
      %v1508 = vsel %vm1500, %v1454, %v1507
      %1509 = vst [vmem:[#allocation5 + $0x8] sm:$0x4] %v1508
      %v1510 = vld [vmem:[#allocation5 + $0xc] sm:$0x4]
      %v1511 = vsel %vm1500, %v1461, %v1510
      %1512 = vst [vmem:[#allocation5 + $0xc] sm:$0x4] %v1511
      %v1513 = vld [vmem:[#allocation5 + $0x10] sm:$0x4]
      %v1514 = vsel %vm1500, %v1468, %v1513
      %1515 = vst [vmem:[#allocation5 + $0x10] sm:$0x4] %v1514
      %v1516 = vld [vmem:[#allocation5 + $0x14] sm:$0x4]
      %v1517 = vsel %vm1500, %v1475, %v1516
      %1518 = vst [vmem:[#allocation5 + $0x14] sm:$0x4] %v1517
      %v1519 = vld [vmem:[#allocation5 + $0x18] sm:$0x4]
      %v1520 = vsel %vm1500, %v1482, %v1519
      %1521 = vst [vmem:[#allocation5 + $0x18] sm:$0x4] %v1520
      %v1522 = vld [vmem:[#allocation5 + $0x1c] sm:$0x4]
      %v1523 = vsel %vm1500, %v1489, %v1522
      %1524 = vst [vmem:[#allocation5 + $0x1c] sm:$0x4] %v1523
      %1525 = vrot.lane.b32.xlu0 %v632, 78
      %v1526 = vpop.permute.xlu0 %1525
      %v1528 = vsel %vm634, %v1526, 0
      %1530 = vmatprep.subr.bf16.mxu0 0
      %1531 = vmatpush1.bf16.msra.mxu0 %v639
      %1532 = vmatprep.subr.bf16.mxu0 0
      %1533 = vmatpush1.bf16.msra.mxu0 0
      %1534 = vmatprep.subr.bf16.mxu0 0
      %1535 = vmatpush1.bf16.msra.mxu0 0
      %1536 = vmatprep.subr.bf16.mxu0 0
      %1537 = vmatpush1.bf16.msra.mxu0 0
      %1538 = vmatprep.subr.bf16.mxu0 0
      %1539 = vmatpush1.bf16.msra.mxu0 0
      %1540 = vmatprep.subr.bf16.mxu0 0
      %1541 = vmatpush1.bf16.msra.mxu0 0
      %1542 = vmatprep.subr.bf16.mxu0 0
      %1543 = vmatpush1.bf16.msra.mxu0 0
      %1544 = vmatprep.subr.bf16.mxu0 0
      %1545 = vmatpush1.bf16.msra.mxu0 0
      %1546 = vmatprep.subr.bf16.mxu0 0
      %1547 = vmatpush1.bf16.msra.mxu0 0
      %1548 = vmatprep.subr.bf16.mxu0 0
      %1549 = vmatpush1.bf16.msra.mxu0 0
      %1550 = vmatprep.subr.bf16.mxu0 0
      %1551 = vmatpush1.bf16.msra.mxu0 0
      %1552 = vmatprep.subr.bf16.mxu0 0
      %1553 = vmatpush1.bf16.msra.mxu0 0
      %1554 = vmatprep.subr.bf16.mxu0 0
      %1555 = vmatpush1.bf16.msra.mxu0 0
      %1556 = vmatprep.subr.bf16.mxu0 0
      %1557 = vmatpush1.bf16.msra.mxu0 0
      %1558 = vmatprep.subr.bf16.mxu0 0
      %1559 = vmatpush1.bf16.msra.mxu0 0
      %1560 = vmatprep.subr.bf16.mxu0 0
      %1561 = vmatpush1.bf16.msra.mxu0 0
      %1562 = vmatprep.mubr.bf16.mxu0 0
      %1563 = vmatmul.mubr.bf16.gmra.mrb[0].mxu0 %v1528
      %v1564 = vpop.f32.mrb[0].mxu0
      %v1565 = vadd.f32 0.0, %v1564
      %v1566 = vpop.f32.mrb[0].mxu0
      %v1567 = vpop.f32.mrb[0].mxu0
      %v1568 = vpop.f32.mrb[0].mxu0
      %1569 = vdwg.mxu0
      %v1570 = vpack.c.bf16 %v1565, %v1565
      %v1573 = vunpack.c.l.s4 1966171168
      %v1574 = vunpack.c.0.s8 %v1573
      %v1575 = vlaneseq
      %v1576 = vshrl.u32 %v1575, 7
      %v1577 = vsub.s32 %v1574, %v1576
      %v1578 = vrot.slane %v1570, %v1577
      %v1579 = vcombine.high %v1578, %v1578
      %v1581 = vunpack.c.l.s4 1966171168
      %v1582 = vunpack.c.0.s8 %v1581
      %v1583 = vlaneseq
      %v1584 = vshrl.u32 %v1583, 7
      %v1585 = vsub.s32 %v1582, %v1584
      %v1586 = vrot.slane %v1578, %v1585
      %v1588 = vunpack.c.l.s4 1966171168
      %v1589 = vunpack.c.0.s8 %v1588
      %v1590 = vlaneseq
      %v1591 = vshrl.u32 %v1590, 7
      %v1592 = vsub.s32 %v1589, %v1591
      %v1593 = vrot.slane %v1579, %v1592
      %v1594 = vcombine.high %v1586, %v1586
      %v1595 = vcombine.high %v1593, %v1593
      %v1596 = vunpack.i.l.s16 %v1586
      %v1597 = vunpack.i.h.s16 %v1586
      %v1598 = vunpack.i.l.s16 %v1593
      %v1599 = vunpack.i.h.s16 %v1593
      %v1600 = vunpack.i.l.s16 %v1594
      %v1601 = vunpack.i.h.s16 %v1594
      %v1602 = vunpack.i.l.s16 %v1595
      %v1603 = vunpack.i.h.s16 %v1595
      %v1604 = vpack.i.b16 %v1596, %v1596
      %v1605 = vpack.i.b16 %v1597, %v1597
      %v1606 = vpack.i.b16 %v1598, %v1598
      %v1607 = vpack.i.b16 %v1599, %v1599
      %v1608 = vpack.i.b16 %v1600, %v1600
      %v1609 = vpack.i.b16 %v1601, %v1601
      %v1610 = vpack.i.b16 %v1602, %v1602
      %v1611 = vpack.i.b16 %v1603, %v1603
      %v1613 = vunpack.c.l.s4 286326784
      %v1614 = vunpack.c.0.s8 %v1613
      %v1615 = vlaneseq
      %v1616 = vshrl.u32 %v1615, 7
      %v1617 = vsub.s32 %v1614, %v1616
      %v1618 = vrot.slane %v1604, %v1617
      %v1620 = vunpack.c.l.s4 286326784
      %v1621 = vunpack.c.0.s8 %v1620
      %v1622 = vlaneseq
      %v1623 = vshrl.u32 %v1622, 7
      %v1624 = vsub.s32 %v1621, %v1623
      %v1625 = vrot.slane %v1605, %v1624
      %v1627 = vunpack.c.l.s4 286326784
      %v1628 = vunpack.c.0.s8 %v1627
      %v1629 = vlaneseq
      %v1630 = vshrl.u32 %v1629, 7
      %v1631 = vsub.s32 %v1628, %v1630
      %v1632 = vrot.slane %v1606, %v1631
      %v1634 = vunpack.c.l.s4 286326784
      %v1635 = vunpack.c.0.s8 %v1634
      %v1636 = vlaneseq
      %v1637 = vshrl.u32 %v1636, 7
      %v1638 = vsub.s32 %v1635, %v1637
      %v1639 = vrot.slane %v1607, %v1638
      %v1641 = vunpack.c.l.s4 286326784
      %v1642 = vunpack.c.0.s8 %v1641
      %v1643 = vlaneseq
      %v1644 = vshrl.u32 %v1643, 7
      %v1645 = vsub.s32 %v1642, %v1644
      %v1646 = vrot.slane %v1608, %v1645
      %v1648 = vunpack.c.l.s4 286326784
      %v1649 = vunpack.c.0.s8 %v1648
      %v1650 = vlaneseq
      %v1651 = vshrl.u32 %v1650, 7
      %v1652 = vsub.s32 %v1649, %v1651
      %v1653 = vrot.slane %v1609, %v1652
      %v1655 = vunpack.c.l.s4 286326784
      %v1656 = vunpack.c.0.s8 %v1655
      %v1657 = vlaneseq
      %v1658 = vshrl.u32 %v1657, 7
      %v1659 = vsub.s32 %v1656, %v1658
      %v1660 = vrot.slane %v1610, %v1659
      %v1662 = vunpack.c.l.s4 286326784
      %v1663 = vunpack.c.0.s8 %v1662
      %v1664 = vlaneseq
      %v1665 = vshrl.u32 %v1664, 7
      %v1666 = vsub.s32 %v1663, %v1665
      %v1667 = vrot.slane %v1611, %v1666
      %vm1676 = vsmask.f32 7946
      %vm1677 = vmand %vm1498, %vm1676
      %v1678 = vld [vmem:[#allocation5] sm:$0x4]
      %v1679 = vsel %vm1677, %v1618, %v1678
      %1680 = vst [vmem:[#allocation5] sm:$0x4] %v1679
      %v1681 = vld [vmem:[#allocation5 + $0x4] sm:$0x4]
      %v1682 = vsel %vm1677, %v1625, %v1681
      %1683 = vst [vmem:[#allocation5 + $0x4] sm:$0x4] %v1682
      %v1684 = vld [vmem:[#allocation5 + $0x8] sm:$0x4]
      %v1685 = vsel %vm1677, %v1632, %v1684
      %1686 = vst [vmem:[#allocation5 + $0x8] sm:$0x4] %v1685
      %v1687 = vld [vmem:[#allocation5 + $0xc] sm:$0x4]
      %v1688 = vsel %vm1677, %v1639, %v1687
      %1689 = vst [vmem:[#allocation5 + $0xc] sm:$0x4] %v1688
      %v1690 = vld [vmem:[#allocation5 + $0x10] sm:$0x4]
      %v1691 = vsel %vm1677, %v1646, %v1690
      %1692 = vst [vmem:[#allocation5 + $0x10] sm:$0x4] %v1691
      %v1693 = vld [vmem:[#allocation5 + $0x14] sm:$0x4]
      %v1694 = vsel %vm1677, %v1653, %v1693
      %1695 = vst [vmem:[#allocation5 + $0x14] sm:$0x4] %v1694
      %v1696 = vld [vmem:[#allocation5 + $0x18] sm:$0x4]
      %v1697 = vsel %vm1677, %v1660, %v1696
      %1698 = vst [vmem:[#allocation5 + $0x18] sm:$0x4] %v1697
      %v1699 = vld [vmem:[#allocation5 + $0x1c] sm:$0x4]
      %v1700 = vsel %vm1677, %v1667, %v1699
      %1701 = vst [vmem:[#allocation5 + $0x1c] sm:$0x4] %v1700
      %1702 = vrot.lane.b32.xlu0 %v632, 68
      %v1703 = vpop.permute.xlu0 %1702
      %v1705 = vsel %vm634, %v1703, 0
      %1707 = vmatprep.subr.bf16.mxu0 0
      %1708 = vmatpush1.bf16.msra.mxu0 %v639
      %1709 = vmatprep.subr.bf16.mxu0 0
      %1710 = vmatpush1.bf16.msra.mxu0 0
      %1711 = vmatprep.subr.bf16.mxu0 0
      %1712 = vmatpush1.bf16.msra.mxu0 0
      %1713 = vmatprep.subr.bf16.mxu0 0
      %1714 = vmatpush1.bf16.msra.mxu0 0
      %1715 = vmatprep.subr.bf16.mxu0 0
      %1716 = vmatpush1.bf16.msra.mxu0 0
      %1717 = vmatprep.subr.bf16.mxu0 0
      %1718 = vmatpush1.bf16.msra.mxu0 0
      %1719 = vmatprep.subr.bf16.mxu0 0
      %1720 = vmatpush1.bf16.msra.mxu0 0
      %1721 = vmatprep.subr.bf16.mxu0 0
      %1722 = vmatpush1.bf16.msra.mxu0 0
      %1723 = vmatprep.subr.bf16.mxu0 0
      %1724 = vmatpush1.bf16.msra.mxu0 0
      %1725 = vmatprep.subr.bf16.mxu0 0
      %1726 = vmatpush1.bf16.msra.mxu0 0
      %1727 = vmatprep.subr.bf16.mxu0 0
      %1728 = vmatpush1.bf16.msra.mxu0 0
      %1729 = vmatprep.subr.bf16.mxu0 0
      %1730 = vmatpush1.bf16.msra.mxu0 0
      %1731 = vmatprep.subr.bf16.mxu0 0
      %1732 = vmatpush1.bf16.msra.mxu0 0
      %1733 = vmatprep.subr.bf16.mxu0 0
      %1734 = vmatpush1.bf16.msra.mxu0 0
      %1735 = vmatprep.subr.bf16.mxu0 0
      %1736 = vmatpush1.bf16.msra.mxu0 0
      %1737 = vmatprep.subr.bf16.mxu0 0
      %1738 = vmatpush1.bf16.msra.mxu0 0
      %1739 = vmatprep.mubr.bf16.mxu0 0
      %1740 = vmatmul.mubr.bf16.gmra.mrb[0].mxu0 %v1705
      %v1741 = vpop.f32.mrb[0].mxu0
      %v1742 = vadd.f32 0.0, %v1741
      %v1743 = vpop.f32.mrb[0].mxu0
      %v1744 = vpop.f32.mrb[0].mxu0
      %v1745 = vpop.f32.mrb[0].mxu0
      %1746 = vdwg.mxu0
      %v1747 = vpack.c.bf16 %v1742, %v1742
      %v1750 = vunpack.c.l.s4 1966171168
      %v1751 = vunpack.c.0.s8 %v1750
      %v1752 = vlaneseq
      %v1753 = vshrl.u32 %v1752, 7
      %v1754 = vsub.s32 %v1751, %v1753
      %v1755 = vrot.slane %v1747, %v1754
      %v1756 = vcombine.high %v1755, %v1755
      %v1758 = vunpack.c.l.s4 1966171168
      %v1759 = vunpack.c.0.s8 %v1758
      %v1760 = vlaneseq
      %v1761 = vshrl.u32 %v1760, 7
      %v1762 = vsub.s32 %v1759, %v1761
      %v1763 = vrot.slane %v1755, %v1762
      %v1765 = vunpack.c.l.s4 1966171168
      %v1766 = vunpack.c.0.s8 %v1765
      %v1767 = vlaneseq
      %v1768 = vshrl.u32 %v1767, 7
      %v1769 = vsub.s32 %v1766, %v1768
      %v1770 = vrot.slane %v1756, %v1769
      %v1771 = vcombine.high %v1763, %v1763
      %v1772 = vcombine.high %v1770, %v1770
      %v1773 = vunpack.i.l.s16 %v1763
      %v1774 = vunpack.i.h.s16 %v1763
      %v1775 = vunpack.i.l.s16 %v1770
      %v1776 = vunpack.i.h.s16 %v1770
      %v1777 = vunpack.i.l.s16 %v1771
      %v1778 = vunpack.i.h.s16 %v1771
      %v1779 = vunpack.i.l.s16 %v1772
      %v1780 = vunpack.i.h.s16 %v1772
      %v1781 = vpack.i.b16 %v1773, %v1773
      %v1782 = vpack.i.b16 %v1774, %v1774
      %v1783 = vpack.i.b16 %v1775, %v1775
      %v1784 = vpack.i.b16 %v1776, %v1776
      %v1785 = vpack.i.b16 %v1777, %v1777
      %v1786 = vpack.i.b16 %v1778, %v1778
      %v1787 = vpack.i.b16 %v1779, %v1779
      %v1788 = vpack.i.b16 %v1780, %v1780
      %v1790 = vunpack.c.l.s4 286326784
      %v1791 = vunpack.c.0.s8 %v1790
      %v1792 = vlaneseq
      %v1793 = vshrl.u32 %v1792, 7
      %v1794 = vsub.s32 %v1791, %v1793
      %v1795 = vrot.slane %v1781, %v1794
      %v1797 = vunpack.c.l.s4 286326784
      %v1798 = vunpack.c.0.s8 %v1797
      %v1799 = vlaneseq
      %v1800 = vshrl.u32 %v1799, 7
      %v1801 = vsub.s32 %v1798, %v1800
      %v1802 = vrot.slane %v1782, %v1801
      %v1804 = vunpack.c.l.s4 286326784
      %v1805 = vunpack.c.0.s8 %v1804
      %v1806 = vlaneseq
      %v1807 = vshrl.u32 %v1806, 7
      %v1808 = vsub.s32 %v1805, %v1807
      %v1809 = vrot.slane %v1783, %v1808
      %v1811 = vunpack.c.l.s4 286326784
      %v1812 = vunpack.c.0.s8 %v1811
      %v1813 = vlaneseq
      %v1814 = vshrl.u32 %v1813, 7
      %v1815 = vsub.s32 %v1812, %v1814
      %v1816 = vrot.slane %v1784, %v1815
      %v1818 = vunpack.c.l.s4 286326784
      %v1819 = vunpack.c.0.s8 %v1818
      %v1820 = vlaneseq
      %v1821 = vshrl.u32 %v1820, 7
      %v1822 = vsub.s32 %v1819, %v1821
      %v1823 = vrot.slane %v1785, %v1822
      %v1825 = vunpack.c.l.s4 286326784
      %v1826 = vunpack.c.0.s8 %v1825
      %v1827 = vlaneseq
      %v1828 = vshrl.u32 %v1827, 7
      %v1829 = vsub.s32 %v1826, %v1828
      %v1830 = vrot.slane %v1786, %v1829
      %v1832 = vunpack.c.l.s4 286326784
      %v1833 = vunpack.c.0.s8 %v1832
      %v1834 = vlaneseq
      %v1835 = vshrl.u32 %v1834, 7
      %v1836 = vsub.s32 %v1833, %v1835
      %v1837 = vrot.slane %v1787, %v1836
      %v1839 = vunpack.c.l.s4 286326784
      %v1840 = vunpack.c.0.s8 %v1839
      %v1841 = vlaneseq
      %v1842 = vshrl.u32 %v1841, 7
      %v1843 = vsub.s32 %v1840, %v1842
      %v1844 = vrot.slane %v1788, %v1843
      %vm1853 = vcmask 125955
      %vm1854 = vsmask.f32 3328
      %vm1855 = vmand %vm1853, %vm1854
      %v1856 = vld [vmem:[#allocation5] sm:$0x8]
      %v1857 = vsel %vm1855, %v1795, %v1856
      %1858 = vst [vmem:[#allocation5] sm:$0x8] %v1857
      %v1859 = vld [vmem:[#allocation5 + $0x4] sm:$0x8]
      %v1860 = vsel %vm1855, %v1802, %v1859
      %1861 = vst [vmem:[#allocation5 + $0x4] sm:$0x8] %v1860
      %v1862 = vld [vmem:[#allocation5 + $0x8] sm:$0x8]
      %v1863 = vsel %vm1855, %v1809, %v1862
      %1864 = vst [vmem:[#allocation5 + $0x8] sm:$0x8] %v1863
      %v1865 = vld [vmem:[#allocation5 + $0xc] sm:$0x8]
      %v1866 = vsel %vm1855, %v1816, %v1865
      %1867 = vst [vmem:[#allocation5 + $0xc] sm:$0x8] %v1866
      %v1868 = vld [vmem:[#allocation5 + $0x10] sm:$0x8]
      %v1869 = vsel %vm1855, %v1823, %v1868
      %1870 = vst [vmem:[#allocation5 + $0x10] sm:$0x8] %v1869
      %v1871 = vld [vmem:[#allocation5 + $0x14] sm:$0x8]
      %v1872 = vsel %vm1855, %v1830, %v1871
      %1873 = vst [vmem:[#allocation5 + $0x14] sm:$0x8] %v1872
      %v1874 = vld [vmem:[#allocation5 + $0x18] sm:$0x8]
      %v1875 = vsel %vm1855, %v1837, %v1874
      %1876 = vst [vmem:[#allocation5 + $0x18] sm:$0x8] %v1875
      %v1877 = vld [vmem:[#allocation5 + $0x1c] sm:$0x8]
      %v1878 = vsel %vm1855, %v1844, %v1877
      %1879 = vst [vmem:[#allocation5 + $0x1c] sm:$0x8] %v1878
      %1880 = vrot.lane.b32.xlu0 %v632, 58
      %v1881 = vpop.permute.xlu0 %1880
      %v1883 = vsel %vm634, %v1881, 0
      %1885 = vmatprep.subr.bf16.mxu0 0
      %1886 = vmatpush1.bf16.msra.mxu0 %v639
      %1887 = vmatprep.subr.bf16.mxu0 0
      %1888 = vmatpush1.bf16.msra.mxu0 0
      %1889 = vmatprep.subr.bf16.mxu0 0
      %1890 = vmatpush1.bf16.msra.mxu0 0
      %1891 = vmatprep.subr.bf16.mxu0 0
      %1892 = vmatpush1.bf16.msra.mxu0 0
      %1893 = vmatprep.subr.bf16.mxu0 0
      %1894 = vmatpush1.bf16.msra.mxu0 0
      %1895 = vmatprep.subr.bf16.mxu0 0
      %1896 = vmatpush1.bf16.msra.mxu0 0
      %1897 = vmatprep.subr.bf16.mxu0 0
      %1898 = vmatpush1.bf16.msra.mxu0 0
      %1899 = vmatprep.subr.bf16.mxu0 0
      %1900 = vmatpush1.bf16.msra.mxu0 0
      %1901 = vmatprep.subr.bf16.mxu0 0
      %1902 = vmatpush1.bf16.msra.mxu0 0
      %1903 = vmatprep.subr.bf16.mxu0 0
      %1904 = vmatpush1.bf16.msra.mxu0 0
      %1905 = vmatprep.subr.bf16.mxu0 0
      %1906 = vmatpush1.bf16.msra.mxu0 0
      %1907 = vmatprep.subr.bf16.mxu0 0
      %1908 = vmatpush1.bf16.msra.mxu0 0
      %1909 = vmatprep.subr.bf16.mxu0 0
      %1910 = vmatpush1.bf16.msra.mxu0 0
      %1911 = vmatprep.subr.bf16.mxu0 0
      %1912 = vmatpush1.bf16.msra.mxu0 0
      %1913 = vmatprep.subr.bf16.mxu0 0
      %1914 = vmatpush1.bf16.msra.mxu0 0
      %1915 = vmatprep.subr.bf16.mxu0 0
      %1916 = vmatpush1.bf16.msra.mxu0 0
      %1917 = vmatprep.mubr.bf16.mxu0 0
      %1918 = vmatmul.mubr.bf16.gmra.mrb[0].mxu0 %v1883
      %v1919 = vpop.f32.mrb[0].mxu0
      %v1920 = vadd.f32 0.0, %v1919
      %v1921 = vpop.f32.mrb[0].mxu0
      %v1922 = vpop.f32.mrb[0].mxu0
      %v1923 = vpop.f32.mrb[0].mxu0
      %1924 = vdwg.mxu0
      %v1925 = vpack.c.bf16 %v1920, %v1920
      %v1928 = vunpack.c.l.s4 1966171168
      %v1929 = vunpack.c.0.s8 %v1928
      %v1930 = vlaneseq
      %v1931 = vshrl.u32 %v1930, 7
      %v1932 = vsub.s32 %v1929, %v1931
      %v1933 = vrot.slane %v1925, %v1932
      %v1934 = vcombine.high %v1933, %v1933
      %v1936 = vunpack.c.l.s4 1966171168
      %v1937 = vunpack.c.0.s8 %v1936
      %v1938 = vlaneseq
      %v1939 = vshrl.u32 %v1938, 7
      %v1940 = vsub.s32 %v1937, %v1939
      %v1941 = vrot.slane %v1933, %v1940
      %v1943 = vunpack.c.l.s4 1966171168
      %v1944 = vunpack.c.0.s8 %v1943
      %v1945 = vlaneseq
      %v1946 = vshrl.u32 %v1945, 7
      %v1947 = vsub.s32 %v1944, %v1946
      %v1948 = vrot.slane %v1934, %v1947
      %v1949 = vcombine.high %v1941, %v1941
      %v1950 = vcombine.high %v1948, %v1948
      %v1951 = vunpack.i.l.s16 %v1941
      %v1952 = vunpack.i.h.s16 %v1941
      %v1953 = vunpack.i.l.s16 %v1948
      %v1954 = vunpack.i.h.s16 %v1948
      %v1955 = vunpack.i.l.s16 %v1949
      %v1956 = vunpack.i.h.s16 %v1949
      %v1957 = vunpack.i.l.s16 %v1950
      %v1958 = vunpack.i.h.s16 %v1950
      %v1959 = vpack.i.b16 %v1951, %v1951
      %v1960 = vpack.i.b16 %v1952, %v1952
      %v1961 = vpack.i.b16 %v1953, %v1953
      %v1962 = vpack.i.b16 %v1954, %v1954
      %v1963 = vpack.i.b16 %v1955, %v1955
      %v1964 = vpack.i.b16 %v1956, %v1956
      %v1965 = vpack.i.b16 %v1957, %v1957
      %v1966 = vpack.i.b16 %v1958, %v1958
      %v1968 = vunpack.c.l.s4 286326784
      %v1969 = vunpack.c.0.s8 %v1968
      %v1970 = vlaneseq
      %v1971 = vshrl.u32 %v1970, 7
      %v1972 = vsub.s32 %v1969, %v1971
      %v1973 = vrot.slane %v1959, %v1972
      %v1975 = vunpack.c.l.s4 286326784
      %v1976 = vunpack.c.0.s8 %v1975
      %v1977 = vlaneseq
      %v1978 = vshrl.u32 %v1977, 7
      %v1979 = vsub.s32 %v1976, %v1978
      %v1980 = vrot.slane %v1960, %v1979
      %v1982 = vunpack.c.l.s4 286326784
      %v1983 = vunpack.c.0.s8 %v1982
      %v1984 = vlaneseq
      %v1985 = vshrl.u32 %v1984, 7
      %v1986 = vsub.s32 %v1983, %v1985
      %v1987 = vrot.slane %v1961, %v1986
      %v1989 = vunpack.c.l.s4 286326784
      %v1990 = vunpack.c.0.s8 %v1989
      %v1991 = vlaneseq
      %v1992 = vshrl.u32 %v1991, 7
      %v1993 = vsub.s32 %v1990, %v1992
      %v1994 = vrot.slane %v1962, %v1993
      %v1996 = vunpack.c.l.s4 286326784
      %v1997 = vunpack.c.0.s8 %v1996
      %v1998 = vlaneseq
      %v1999 = vshrl.u32 %v1998, 7
      %v2000 = vsub.s32 %v1997, %v1999
      %v2001 = vrot.slane %v1963, %v2000
      %v2003 = vunpack.c.l.s4 286326784
      %v2004 = vunpack.c.0.s8 %v2003
      %v2005 = vlaneseq
      %v2006 = vshrl.u32 %v2005, 7
      %v2007 = vsub.s32 %v2004, %v2006
      %v2008 = vrot.slane %v1964, %v2007
      %v2010 = vunpack.c.l.s4 286326784
      %v2011 = vunpack.c.0.s8 %v2010
      %v2012 = vlaneseq
      %v2013 = vshrl.u32 %v2012, 7
      %v2014 = vsub.s32 %v2011, %v2013
      %v2015 = vrot.slane %v1965, %v2014
      %v2017 = vunpack.c.l.s4 286326784
      %v2018 = vunpack.c.0.s8 %v2017
      %v2019 = vlaneseq
      %v2020 = vshrl.u32 %v2019, 7
      %v2021 = vsub.s32 %v2018, %v2020
      %v2022 = vrot.slane %v1966, %v2021
      %vm2031 = vsmask.f32 7950
      %vm2032 = vmand %vm1853, %vm2031
      %v2033 = vld [vmem:[#allocation5] sm:$0x8]
      %v2034 = vsel %vm2032, %v1973, %v2033
      %2035 = vst [vmem:[#allocation5] sm:$0x8] %v2034
      %v2036 = vld [vmem:[#allocation5 + $0x4] sm:$0x8]
      %v2037 = vsel %vm2032, %v1980, %v2036
      %2038 = vst [vmem:[#allocation5 + $0x4] sm:$0x8] %v2037
      %v2039 = vld [vmem:[#allocation5 + $0x8] sm:$0x8]
      %v2040 = vsel %vm2032, %v1987, %v2039
      %2041 = vst [vmem:[#allocation5 + $0x8] sm:$0x8] %v2040
      %v2042 = vld [vmem:[#allocation5 + $0xc] sm:$0x8]
      %v2043 = vsel %vm2032, %v1994, %v2042
      %2044 = vst [vmem:[#allocation5 + $0xc] sm:$0x8] %v2043
      %v2045 = vld [vmem:[#allocation5 + $0x10] sm:$0x8]
      %v2046 = vsel %vm2032, %v2001, %v2045
      %2047 = vst [vmem:[#allocation5 + $0x10] sm:$0x8] %v2046
      %v2048 = vld [vmem:[#allocation5 + $0x14] sm:$0x8]
      %v2049 = vsel %vm2032, %v2008, %v2048
      %2050 = vst [vmem:[#allocation5 + $0x14] sm:$0x8] %v2049
      %v2051 = vld [vmem:[#allocation5 + $0x18] sm:$0x8]
      %v2052 = vsel %vm2032, %v2015, %v2051
      %2053 = vst [vmem:[#allocation5 + $0x18] sm:$0x8] %v2052
      %v2054 = vld [vmem:[#allocation5 + $0x1c] sm:$0x8]
      %v2055 = vsel %vm2032, %v2022, %v2054
      %2056 = vst [vmem:[#allocation5 + $0x1c] sm:$0x8] %v2055
      %v2057 = vld [vmem:[%s6] sm:$0xf]
      %v2058 = vld [vmem:[%s6 + $0x4] sm:$0xf]
      %v2059 = vld [vmem:[#allocation5] sm:$0xf]
      %v2062 = vunpack.c.l.b16 %v2057
      %v2063 = vunpack.c.l.b16 %v2058
      %v2064 = vpack.c.b16 %v2063, %v2062
      %v2066 = vsel %vm634, %v2064, 0
      %v2069 = vsel %vm588, %v2059, 0
      %2071 = vmatprep.subr.bf16.mxu0 0
      %2072 = vmatpush1.bf16.msra.mxu0 %v2069
      %2073 = vmatprep.subr.bf16.mxu0 0
      %2074 = vmatpush1.bf16.msra.mxu0 0
      %2075 = vmatprep.subr.bf16.mxu0 0
      %2076 = vmatpush1.bf16.msra.mxu0 0
      %2077 = vmatprep.subr.bf16.mxu0 0
      %2078 = vmatpush1.bf16.msra.mxu0 0
      %2079 = vmatprep.subr.bf16.mxu0 0
      %2080 = vmatpush1.bf16.msra.mxu0 0
      %2081 = vmatprep.subr.bf16.mxu0 0
      %2082 = vmatpush1.bf16.msra.mxu0 0
      %2083 = vmatprep.subr.bf16.mxu0 0
      %2084 = vmatpush1.bf16.msra.mxu0 0
      %2085 = vmatprep.subr.bf16.mxu0 0
      %2086 = vmatpush1.bf16.msra.mxu0 0
      %2087 = vmatprep.subr.bf16.mxu0 0
      %2088 = vmatpush1.bf16.msra.mxu0 0
      %2089 = vmatprep.subr.bf16.mxu0 0
      %2090 = vmatpush1.bf16.msra.mxu0 0
      %2091 = vmatprep.subr.bf16.mxu0 0
      %2092 = vmatpush1.bf16.msra.mxu0 0
      %2093 = vmatprep.subr.bf16.mxu0 0
      %2094 = vmatpush1.bf16.msra.mxu0 0
      %2095 = vmatprep.subr.bf16.mxu0 0
      %2096 = vmatpush1.bf16.msra.mxu0 0
      %2097 = vmatprep.subr.bf16.mxu0 0
      %2098 = vmatpush1.bf16.msra.mxu0 0
      %2099 = vmatprep.subr.bf16.mxu0 0
      %2100 = vmatpush1.bf16.msra.mxu0 0
      %2101 = vmatprep.subr.bf16.mxu0 0
      %2102 = vmatpush1.bf16.msra.mxu0 0
      %2103 = vmatprep.mubr.bf16.mxu0 0
      %2104 = vmatmul.mubr.bf16.gmra.mrb[0].mxu0 %v2066
      %v2105 = vpop.f32.mrb[0].mxu0
      %v2106 = vadd.f32 0.0, %v2105
      %v2107 = vpop.f32.mrb[0].mxu0
      %v2108 = vpop.f32.mrb[0].mxu0
      %v2109 = vadd.f32 0.0, %v2108
      %v2110 = vpop.f32.mrb[0].mxu0
      %2111 = vdwg.mxu0
      %v2112 = vpack.c.bf16 %v2109, %v2106
      %v2114 = vunpack.c.l.b16 %v2112
      %v2115 = vunpack.c.h.b16 %v2112
      %v2116 = vpack.c.b16 %v2114, %v2114
      %v2117 = vpack.c.b16 %v2115, %v2115
      %vm2120 = vcmask 125952
      %2121 = vst.msk [vmem:[%s302] sm:$0xf] %vm2120, %v2116
      %2122 = vst.msk [vmem:[%s302 + $0x4] sm:$0xf] %vm2120, %v2117
      %s2123 = scalar_lea.vmem [#allocation5], 4
      %v2124 = vld [vmem:[%s2123] sm:$0xf]
      %v2126 = vsel %vm588, %v2124, 0
      %2128 = vmatprep.subr.bf16.mxu0 0
      %2129 = vmatpush1.bf16.msra.mxu0 %v2126
      %2130 = vmatprep.subr.bf16.mxu0 0
      %2131 = vmatpush1.bf16.msra.mxu0 0
      %2132 = vmatprep.subr.bf16.mxu0 0
      %2133 = vmatpush1.bf16.msra.mxu0 0
      %2134 = vmatprep.subr.bf16.mxu0 0
      %2135 = vmatpush1.bf16.msra.mxu0 0
      %2136 = vmatprep.subr.bf16.mxu0 0
      %2137 = vmatpush1.bf16.msra.mxu0 0
      %2138 = vmatprep.subr.bf16.mxu0 0
      %2139 = vmatpush1.bf16.msra.mxu0 0
      %2140 = vmatprep.subr.bf16.mxu0 0
      %2141 = vmatpush1.bf16.msra.mxu0 0
      %2142 = vmatprep.subr.bf16.mxu0 0
      %2143 = vmatpush1.bf16.msra.mxu0 0
      %2144 = vmatprep.subr.bf16.mxu0 0
      %2145 = vmatpush1.bf16.msra.mxu0 0
      %2146 = vmatprep.subr.bf16.mxu0 0
      %2147 = vmatpush1.bf16.msra.mxu0 0
      %2148 = vmatprep.subr.bf16.mxu0 0
      %2149 = vmatpush1.bf16.msra.mxu0 0
      %2150 = vmatprep.subr.bf16.mxu0 0
      %2151 = vmatpush1.bf16.msra.mxu0 0
      %2152 = vmatprep.subr.bf16.mxu0 0
      %2153 = vmatpush1.bf16.msra.mxu0 0
      %2154 = vmatprep.subr.bf16.mxu0 0
      %2155 = vmatpush1.bf16.msra.mxu0 0
      %2156 = vmatprep.subr.bf16.mxu0 0
      %2157 = vmatpush1.bf16.msra.mxu0 0
      %2158 = vmatprep.subr.bf16.mxu0 0
      %2159 = vmatpush1.bf16.msra.mxu0 0
      %2160 = vmatprep.mubr.bf16.mxu0 0
      %2161 = vmatmul.mubr.bf16.gmra.mrb[0].mxu0 %v2066
      %v2162 = vpop.f32.mrb[0].mxu0
      %v2163 = vadd.f32 0.0, %v2162
      %v2164 = vpop.f32.mrb[0].mxu0
      %v2165 = vpop.f32.mrb[0].mxu0
      %v2166 = vadd.f32 0.0, %v2165
      %v2167 = vpop.f32.mrb[0].mxu0
      %2168 = vdwg.mxu0
      %v2169 = vpack.c.bf16 %v2166, %v2163
      %v2171 = vunpack.c.l.b16 %v2169
      %v2172 = vunpack.c.h.b16 %v2169
      %v2173 = vpack.c.b16 %v2171, %v2171
      %v2174 = vpack.c.b16 %v2172, %v2172
      %s2177 = scalar_lea.vmem %s302, 8
      %2178 = vst.msk [vmem:[%s2177] sm:$0xf] %vm2120, %v2173
      %2179 = vst.msk [vmem:[%s2177 + $0x4] sm:$0xf] %vm2120, %v2174
      %s2180 = scalar_lea.vmem [#allocation5], 8
      %v2181 = vld [vmem:[%s2180] sm:$0xf]
      %v2183 = vsel %vm588, %v2181, 0
      %2185 = vmatprep.subr.bf16.mxu0 0
      %2186 = vmatpush1.bf16.msra.mxu0 %v2183
      %2187 = vmatprep.subr.bf16.mxu0 0
      %2188 = vmatpush1.bf16.msra.mxu0 0
      %2189 = vmatprep.subr.bf16.mxu0 0
      %2190 = vmatpush1.bf16.msra.mxu0 0
      %2191 = vmatprep.subr.bf16.mxu0 0
      %2192 = vmatpush1.bf16.msra.mxu0 0
      %2193 = vmatprep.subr.bf16.mxu0 0
      %2194 = vmatpush1.bf16.msra.mxu0 0
      %2195 = vmatprep.subr.bf16.mxu0 0
      %2196 = vmatpush1.bf16.msra.mxu0 0
      %2197 = vmatprep.subr.bf16.mxu0 0
      %2198 = vmatpush1.bf16.msra.mxu0 0
      %2199 = vmatprep.subr.bf16.mxu0 0
      %2200 = vmatpush1.bf16.msra.mxu0 0
      %2201 = vmatprep.subr.bf16.mxu0 0
      %2202 = vmatpush1.bf16.msra.mxu0 0
      %2203 = vmatprep.subr.bf16.mxu0 0
      %2204 = vmatpush1.bf16.msra.mxu0 0
      %2205 = vmatprep.subr.bf16.mxu0 0
      %2206 = vmatpush1.bf16.msra.mxu0 0
      %2207 = vmatprep.subr.bf16.mxu0 0
      %2208 = vmatpush1.bf16.msra.mxu0 0
      %2209 = vmatprep.subr.bf16.mxu0 0
      %2210 = vmatpush1.bf16.msra.mxu0 0
      %2211 = vmatprep.subr.bf16.mxu0 0
      %2212 = vmatpush1.bf16.msra.mxu0 0
      %2213 = vmatprep.subr.bf16.mxu0 0
      %2214 = vmatpush1.bf16.msra.mxu0 0
      %2215 = vmatprep.subr.bf16.mxu0 0
      %2216 = vmatpush1.bf16.msra.mxu0 0
      %2217 = vmatprep.mubr.bf16.mxu0 0
      %2218 = vmatmul.mubr.bf16.gmra.mrb[0].mxu0 %v2066
      %v2219 = vpop.f32.mrb[0].mxu0
      %v2220 = vadd.f32 0.0, %v2219
      %v2221 = vpop.f32.mrb[0].mxu0
      %v2222 = vpop.f32.mrb[0].mxu0
      %v2223 = vadd.f32 0.0, %v2222
      %v2224 = vpop.f32.mrb[0].mxu0
      %2225 = vdwg.mxu0
      %v2226 = vpack.c.bf16 %v2223, %v2220
      %v2228 = vunpack.c.l.b16 %v2226
      %v2229 = vunpack.c.h.b16 %v2226
      %v2230 = vpack.c.b16 %v2228, %v2228
      %v2231 = vpack.c.b16 %v2229, %v2229
      %s2234 = scalar_lea.vmem %s302, 16
      %2235 = vst.msk [vmem:[%s2234] sm:$0xf] %vm2120, %v2230
      %2236 = vst.msk [vmem:[%s2234 + $0x4] sm:$0xf] %vm2120, %v2231
      %s2237 = scalar_lea.vmem [#allocation5], 12
      %v2238 = vld [vmem:[%s2237] sm:$0xf]
      %v2240 = vsel %vm588, %v2238, 0
      %2242 = vmatprep.subr.bf16.mxu0 0
      %2243 = vmatpush1.bf16.msra.mxu0 %v2240
      %2244 = vmatprep.subr.bf16.mxu0 0
      %2245 = vmatpush1.bf16.msra.mxu0 0
      %2246 = vmatprep.subr.bf16.mxu0 0
      %2247 = vmatpush1.bf16.msra.mxu0 0
      %2248 = vmatprep.subr.bf16.mxu0 0
      %2249 = vmatpush1.bf16.msra.mxu0 0
      %2250 = vmatprep.subr.bf16.mxu0 0
      %2251 = vmatpush1.bf16.msra.mxu0 0
      %2252 = vmatprep.subr.bf16.mxu0 0
      %2253 = vmatpush1.bf16.msra.mxu0 0
      %2254 = vmatprep.subr.bf16.mxu0 0
      %2255 = vmatpush1.bf16.msra.mxu0 0
      %2256 = vmatprep.subr.bf16.mxu0 0
      %2257 = vmatpush1.bf16.msra.mxu0 0
      %2258 = vmatprep.subr.bf16.mxu0 0
      %2259 = vmatpush1.bf16.msra.mxu0 0
      %2260 = vmatprep.subr.bf16.mxu0 0
      %2261 = vmatpush1.bf16.msra.mxu0 0
      %2262 = vmatprep.subr.bf16.mxu0 0
      %2263 = vmatpush1.bf16.msra.mxu0 0
      %2264 = vmatprep.subr.bf16.mxu0 0
      %2265 = vmatpush1.bf16.msra.mxu0 0
      %2266 = vmatprep.subr.bf16.mxu0 0
      %2267 = vmatpush1.bf16.msra.mxu0 0
      %2268 = vmatprep.subr.bf16.mxu0 0
      %2269 = vmatpush1.bf16.msra.mxu0 0
      %2270 = vmatprep.subr.bf16.mxu0 0
      %2271 = vmatpush1.bf16.msra.mxu0 0
      %2272 = vmatprep.subr.bf16.mxu0 0
      %2273 = vmatpush1.bf16.msra.mxu0 0
      %2274 = vmatprep.mubr.bf16.mxu0 0
      %2275 = vmatmul.mubr.bf16.gmra.mrb[0].mxu0 %v2066
      %v2276 = vpop.f32.mrb[0].mxu0
      %v2277 = vadd.f32 0.0, %v2276
      %v2278 = vpop.f32.mrb[0].mxu0
      %v2279 = vpop.f32.mrb[0].mxu0
      %v2280 = vadd.f32 0.0, %v2279
      %v2281 = vpop.f32.mrb[0].mxu0
      %2282 = vdwg.mxu0
      %v2283 = vpack.c.bf16 %v2280, %v2277
      %v2285 = vunpack.c.l.b16 %v2283
      %v2286 = vunpack.c.h.b16 %v2283
      %v2287 = vpack.c.b16 %v2285, %v2285
      %v2288 = vpack.c.b16 %v2286, %v2286
      %s2291 = scalar_lea.vmem %s302, 24
      %2292 = vst.msk [vmem:[%s2291] sm:$0xf] %vm2120, %v2287
      %2293 = vst.msk [vmem:[%s2291 + $0x4] sm:$0xf] %vm2120, %v2288
      %p2294 = scmp.lt.s32.totalorder %s19, 1
      %s2295 = scalar_select %p2294, %s19, 1
      %s2296 = smul.addr %s2295, 8
      %s2297 = smul.addr %s2296, 4
      %s2298 = scalar_lea.vmem %s8, %s2297
      // Predicated region
      $region53: #{hcolumns_forward.3} parent=51 // pred_check
        %p2299 = pneg %p210
      $region54: #{hcolumns_forward.3} parent=51 // pred_check_branch
        %2301 = sbr.rel (%p2299) target = $region56
      $region55: #{hcolumns_forward.3} parent=51 // pred_region
        _
      $region56: #{hcolumns_forward.3} parent=51 // pred_fallthru
        _
    $region52: #{hcolumns_forward.3} parent=5 // pred_fallthru
      _
    %p2302 = scmp.le.s32.totalorder 2, %s14
    // Predicated region
    $region57: #{hcolumns_forward.3} parent=5 // pred_check
      %p2303 = pneg %p2302
    $region58: #{hcolumns_forward.3} parent=5 // pred_check_branch
      %2305 = sbr.rel (%p2303) target = $region60
    $region59: #{hcolumns_forward.3} parent=5 // pred_region
      %s2306 = ssub.s32 %s14, 2
      // Predicated region
      $region61: #{hcolumns_forward.3} parent=59 // pred_check
        %p2307 = pneg %p216
      $region62: #{hcolumns_forward.3} parent=59 // pred_check_branch
        %2309 = sbr.rel (%p2307) target = $region64
      $region63: #{hcolumns_forward.3} parent=59 // pred_region
        %p2310 = scmp.lt.s32.totalorder %s20, 1
        %s2311 = scalar_select %p2310, %s20, 1
        %s2312 = smul.addr %s2311, 8
        %s2313 = smul.addr %s2312, 4
        %s2314 = scalar_lea.vmem %s8, %s2313
      $region64: #{hcolumns_forward.3} parent=59 // pred_fallthru
        _
    $region60: #{hcolumns_forward.3} parent=5 // pred_fallthru
      _
  $region6: #{hcolumns_forward.3} parent=0 // loop_footer
    %s18 = sadd.s32 1, %s14
  $region7: #{hcolumns_forward.3} parent=0 // loop_footer_branch
    %13 = sbr.rel target = $region3
  $region8: #{hcolumns_forward.3} parent=0 // loop_exit
    _

</llo_original>
